<compile_context>
chip_gen: v7x
topology: tpu7x:2x2x1
jax: 0.10.0
libtpu: 0.0.40
codegen_flags: <defaults>
</compile_context>

<pallas_src>
import numpy as np
import jax
import jax.numpy as jnp
from jax.experimental import pallas as pl
from jax.experimental.pallas import tpu as pltpu

NEG_SLOPE = 0.01          # F.leaky_relu default negative_slope
N_BATCH = 2               # images stacked on sublanes inside the slab

# (H == W of the conv input, Cin, Cout) for each stage, in execution order.
ENC_STAGES = ((16, 4, 8), (8, 8, 16), (4, 16, 32))
DEC_STAGES = ((4, 32, 16), (8, 16, 8), (16, 8, 4))     # t_conv3, t_conv2, t_conv1


# ---------------------------------------------------------------------------
# In-kernel building blocks (all operands are 2-D slabs: rows = n*H + h,
# lanes = w*C + c; channels folded into lanes)
# ---------------------------------------------------------------------------
def _leaky(v):
    return jnp.where(v >= 0, v, NEG_SLOPE * v)


def _shift_rows(x, up, h_img):
    """Per-image vertical shift of a batch-stacked (N*H, W*C) slab.

    up=True  -> row r holds x[r-1] (zero at each image's first row)
    up=False -> row r holds x[r+1] (zero at each image's last row)
    """
    h_st = x.shape[0]
    r = jax.lax.broadcasted_iota(jnp.int32, x.shape, 0) % h_img
    if up:
        return jnp.where(r == 0, 0.0, pltpu.roll(x, 1, axis=0))
    return jnp.where(r == h_img - 1, 0.0, pltpu.roll(x, h_st - 1, axis=0))


def _conv3x3(x, band, bias, h_img, act):
    """3x3 conv (stride 1, pad 1) on a (N*H, W*Cin) slab as ONE wide-K matmul."""
    xcat = jnp.concatenate(
        [_shift_rows(x, True, h_img), x, _shift_rows(x, False, h_img)], axis=-1)
    y = jnp.dot(xcat, band, preferred_element_type=jnp.float32) + bias
    return _leaky(y) if act else y


def _pool2x2(y, rc, lc):
    """2x2 max-pool + window argmax code (0..3, row-major, first-max ties).

    rc: (H,H) 0/1 matrix = [even rows ; odd rows], lc: (WC,WC) = [even w | odd w].
    Only 2 MXU pushes; compares/selects run on the VPU.
    """
    h_st, wc = y.shape
    hh, l = h_st // 2, wc // 2
    rows = jnp.dot(rc, y, preferred_element_type=jnp.float32)
    sel = jnp.dot(rows, lc, preferred_element_type=jnp.float32)
    e_l, e_r = sel[:hh, :l], sel[:hh, l:]
    o_l, o_r = sel[hh:, :l], sel[hh:, l:]
    max_e = jnp.maximum(e_l, e_r)
    dc_e = jnp.where(e_l >= e_r, 0.0, 1.0)
    max_o = jnp.maximum(o_l, o_r)
    dc_o = jnp.where(o_l >= o_r, 0.0, 1.0)
    top = max_e >= max_o
    pooled = jnp.maximum(max_e, max_o)
    code = jnp.where(top, dc_e, 2.0 + dc_o)               # 2*dr + dc
    return pooled, code


def _unpool2x2(v, code, rct, lct):
    """Max-unpool: scatter each pooled value to its recorded window slot (3 matmuls)."""
    zero = jnp.zeros_like(v)
    top_in = jnp.concatenate(
        [jnp.where(code == 0.0, v, zero), jnp.where(code == 1.0, v, zero)], axis=-1)
    bot_in = jnp.concatenate(
        [jnp.where(code == 2.0, v, zero), jnp.where(code == 3.0, v, zero)], axis=-1)
    top = jnp.dot(top_in, lct, preferred_element_type=jnp.float32)
    bot = jnp.dot(bot_in, lct, preferred_element_type=jnp.float32)
    both = jnp.concatenate([top, bot], axis=0)
    return jnp.dot(rct, both, preferred_element_type=jnp.float32)


def _bottleneck(s, w1, b1, w2, b2, w3, b3, w4, b4):
    """fc1->lrelu->fc2->lrelu->t_fc2->t_fc1 on the (N*2, 2*32) bottleneck slab.

    nn.Linear acts on the width axis; kron(W, I_{N*H3}) weights keep the channel
    axis on lanes, so no activation re-layout is needed anywhere.
    """
    f32 = jnp.float32
    half = s.shape[1] // 2
    zr = jnp.concatenate([s[:, :half], s[:, half:]], axis=0)       # rows = (w, n, h)
    a = _leaky(jnp.dot(w1, zr, preferred_element_type=f32) + b1)   # (128, 32)
    a = _leaky(jnp.dot(w2, a, preferred_element_type=f32) + b2)    # (64, 32)
    a = jnp.dot(w3, a, preferred_element_type=f32) + b3            # (128, 32)
    a = jnp.dot(w4, a, preferred_element_type=f32)                 # (8, 32) rows=(w,n,h)
    nh = a.shape[0] // 2
    return jnp.concatenate([a[:nh], a[nh:]], axis=-1) + b4         # (4, 64) slab


# ---------------------------------------------------------------------------
# The single fused kernel
# ---------------------------------------------------------------------------
def _deep_ae_kernel(x_ref,
                    enc_bands_ref, enc_bias_ref, enc_rc_ref, enc_lc_ref,
                    dec_bands_ref, dec_bias_ref, dec_rct_ref, dec_lct_ref,
                    fw1_ref, fb1_ref, fw2_ref, fb2_ref,
                    fw3_ref, fb3_ref, fw4_ref, fb4_ref,
                    out_ref):
    x = x_ref[...]                                         # (32, 64)
    codes = []

    # ---- encoder: (conv -> leaky -> maxpool) x3, argmax codes kept in vregs ----
    for i, (h_img, _cin, _cout) in enumerate(ENC_STAGES):
        h_st = N_BATCH * h_img
        y = _conv3x3(x, enc_bands_ref[i], enc_bias_ref[i], h_img, act=True)
        x, code = _pool2x2(y, enc_rc_ref[i][:h_st, :h_st], enc_lc_ref[i])
        codes.append(code)

    # ---- FC bottleneck (acts on the width axis; no activation on t_fc*) ----
    x = _bottleneck(x, fw1_ref[...], fb1_ref[...], fw2_ref[...], fb2_ref[...],
                    fw3_ref[...], fb3_ref[...], fw4_ref[...], fb4_ref[...])

    # ---- decoder: (maxunpool -> conv_transpose) x3, no activations ----
    for i, (h_img, _cin, _cout) in enumerate(DEC_STAGES):
        h_st = N_BATCH * h_img
        u = _unpool2x2(x, codes[2 - i], dec_rct_ref[i][:h_st, :h_st], dec_lct_ref[i])
        x = _conv3x3(u, dec_bands_ref[i], dec_bias_ref[i], h_img, act=False)

    out_ref[...] = x                                       # (32, 64)


# ---------------------------------------------------------------------------
# pallas_call wrapper
# ---------------------------------------------------------------------------
def deep_ae_forward(prep, x_nchw):
    n, c, h, w = x_nchw.shape                              # (2, 4, 16, 16)
    # NCHW -> batch-stacked slab: rows = n*H + h, lanes = w*C + c.
    x = x_nchw.transpose(0, 2, 3, 1).reshape(n * h, w * c)

    vm = pl.BlockSpec(memory_space=pltpu.MemorySpace.VMEM)
    args = (x,
            prep['enc_bands'], prep['enc_bias'], prep['enc_rc'], prep['enc_lc'],
            prep['dec_bands'], prep['dec_bias'], prep['dec_rct'], prep['dec_lct'],
            prep['fw1'], prep['fb1'], prep['fw2'], prep['fb2'],
            prep['fw3'], prep['fb3'], prep['fw4'], prep['fb4'])
    out = pl.pallas_call(
        _deep_ae_kernel,
        out_shape=jax.ShapeDtypeStruct((n * h, w * c), jnp.float32),
        in_specs=[vm] * len(args),
        out_specs=vm,
    )(*args)
    return out.reshape(n, h, w, c).transpose(0, 3, 1, 2)   # back to NCHW


# ---------------------------------------------------------------------------
# One-time host-side parameter / structural-matrix preparation
# ---------------------------------------------------------------------------
def _conv_band_wide(w_hwio, width):
    """(3,3,Cin,Cout) HWIO kernel -> (3*W*Cin, W*Cout) wide-K band matrix.

    Row block kh multiplies the row-shifted slab x[h+kh-1]; inside each block the
    banded structure encodes the kw shifts and horizontal zero padding.
    """
    w_np = np.asarray(w_hwio, np.float32)
    cin, cout = w_np.shape[2], w_np.shape[3]
    band = np.zeros((3, width * cin, width * cout), np.float32)
    for kh in range(3):
        for wo in range(width):
            for kw in range(3):
                wi = wo + kw - 1
                if 0 <= wi < width:
                    band[kh, wi * cin:(wi + 1) * cin,
                         wo * cout:(wo + 1) * cout] = w_np[kh, kw]
    return band.reshape(3 * width * cin, width * cout)


def _pool_row_cat(h_st):
    """(H, H) 0/1 matrix: top half picks even rows, bottom half picks odd rows."""
    hh = h_st // 2
    rc = np.zeros((h_st, h_st), np.float32)
    for i in range(hh):
        rc[i, 2 * i] = 1.0
        rc[hh + i, 2 * i + 1] = 1.0
    return rc


def _pool_lane_cat(width, c):
    """(W*C, W*C) 0/1 matrix: left half picks even-w lane blocks, right half odd-w."""
    l = (width // 2) * c
    lc = np.zeros((width * c, width * c), np.float32)
    for wo in range(width // 2):
        for ch in range(c):
            lc[(2 * wo) * c + ch, wo * c + ch] = 1.0
            lc[(2 * wo + 1) * c + ch, l + wo * c + ch] = 1.0
    return lc


def _pad_sq(m, size):
    out = np.zeros((size, size), np.float32)
    out[:m.shape[0], :m.shape[1]] = m
    return out


def init_params(key):
    """Raw module parameters: Conv2d weights in HWIO, ConvTranspose2d weights in
    PyTorch (Cin, Cout, kH, kW) layout, Linear weights in (out, in) layout."""
    def nrm(k, shape, scale=0.1):
        return scale * jax.random.normal(k, shape, jnp.float32)

    ks = jax.random.split(key, 20)
    p = {}
    p['w1'], p['b1'] = nrm(ks[0], (3, 3, 4, 8)), nrm(ks[1], (8,))
    p['w2'], p['b2'] = nrm(ks[2], (3, 3, 8, 16)), nrm(ks[3], (16,))
    p['w3'], p['b3'] = nrm(ks[4], (3, 3, 16, 32)), nrm(ks[5], (32,))
    p['fc1_w'], p['fc1_b'] = nrm(ks[6], (32, 2)), nrm(ks[7], (32,))
    p['fc2_w'], p['fc2_b'] = nrm(ks[8], (16, 32)), nrm(ks[9], (16,))
    p['tfc2_w'], p['tfc2_b'] = nrm(ks[10], (32, 16)), nrm(ks[11], (32,))
    p['tfc1_w'], p['tfc1_b'] = nrm(ks[12], (2, 32)), nrm(ks[13], (2,))
    p['tw3'], p['tb3'] = nrm(ks[14], (32, 16, 3, 3)), nrm(ks[15], (16,))
    p['tw2'], p['tb2'] = nrm(ks[16], (16, 8, 3, 3)), nrm(ks[17], (8,))
    p['tw1'], p['tb1'] = nrm(ks[18], (8, 4, 3, 3)), nrm(ks[19], (4,))
    return p


def prepare_params(p):
    """One-time layout prep: wide-K band matrices, lane-tiled biases, packed 0/1
    pool/unpool selection matrices, kron-expanded FC weights.  Run once, outside jit."""
    nh = N_BATCH * 2                                  # (n, h) pairs at the bottleneck

    enc_bands, enc_bias, enc_rc, enc_lc = [], [], [], []
    for i, (hw, _cin, cout) in enumerate(ENC_STAGES):
        s = i + 1
        enc_bands.append(_conv_band_wide(p[f'w{s}'], hw))
        enc_bias.append(np.tile(np.asarray(p[f'b{s}'], np.float32), hw)[None, :])
        enc_rc.append(_pad_sq(_pool_row_cat(N_BATCH * hw), N_BATCH * 16))
        enc_lc.append(_pool_lane_cat(hw, cout))

    dec_bands, dec_bias, dec_rct, dec_lct = [], [], [], []
    for i, (hw, cin, _cout) in enumerate(DEC_STAGES):
        s = 3 - i
        # ConvTranspose2d(k=3, s=1, p=1) == Conv2d(p=1) with spatially flipped kernel.
        w_hwio = np.flip(np.asarray(p[f'tw{s}'], np.float32),
                         axis=(2, 3)).transpose(2, 3, 0, 1)
        dec_bands.append(_conv_band_wide(w_hwio, hw))
        dec_bias.append(np.tile(np.asarray(p[f'tb{s}'], np.float32), hw)[None, :])
        dec_rct.append(_pad_sq(_pool_row_cat(N_BATCH * hw).T, N_BATCH * 16))
        dec_lct.append(_pool_lane_cat(hw, cin).T)

    eye = np.eye(nh, dtype=np.float32)
    prep = {
        'enc_bands': jnp.asarray(np.stack(enc_bands)),   # (3, 192, 128)
        'enc_bias': jnp.asarray(np.stack(enc_bias)),     # (3, 1, 128)
        'enc_rc': jnp.asarray(np.stack(enc_rc)),         # (3, 32, 32)
        'enc_lc': jnp.asarray(np.stack(enc_lc)),         # (3, 128, 128)
        'dec_bands': jnp.asarray(np.stack(dec_bands)),   # (3, 384, 64)
        'dec_bias': jnp.asarray(np.stack(dec_bias)),     # (3, 1, 64)
        'dec_rct': jnp.asarray(np.stack(dec_rct)),       # (3, 32, 32)
        'dec_lct': jnp.asarray(np.stack(dec_lct)),       # (3, 128, 128)
        # kron(W, I_nh): (n, h) pairs ride as an inner row index so channels stay on lanes.
        'fw1': jnp.asarray(np.kron(np.asarray(p['fc1_w'], np.float32), eye)),   # (128, 8)
        'fw2': jnp.asarray(np.kron(np.asarray(p['fc2_w'], np.float32), eye)),   # (64, 128)
        'fw3': jnp.asarray(np.kron(np.asarray(p['tfc2_w'], np.float32), eye)),  # (128, 64)
        'fw4': jnp.asarray(np.kron(np.asarray(p['tfc1_w'], np.float32), eye)),  # (8, 128)
        'fb1': jnp.asarray(np.repeat(np.asarray(p['fc1_b'], np.float32), nh)[:, None]),
        'fb2': jnp.asarray(np.repeat(np.asarray(p['fc2_b'], np.float32), nh)[:, None]),
        'fb3': jnp.asarray(np.repeat(np.asarray(p['tfc2_b'], np.float32), nh)[:, None]),
        'fb4': jnp.asarray(np.repeat(np.asarray(p['tfc1_b'], np.float32), 32)[None, :]),
    }
    return prep


if __name__ == "__main__":
    key = jax.random.PRNGKey(0)
    pkey, xkey = jax.random.split(key)
    params = init_params(pkey)
    prep = prepare_params(params)              # one-time weight-layout precomputation
    x = jax.random.normal(xkey, (2, 4, 16, 16), jnp.float32)   # NCHW, like PyTorch
    out = jax.jit(deep_ae_forward)(prep, x)
    out = jax.block_until_ready(out)
    assert out.shape == (2, 4, 16, 16), out.shape
    assert out.dtype == jnp.float32
    print("KERNEL_OK")
</pallas_src>

<mosaic_0001>
module attributes {stable_mosaic.version = 11 : i64} {
  func.func @_deep_ae_kernel(%arg0: memref<32x64xf32, #tpu.memory_space<vmem>>, %arg1: memref<3x192x128xf32, #tpu.memory_space<vmem>>, %arg2: memref<3x1x128xf32, #tpu.memory_space<vmem>>, %arg3: memref<3x32x32xf32, #tpu.memory_space<vmem>>, %arg4: memref<3x128x128xf32, #tpu.memory_space<vmem>>, %arg5: memref<3x384x64xf32, #tpu.memory_space<vmem>>, %arg6: memref<3x1x64xf32, #tpu.memory_space<vmem>>, %arg7: memref<3x32x32xf32, #tpu.memory_space<vmem>>, %arg8: memref<3x128x128xf32, #tpu.memory_space<vmem>>, %arg9: memref<128x8xf32, #tpu.memory_space<vmem>>, %arg10: memref<128x1xf32, #tpu.memory_space<vmem>>, %arg11: memref<64x128xf32, #tpu.memory_space<vmem>>, %arg12: memref<64x1xf32, #tpu.memory_space<vmem>>, %arg13: memref<128x64xf32, #tpu.memory_space<vmem>>, %arg14: memref<128x1xf32, #tpu.memory_space<vmem>>, %arg15: memref<8x128xf32, #tpu.memory_space<vmem>>, %arg16: memref<1x64xf32, #tpu.memory_space<vmem>>, %arg17: memref<32x64xf32, #tpu.memory_space<vmem>>) attributes {dimension_semantics = [], scalar_prefetch = 0 : i64, scratch_operands = 0 : i64, tpu.core_type = #tpu.core_type<tc>} {
    %c0 = arith.constant 0 : index
    %c0_0 = arith.constant 0 : index
    %0 = vector.load %arg0[%c0, %c0_0] : memref<32x64xf32, #tpu.memory_space<vmem>>, vector<32x64xf32>
    %c0_1 = arith.constant 0 : index
    %c0_2 = arith.constant 0 : index
    %c0_3 = arith.constant 0 : index
    %1 = vector.load %arg1[%c0_1, %c0_2, %c0_3] : memref<3x192x128xf32, #tpu.memory_space<vmem>>, vector<1x192x128xf32>
    %2 = vector.shape_cast %1 : vector<1x192x128xf32> to vector<192x128xf32>
    %c0_4 = arith.constant 0 : index
    %c0_5 = arith.constant 0 : index
    %c0_6 = arith.constant 0 : index
    %3 = vector.load %arg2[%c0_4, %c0_5, %c0_6] : memref<3x1x128xf32, #tpu.memory_space<vmem>>, vector<1x1x128xf32>
    %4 = vector.shape_cast %3 : vector<1x1x128xf32> to vector<1x128xf32>
    %5 = tpu.iota {dimensions = array<i32: 0>} : vector<32x64xi32>
    %c16_i32 = arith.constant 16 : i32
    %c0_i32 = arith.constant 0 : i32
    %6 = arith.cmpi eq, %c16_i32, %c0_i32 : i32
    %c1_i32 = arith.constant 1 : i32
    %7 = arith.select %6, %c1_i32, %c16_i32 : i32
    %8 = vector.broadcast %7 : i32 to vector<32x64xi32>
    %9 = arith.remsi %5, %8 : vector<32x64xi32>
    %c0_i32_7 = arith.constant 0 : i32
    %10 = vector.broadcast %c0_i32_7 : i32 to vector<32x64xi32>
    %11 = arith.cmpi ne, %9, %10 : vector<32x64xi32>
    %c0_i32_8 = arith.constant 0 : i32
    %12 = vector.broadcast %c0_i32_8 : i32 to vector<32x64xi32>
    %13 = arith.cmpi slt, %9, %12 : vector<32x64xi32>
    %c0_i32_9 = arith.constant 0 : i32
    %14 = arith.cmpi slt, %7, %c0_i32_9 : i32
    %15 = vector.broadcast %14 : i1 to vector<32x64xi1>
    %16 = vector.broadcast %15 : vector<32x64xi1> to vector<32x64xi1>
    %17 = arith.xori %13, %16 : vector<32x64xi1>
    %18 = arith.andi %17, %11 : vector<32x64xi1>
    %19 = vector.broadcast %7 : i32 to vector<32x64xi32>
    %20 = arith.addi %9, %19 : vector<32x64xi32>
    %21 = arith.select %18, %20, %9 : vector<32x64xi1>, vector<32x64xi32>
    %c0_i32_10 = arith.constant 0 : i32
    %22 = vector.broadcast %c0_i32_10 : i32 to vector<32x64xi32>
    %23 = arith.cmpi eq, %21, %22 : vector<32x64xi32>
    %c1_i32_11 = arith.constant 1 : i32
    %24 = tpu.dynamic_rotate %0 by %c1_i32_11 dim 0 : vector<32x64xf32>, i32 -> vector<32x64xf32>
    %cst = arith.constant 0.000000e+00 : f32
    %25 = vector.broadcast %cst : f32 to vector<32x64xf32>
    %26 = arith.select %23, %25, %24 : vector<32x64xi1>, vector<32x64xf32>
    %27 = tpu.iota {dimensions = array<i32: 0>} : vector<32x64xi32>
    %c16_i32_12 = arith.constant 16 : i32
    %c0_i32_13 = arith.constant 0 : i32
    %28 = arith.cmpi eq, %c16_i32_12, %c0_i32_13 : i32
    %c1_i32_14 = arith.constant 1 : i32
    %29 = arith.select %28, %c1_i32_14, %c16_i32_12 : i32
    %30 = vector.broadcast %29 : i32 to vector<32x64xi32>
    %31 = arith.remsi %27, %30 : vector<32x64xi32>
    %c0_i32_15 = arith.constant 0 : i32
    %32 = vector.broadcast %c0_i32_15 : i32 to vector<32x64xi32>
    %33 = arith.cmpi ne, %31, %32 : vector<32x64xi32>
    %c0_i32_16 = arith.constant 0 : i32
    %34 = vector.broadcast %c0_i32_16 : i32 to vector<32x64xi32>
    %35 = arith.cmpi slt, %31, %34 : vector<32x64xi32>
    %c0_i32_17 = arith.constant 0 : i32
    %36 = arith.cmpi slt, %29, %c0_i32_17 : i32
    %37 = vector.broadcast %36 : i1 to vector<32x64xi1>
    %38 = vector.broadcast %37 : vector<32x64xi1> to vector<32x64xi1>
    %39 = arith.xori %35, %38 : vector<32x64xi1>
    %40 = arith.andi %39, %33 : vector<32x64xi1>
    %41 = vector.broadcast %29 : i32 to vector<32x64xi32>
    %42 = arith.addi %31, %41 : vector<32x64xi32>
    %43 = arith.select %40, %42, %31 : vector<32x64xi1>, vector<32x64xi32>
    %c15_i32 = arith.constant 15 : i32
    %44 = vector.broadcast %c15_i32 : i32 to vector<32x64xi32>
    %45 = arith.cmpi eq, %43, %44 : vector<32x64xi32>
    %c31_i32 = arith.constant 31 : i32
    %46 = tpu.dynamic_rotate %0 by %c31_i32 dim 0 : vector<32x64xf32>, i32 -> vector<32x64xf32>
    %cst_18 = arith.constant 0.000000e+00 : f32
    %47 = vector.broadcast %cst_18 : f32 to vector<32x64xf32>
    %48 = arith.select %45, %47, %46 : vector<32x64xi1>, vector<32x64xf32>
    %49 = tpu.concatenate %26, %0, %48 in 1 : vector<32x64xf32>, vector<32x64xf32>, vector<32x64xf32> -> vector<32x192xf32>
    %cst_19 = arith.constant dense<0.000000e+00> : vector<32x128xf32>
    %50 = tpu.matmul %49, %2, %cst_19 {dimension_numbers = #tpu.dot_dimension_numbers<[1], [0], [0], [1], [0, 0, 1, 1], [], []>} : vector<32x192xf32>, vector<192x128xf32>, vector<32x128xf32> -> vector<32x128xf32>
    %51 = vector.broadcast %4 : vector<1x128xf32> to vector<32x128xf32>
    %52 = arith.addf %50, %51 : vector<32x128xf32>
    %cst_20 = arith.constant 0.000000e+00 : f32
    %53 = vector.broadcast %cst_20 : f32 to vector<32x128xf32>
    %54 = arith.cmpf oge, %52, %53 : vector<32x128xf32>
    %cst_21 = arith.constant 0.00999999977 : f32
    %55 = vector.broadcast %cst_21 : f32 to vector<32x128xf32>
    %56 = arith.mulf %55, %52 : vector<32x128xf32>
    %57 = arith.select %54, %52, %56 : vector<32x128xi1>, vector<32x128xf32>
    %c0_22 = arith.constant 0 : index
    %c0_23 = arith.constant 0 : index
    %c0_24 = arith.constant 0 : index
    %58 = vector.load %arg3[%c0_22, %c0_23, %c0_24] : memref<3x32x32xf32, #tpu.memory_space<vmem>>, vector<1x32x32xf32>
    %59 = vector.shape_cast %58 : vector<1x32x32xf32> to vector<32x32xf32>
    %c0_25 = arith.constant 0 : index
    %c0_26 = arith.constant 0 : index
    %c0_27 = arith.constant 0 : index
    %60 = vector.load %arg4[%c0_25, %c0_26, %c0_27] : memref<3x128x128xf32, #tpu.memory_space<vmem>>, vector<1x128x128xf32>
    %61 = vector.shape_cast %60 : vector<1x128x128xf32> to vector<128x128xf32>
    %cst_28 = arith.constant dense<0.000000e+00> : vector<32x128xf32>
    %62 = tpu.matmul %59, %57, %cst_28 {dimension_numbers = #tpu.dot_dimension_numbers<[1], [0], [0], [1], [0, 0, 1, 1], [], []>} : vector<32x32xf32>, vector<32x128xf32>, vector<32x128xf32> -> vector<32x128xf32>
    %cst_29 = arith.constant dense<0.000000e+00> : vector<32x128xf32>
    %63 = tpu.matmul %62, %61, %cst_29 {dimension_numbers = #tpu.dot_dimension_numbers<[1], [0], [0], [1], [0, 0, 1, 1], [], []>} : vector<32x128xf32>, vector<128x128xf32>, vector<32x128xf32> -> vector<32x128xf32>
    %64 = vector.extract_strided_slice %63 {offsets = [0, 0], sizes = [16, 64], strides = [1, 1]} : vector<32x128xf32> to vector<16x64xf32>
    %65 = vector.extract_strided_slice %63 {offsets = [0, 64], sizes = [16, 64], strides = [1, 1]} : vector<32x128xf32> to vector<16x64xf32>
    %66 = vector.extract_strided_slice %63 {offsets = [16, 0], sizes = [16, 64], strides = [1, 1]} : vector<32x128xf32> to vector<16x64xf32>
    %67 = vector.extract_strided_slice %63 {offsets = [16, 64], sizes = [16, 64], strides = [1, 1]} : vector<32x128xf32> to vector<16x64xf32>
    %68 = arith.maximumf %64, %65 : vector<16x64xf32>
    %69 = arith.cmpf oge, %64, %65 : vector<16x64xf32>
    %cst_30 = arith.constant 0.000000e+00 : f32
    %cst_31 = arith.constant 1.000000e+00 : f32
    %70 = vector.broadcast %cst_30 : f32 to vector<16x64xf32>
    %71 = vector.broadcast %cst_31 : f32 to vector<16x64xf32>
    %72 = arith.select %69, %70, %71 : vector<16x64xi1>, vector<16x64xf32>
    %73 = arith.maximumf %66, %67 : vector<16x64xf32>
    %74 = arith.cmpf oge, %66, %67 : vector<16x64xf32>
    %cst_32 = arith.constant 0.000000e+00 : f32
    %cst_33 = arith.constant 1.000000e+00 : f32
    %75 = vector.broadcast %cst_32 : f32 to vector<16x64xf32>
    %76 = vector.broadcast %cst_33 : f32 to vector<16x64xf32>
    %77 = arith.select %74, %75, %76 : vector<16x64xi1>, vector<16x64xf32>
    %78 = arith.cmpf oge, %68, %73 : vector<16x64xf32>
    %79 = arith.maximumf %68, %73 : vector<16x64xf32>
    %cst_34 = arith.constant 2.000000e+00 : f32
    %80 = vector.broadcast %cst_34 : f32 to vector<16x64xf32>
    %81 = arith.addf %80, %77 : vector<16x64xf32>
    %82 = arith.select %78, %72, %81 : vector<16x64xi1>, vector<16x64xf32>
    %c1 = arith.constant 1 : index
    %c0_35 = arith.constant 0 : index
    %c0_36 = arith.constant 0 : index
    %83 = vector.load %arg1[%c1, %c0_35, %c0_36] : memref<3x192x128xf32, #tpu.memory_space<vmem>>, vector<1x192x128xf32>
    %84 = vector.shape_cast %83 : vector<1x192x128xf32> to vector<192x128xf32>
    %c1_37 = arith.constant 1 : index
    %c0_38 = arith.constant 0 : index
    %c0_39 = arith.constant 0 : index
    %85 = vector.load %arg2[%c1_37, %c0_38, %c0_39] : memref<3x1x128xf32, #tpu.memory_space<vmem>>, vector<1x1x128xf32>
    %86 = vector.shape_cast %85 : vector<1x1x128xf32> to vector<1x128xf32>
    %87 = tpu.iota {dimensions = array<i32: 0>} : vector<16x64xi32>
    %c8_i32 = arith.constant 8 : i32
    %c0_i32_40 = arith.constant 0 : i32
    %88 = arith.cmpi eq, %c8_i32, %c0_i32_40 : i32
    %c1_i32_41 = arith.constant 1 : i32
    %89 = arith.select %88, %c1_i32_41, %c8_i32 : i32
    %90 = vector.broadcast %89 : i32 to vector<16x64xi32>
    %91 = arith.remsi %87, %90 : vector<16x64xi32>
    %c0_i32_42 = arith.constant 0 : i32
    %92 = vector.broadcast %c0_i32_42 : i32 to vector<16x64xi32>
    %93 = arith.cmpi ne, %91, %92 : vector<16x64xi32>
    %c0_i32_43 = arith.constant 0 : i32
    %94 = vector.broadcast %c0_i32_43 : i32 to vector<16x64xi32>
    %95 = arith.cmpi slt, %91, %94 : vector<16x64xi32>
    %c0_i32_44 = arith.constant 0 : i32
    %96 = arith.cmpi slt, %89, %c0_i32_44 : i32
    %97 = vector.broadcast %96 : i1 to vector<16x64xi1>
    %98 = vector.broadcast %97 : vector<16x64xi1> to vector<16x64xi1>
    %99 = arith.xori %95, %98 : vector<16x64xi1>
    %100 = arith.andi %99, %93 : vector<16x64xi1>
    %101 = vector.broadcast %89 : i32 to vector<16x64xi32>
    %102 = arith.addi %91, %101 : vector<16x64xi32>
    %103 = arith.select %100, %102, %91 : vector<16x64xi1>, vector<16x64xi32>
    %c0_i32_45 = arith.constant 0 : i32
    %104 = vector.broadcast %c0_i32_45 : i32 to vector<16x64xi32>
    %105 = arith.cmpi eq, %103, %104 : vector<16x64xi32>
    %c1_i32_46 = arith.constant 1 : i32
    %106 = tpu.dynamic_rotate %79 by %c1_i32_46 dim 0 : vector<16x64xf32>, i32 -> vector<16x64xf32>
    %cst_47 = arith.constant 0.000000e+00 : f32
    %107 = vector.broadcast %cst_47 : f32 to vector<16x64xf32>
    %108 = arith.select %105, %107, %106 : vector<16x64xi1>, vector<16x64xf32>
    %109 = tpu.iota {dimensions = array<i32: 0>} : vector<16x64xi32>
    %c8_i32_48 = arith.constant 8 : i32
    %c0_i32_49 = arith.constant 0 : i32
    %110 = arith.cmpi eq, %c8_i32_48, %c0_i32_49 : i32
    %c1_i32_50 = arith.constant 1 : i32
    %111 = arith.select %110, %c1_i32_50, %c8_i32_48 : i32
    %112 = vector.broadcast %111 : i32 to vector<16x64xi32>
    %113 = arith.remsi %109, %112 : vector<16x64xi32>
    %c0_i32_51 = arith.constant 0 : i32
    %114 = vector.broadcast %c0_i32_51 : i32 to vector<16x64xi32>
    %115 = arith.cmpi ne, %113, %114 : vector<16x64xi32>
    %c0_i32_52 = arith.constant 0 : i32
    %116 = vector.broadcast %c0_i32_52 : i32 to vector<16x64xi32>
    %117 = arith.cmpi slt, %113, %116 : vector<16x64xi32>
    %c0_i32_53 = arith.constant 0 : i32
    %118 = arith.cmpi slt, %111, %c0_i32_53 : i32
    %119 = vector.broadcast %118 : i1 to vector<16x64xi1>
    %120 = vector.broadcast %119 : vector<16x64xi1> to vector<16x64xi1>
    %121 = arith.xori %117, %120 : vector<16x64xi1>
    %122 = arith.andi %121, %115 : vector<16x64xi1>
    %123 = vector.broadcast %111 : i32 to vector<16x64xi32>
    %124 = arith.addi %113, %123 : vector<16x64xi32>
    %125 = arith.select %122, %124, %113 : vector<16x64xi1>, vector<16x64xi32>
    %c7_i32 = arith.constant 7 : i32
    %126 = vector.broadcast %c7_i32 : i32 to vector<16x64xi32>
    %127 = arith.cmpi eq, %125, %126 : vector<16x64xi32>
    %c15_i32_54 = arith.constant 15 : i32
    %128 = tpu.dynamic_rotate %79 by %c15_i32_54 dim 0 : vector<16x64xf32>, i32 -> vector<16x64xf32>
    %cst_55 = arith.constant 0.000000e+00 : f32
    %129 = vector.broadcast %cst_55 : f32 to vector<16x64xf32>
    %130 = arith.select %127, %129, %128 : vector<16x64xi1>, vector<16x64xf32>
    %131 = tpu.concatenate %108, %79, %130 in 1 : vector<16x64xf32>, vector<16x64xf32>, vector<16x64xf32> -> vector<16x192xf32>
    %cst_56 = arith.constant dense<0.000000e+00> : vector<16x128xf32>
    %132 = tpu.matmul %131, %84, %cst_56 {dimension_numbers = #tpu.dot_dimension_numbers<[1], [0], [0], [1], [0, 0, 1, 1], [], []>} : vector<16x192xf32>, vector<192x128xf32>, vector<16x128xf32> -> vector<16x128xf32>
    %133 = vector.broadcast %86 : vector<1x128xf32> to vector<16x128xf32>
    %134 = arith.addf %132, %133 : vector<16x128xf32>
    %cst_57 = arith.constant 0.000000e+00 : f32
    %135 = vector.broadcast %cst_57 : f32 to vector<16x128xf32>
    %136 = arith.cmpf oge, %134, %135 : vector<16x128xf32>
    %cst_58 = arith.constant 0.00999999977 : f32
    %137 = vector.broadcast %cst_58 : f32 to vector<16x128xf32>
    %138 = arith.mulf %137, %134 : vector<16x128xf32>
    %139 = arith.select %136, %134, %138 : vector<16x128xi1>, vector<16x128xf32>
    %c1_59 = arith.constant 1 : index
    %c0_60 = arith.constant 0 : index
    %c0_61 = arith.constant 0 : index
    %140 = vector.load %arg3[%c1_59, %c0_60, %c0_61] : memref<3x32x32xf32, #tpu.memory_space<vmem>>, vector<1x32x32xf32>
    %141 = vector.shape_cast %140 : vector<1x32x32xf32> to vector<32x32xf32>
    %142 = vector.extract_strided_slice %141 {offsets = [0, 0], sizes = [16, 16], strides = [1, 1]} : vector<32x32xf32> to vector<16x16xf32>
    %c1_62 = arith.constant 1 : index
    %c0_63 = arith.constant 0 : index
    %c0_64 = arith.constant 0 : index
    %143 = vector.load %arg4[%c1_62, %c0_63, %c0_64] : memref<3x128x128xf32, #tpu.memory_space<vmem>>, vector<1x128x128xf32>
    %144 = vector.shape_cast %143 : vector<1x128x128xf32> to vector<128x128xf32>
    %cst_65 = arith.constant dense<0.000000e+00> : vector<16x128xf32>
    %145 = tpu.matmul %142, %139, %cst_65 {dimension_numbers = #tpu.dot_dimension_numbers<[1], [0], [0], [1], [0, 0, 1, 1], [], []>} : vector<16x16xf32>, vector<16x128xf32>, vector<16x128xf32> -> vector<16x128xf32>
    %cst_66 = arith.constant dense<0.000000e+00> : vector<16x128xf32>
    %146 = tpu.matmul %145, %144, %cst_66 {dimension_numbers = #tpu.dot_dimension_numbers<[1], [0], [0], [1], [0, 0, 1, 1], [], []>} : vector<16x128xf32>, vector<128x128xf32>, vector<16x128xf32> -> vector<16x128xf32>
    %147 = vector.extract_strided_slice %146 {offsets = [0, 0], sizes = [8, 64], strides = [1, 1]} : vector<16x128xf32> to vector<8x64xf32>
    %148 = vector.extract_strided_slice %146 {offsets = [0, 64], sizes = [8, 64], strides = [1, 1]} : vector<16x128xf32> to vector<8x64xf32>
    %149 = vector.extract_strided_slice %146 {offsets = [8, 0], sizes = [8, 64], strides = [1, 1]} : vector<16x128xf32> to vector<8x64xf32>
    %150 = vector.extract_strided_slice %146 {offsets = [8, 64], sizes = [8, 64], strides = [1, 1]} : vector<16x128xf32> to vector<8x64xf32>
    %151 = arith.maximumf %147, %148 : vector<8x64xf32>
    %152 = arith.cmpf oge, %147, %148 : vector<8x64xf32>
    %cst_67 = arith.constant 0.000000e+00 : f32
    %cst_68 = arith.constant 1.000000e+00 : f32
    %153 = vector.broadcast %cst_67 : f32 to vector<8x64xf32>
    %154 = vector.broadcast %cst_68 : f32 to vector<8x64xf32>
    %155 = arith.select %152, %153, %154 : vector<8x64xi1>, vector<8x64xf32>
    %156 = arith.maximumf %149, %150 : vector<8x64xf32>
    %157 = arith.cmpf oge, %149, %150 : vector<8x64xf32>
    %cst_69 = arith.constant 0.000000e+00 : f32
    %cst_70 = arith.constant 1.000000e+00 : f32
    %158 = vector.broadcast %cst_69 : f32 to vector<8x64xf32>
    %159 = vector.broadcast %cst_70 : f32 to vector<8x64xf32>
    %160 = arith.select %157, %158, %159 : vector<8x64xi1>, vector<8x64xf32>
    %161 = arith.cmpf oge, %151, %156 : vector<8x64xf32>
    %162 = arith.maximumf %151, %156 : vector<8x64xf32>
    %cst_71 = arith.constant 2.000000e+00 : f32
    %163 = vector.broadcast %cst_71 : f32 to vector<8x64xf32>
    %164 = arith.addf %163, %160 : vector<8x64xf32>
    %165 = arith.select %161, %155, %164 : vector<8x64xi1>, vector<8x64xf32>
    %c2 = arith.constant 2 : index
    %c0_72 = arith.constant 0 : index
    %c0_73 = arith.constant 0 : index
    %166 = vector.load %arg1[%c2, %c0_72, %c0_73] : memref<3x192x128xf32, #tpu.memory_space<vmem>>, vector<1x192x128xf32>
    %167 = vector.shape_cast %166 : vector<1x192x128xf32> to vector<192x128xf32>
    %c2_74 = arith.constant 2 : index
    %c0_75 = arith.constant 0 : index
    %c0_76 = arith.constant 0 : index
    %168 = vector.load %arg2[%c2_74, %c0_75, %c0_76] : memref<3x1x128xf32, #tpu.memory_space<vmem>>, vector<1x1x128xf32>
    %169 = vector.shape_cast %168 : vector<1x1x128xf32> to vector<1x128xf32>
    %170 = tpu.iota {dimensions = array<i32: 0>} : vector<8x64xi32>
    %c4_i32 = arith.constant 4 : i32
    %c0_i32_77 = arith.constant 0 : i32
    %171 = arith.cmpi eq, %c4_i32, %c0_i32_77 : i32
    %c1_i32_78 = arith.constant 1 : i32
    %172 = arith.select %171, %c1_i32_78, %c4_i32 : i32
    %173 = vector.broadcast %172 : i32 to vector<8x64xi32>
    %174 = arith.remsi %170, %173 : vector<8x64xi32>
    %c0_i32_79 = arith.constant 0 : i32
    %175 = vector.broadcast %c0_i32_79 : i32 to vector<8x64xi32>
    %176 = arith.cmpi ne, %174, %175 : vector<8x64xi32>
    %c0_i32_80 = arith.constant 0 : i32
    %177 = vector.broadcast %c0_i32_80 : i32 to vector<8x64xi32>
    %178 = arith.cmpi slt, %174, %177 : vector<8x64xi32>
    %c0_i32_81 = arith.constant 0 : i32
    %179 = arith.cmpi slt, %172, %c0_i32_81 : i32
    %180 = vector.broadcast %179 : i1 to vector<8x64xi1>
    %181 = vector.broadcast %180 : vector<8x64xi1> to vector<8x64xi1>
    %182 = arith.xori %178, %181 : vector<8x64xi1>
    %183 = arith.andi %182, %176 : vector<8x64xi1>
    %184 = vector.broadcast %172 : i32 to vector<8x64xi32>
    %185 = arith.addi %174, %184 : vector<8x64xi32>
    %186 = arith.select %183, %185, %174 : vector<8x64xi1>, vector<8x64xi32>
    %c0_i32_82 = arith.constant 0 : i32
    %187 = vector.broadcast %c0_i32_82 : i32 to vector<8x64xi32>
    %188 = arith.cmpi eq, %186, %187 : vector<8x64xi32>
    %c1_i32_83 = arith.constant 1 : i32
    %189 = tpu.dynamic_rotate %162 by %c1_i32_83 dim 0 : vector<8x64xf32>, i32 -> vector<8x64xf32>
    %cst_84 = arith.constant 0.000000e+00 : f32
    %190 = vector.broadcast %cst_84 : f32 to vector<8x64xf32>
    %191 = arith.select %188, %190, %189 : vector<8x64xi1>, vector<8x64xf32>
    %192 = tpu.iota {dimensions = array<i32: 0>} : vector<8x64xi32>
    %c4_i32_85 = arith.constant 4 : i32
    %c0_i32_86 = arith.constant 0 : i32
    %193 = arith.cmpi eq, %c4_i32_85, %c0_i32_86 : i32
    %c1_i32_87 = arith.constant 1 : i32
    %194 = arith.select %193, %c1_i32_87, %c4_i32_85 : i32
    %195 = vector.broadcast %194 : i32 to vector<8x64xi32>
    %196 = arith.remsi %192, %195 : vector<8x64xi32>
    %c0_i32_88 = arith.constant 0 : i32
    %197 = vector.broadcast %c0_i32_88 : i32 to vector<8x64xi32>
    %198 = arith.cmpi ne, %196, %197 : vector<8x64xi32>
    %c0_i32_89 = arith.constant 0 : i32
    %199 = vector.broadcast %c0_i32_89 : i32 to vector<8x64xi32>
    %200 = arith.cmpi slt, %196, %199 : vector<8x64xi32>
    %c0_i32_90 = arith.constant 0 : i32
    %201 = arith.cmpi slt, %194, %c0_i32_90 : i32
    %202 = vector.broadcast %201 : i1 to vector<8x64xi1>
    %203 = vector.broadcast %202 : vector<8x64xi1> to vector<8x64xi1>
    %204 = arith.xori %200, %203 : vector<8x64xi1>
    %205 = arith.andi %204, %198 : vector<8x64xi1>
    %206 = vector.broadcast %194 : i32 to vector<8x64xi32>
    %207 = arith.addi %196, %206 : vector<8x64xi32>
    %208 = arith.select %205, %207, %196 : vector<8x64xi1>, vector<8x64xi32>
    %c3_i32 = arith.constant 3 : i32
    %209 = vector.broadcast %c3_i32 : i32 to vector<8x64xi32>
    %210 = arith.cmpi eq, %208, %209 : vector<8x64xi32>
    %c7_i32_91 = arith.constant 7 : i32
    %211 = tpu.dynamic_rotate %162 by %c7_i32_91 dim 0 : vector<8x64xf32>, i32 -> vector<8x64xf32>
    %cst_92 = arith.constant 0.000000e+00 : f32
    %212 = vector.broadcast %cst_92 : f32 to vector<8x64xf32>
    %213 = arith.select %210, %212, %211 : vector<8x64xi1>, vector<8x64xf32>
    %214 = tpu.concatenate %191, %162, %213 in 1 : vector<8x64xf32>, vector<8x64xf32>, vector<8x64xf32> -> vector<8x192xf32>
    %cst_93 = arith.constant dense<0.000000e+00> : vector<8x128xf32>
    %215 = tpu.matmul %214, %167, %cst_93 {dimension_numbers = #tpu.dot_dimension_numbers<[1], [0], [0], [1], [0, 0, 1, 1], [], []>} : vector<8x192xf32>, vector<192x128xf32>, vector<8x128xf32> -> vector<8x128xf32>
    %216 = vector.broadcast %169 : vector<1x128xf32> to vector<8x128xf32>
    %217 = arith.addf %215, %216 : vector<8x128xf32>
    %cst_94 = arith.constant 0.000000e+00 : f32
    %218 = vector.broadcast %cst_94 : f32 to vector<8x128xf32>
    %219 = arith.cmpf oge, %217, %218 : vector<8x128xf32>
    %cst_95 = arith.constant 0.00999999977 : f32
    %220 = vector.broadcast %cst_95 : f32 to vector<8x128xf32>
    %221 = arith.mulf %220, %217 : vector<8x128xf32>
    %222 = arith.select %219, %217, %221 : vector<8x128xi1>, vector<8x128xf32>
    %c2_96 = arith.constant 2 : index
    %c0_97 = arith.constant 0 : index
    %c0_98 = arith.constant 0 : index
    %223 = vector.load %arg3[%c2_96, %c0_97, %c0_98] : memref<3x32x32xf32, #tpu.memory_space<vmem>>, vector<1x32x32xf32>
    %224 = vector.shape_cast %223 : vector<1x32x32xf32> to vector<32x32xf32>
    %225 = vector.extract_strided_slice %224 {offsets = [0, 0], sizes = [8, 8], strides = [1, 1]} : vector<32x32xf32> to vector<8x8xf32>
    %c2_99 = arith.constant 2 : index
    %c0_100 = arith.constant 0 : index
    %c0_101 = arith.constant 0 : index
    %226 = vector.load %arg4[%c2_99, %c0_100, %c0_101] : memref<3x128x128xf32, #tpu.memory_space<vmem>>, vector<1x128x128xf32>
    %227 = vector.shape_cast %226 : vector<1x128x128xf32> to vector<128x128xf32>
    %cst_102 = arith.constant dense<0.000000e+00> : vector<8x128xf32>
    %228 = tpu.matmul %225, %222, %cst_102 {dimension_numbers = #tpu.dot_dimension_numbers<[1], [0], [0], [1], [0, 0, 1, 1], [], []>} : vector<8x8xf32>, vector<8x128xf32>, vector<8x128xf32> -> vector<8x128xf32>
    %cst_103 = arith.constant dense<0.000000e+00> : vector<8x128xf32>
    %229 = tpu.matmul %228, %227, %cst_103 {dimension_numbers = #tpu.dot_dimension_numbers<[1], [0], [0], [1], [0, 0, 1, 1], [], []>} : vector<8x128xf32>, vector<128x128xf32>, vector<8x128xf32> -> vector<8x128xf32>
    %230 = vector.extract_strided_slice %229 {offsets = [0, 0], sizes = [4, 64], strides = [1, 1]} : vector<8x128xf32> to vector<4x64xf32>
    %231 = vector.extract_strided_slice %229 {offsets = [0, 64], sizes = [4, 64], strides = [1, 1]} : vector<8x128xf32> to vector<4x64xf32>
    %232 = vector.extract_strided_slice %229 {offsets = [4, 0], sizes = [4, 64], strides = [1, 1]} : vector<8x128xf32> to vector<4x64xf32>
    %233 = vector.extract_strided_slice %229 {offsets = [4, 64], sizes = [4, 64], strides = [1, 1]} : vector<8x128xf32> to vector<4x64xf32>
    %234 = arith.maximumf %230, %231 : vector<4x64xf32>
    %235 = arith.cmpf oge, %230, %231 : vector<4x64xf32>
    %cst_104 = arith.constant 0.000000e+00 : f32
    %cst_105 = arith.constant 1.000000e+00 : f32
    %236 = vector.broadcast %cst_104 : f32 to vector<4x64xf32>
    %237 = vector.broadcast %cst_105 : f32 to vector<4x64xf32>
    %238 = arith.select %235, %236, %237 : vector<4x64xi1>, vector<4x64xf32>
    %239 = arith.maximumf %232, %233 : vector<4x64xf32>
    %240 = arith.cmpf oge, %232, %233 : vector<4x64xf32>
    %cst_106 = arith.constant 0.000000e+00 : f32
    %cst_107 = arith.constant 1.000000e+00 : f32
    %241 = vector.broadcast %cst_106 : f32 to vector<4x64xf32>
    %242 = vector.broadcast %cst_107 : f32 to vector<4x64xf32>
    %243 = arith.select %240, %241, %242 : vector<4x64xi1>, vector<4x64xf32>
    %244 = arith.cmpf oge, %234, %239 : vector<4x64xf32>
    %245 = arith.maximumf %234, %239 : vector<4x64xf32>
    %cst_108 = arith.constant 2.000000e+00 : f32
    %246 = vector.broadcast %cst_108 : f32 to vector<4x64xf32>
    %247 = arith.addf %246, %243 : vector<4x64xf32>
    %248 = arith.select %244, %238, %247 : vector<4x64xi1>, vector<4x64xf32>
    %c0_109 = arith.constant 0 : index
    %c0_110 = arith.constant 0 : index
    %249 = vector.load %arg9[%c0_109, %c0_110] : memref<128x8xf32, #tpu.memory_space<vmem>>, vector<128x8xf32>
    %c0_111 = arith.constant 0 : index
    %c0_112 = arith.constant 0 : index
    %250 = vector.load %arg10[%c0_111, %c0_112] : memref<128x1xf32, #tpu.memory_space<vmem>>, vector<128x1xf32>
    %c0_113 = arith.constant 0 : index
    %c0_114 = arith.constant 0 : index
    %251 = vector.load %arg11[%c0_113, %c0_114] : memref<64x128xf32, #tpu.memory_space<vmem>>, vector<64x128xf32>
    %c0_115 = arith.constant 0 : index
    %c0_116 = arith.constant 0 : index
    %252 = vector.load %arg12[%c0_115, %c0_116] : memref<64x1xf32, #tpu.memory_space<vmem>>, vector<64x1xf32>
    %c0_117 = arith.constant 0 : index
    %c0_118 = arith.constant 0 : index
    %253 = vector.load %arg13[%c0_117, %c0_118] : memref<128x64xf32, #tpu.memory_space<vmem>>, vector<128x64xf32>
    %c0_119 = arith.constant 0 : index
    %c0_120 = arith.constant 0 : index
    %254 = vector.load %arg14[%c0_119, %c0_120] : memref<128x1xf32, #tpu.memory_space<vmem>>, vector<128x1xf32>
    %c0_121 = arith.constant 0 : index
    %c0_122 = arith.constant 0 : index
    %255 = vector.load %arg15[%c0_121, %c0_122] : memref<8x128xf32, #tpu.memory_space<vmem>>, vector<8x128xf32>
    %c0_123 = arith.constant 0 : index
    %c0_124 = arith.constant 0 : index
    %256 = vector.load %arg16[%c0_123, %c0_124] : memref<1x64xf32, #tpu.memory_space<vmem>>, vector<1x64xf32>
    %257 = vector.extract_strided_slice %245 {offsets = [0, 0], sizes = [4, 32], strides = [1, 1]} : vector<4x64xf32> to vector<4x32xf32>
    %258 = vector.extract_strided_slice %245 {offsets = [0, 32], sizes = [4, 32], strides = [1, 1]} : vector<4x64xf32> to vector<4x32xf32>
    %259 = tpu.concatenate %257, %258 in 0 : vector<4x32xf32>, vector<4x32xf32> -> vector<8x32xf32>
    %cst_125 = arith.constant dense<0.000000e+00> : vector<128x32xf32>
    %260 = tpu.matmul %249, %259, %cst_125 {dimension_numbers = #tpu.dot_dimension_numbers<[1], [0], [0], [1], [0, 0, 1, 1], [], []>} : vector<128x8xf32>, vector<8x32xf32>, vector<128x32xf32> -> vector<128x32xf32>
    %261 = vector.broadcast %250 : vector<128x1xf32> to vector<128x32xf32>
    %262 = arith.addf %260, %261 : vector<128x32xf32>
    %cst_126 = arith.constant 0.000000e+00 : f32
    %263 = vector.broadcast %cst_126 : f32 to vector<128x32xf32>
    %264 = arith.cmpf oge, %262, %263 : vector<128x32xf32>
    %cst_127 = arith.constant 0.00999999977 : f32
    %265 = vector.broadcast %cst_127 : f32 to vector<128x32xf32>
    %266 = arith.mulf %265, %262 : vector<128x32xf32>
    %267 = arith.select %264, %262, %266 : vector<128x32xi1>, vector<128x32xf32>
    %cst_128 = arith.constant dense<0.000000e+00> : vector<64x32xf32>
    %268 = tpu.matmul %251, %267, %cst_128 {dimension_numbers = #tpu.dot_dimension_numbers<[1], [0], [0], [1], [0, 0, 1, 1], [], []>} : vector<64x128xf32>, vector<128x32xf32>, vector<64x32xf32> -> vector<64x32xf32>
    %269 = vector.broadcast %252 : vector<64x1xf32> to vector<64x32xf32>
    %270 = arith.addf %268, %269 : vector<64x32xf32>
    %cst_129 = arith.constant 0.000000e+00 : f32
    %271 = vector.broadcast %cst_129 : f32 to vector<64x32xf32>
    %272 = arith.cmpf oge, %270, %271 : vector<64x32xf32>
    %cst_130 = arith.constant 0.00999999977 : f32
    %273 = vector.broadcast %cst_130 : f32 to vector<64x32xf32>
    %274 = arith.mulf %273, %270 : vector<64x32xf32>
    %275 = arith.select %272, %270, %274 : vector<64x32xi1>, vector<64x32xf32>
    %cst_131 = arith.constant dense<0.000000e+00> : vector<128x32xf32>
    %276 = tpu.matmul %253, %275, %cst_131 {dimension_numbers = #tpu.dot_dimension_numbers<[1], [0], [0], [1], [0, 0, 1, 1], [], []>} : vector<128x64xf32>, vector<64x32xf32>, vector<128x32xf32> -> vector<128x32xf32>
    %277 = vector.broadcast %254 : vector<128x1xf32> to vector<128x32xf32>
    %278 = arith.addf %276, %277 : vector<128x32xf32>
    %cst_132 = arith.constant dense<0.000000e+00> : vector<8x32xf32>
    %279 = tpu.matmul %255, %278, %cst_132 {dimension_numbers = #tpu.dot_dimension_numbers<[1], [0], [0], [1], [0, 0, 1, 1], [], []>} : vector<8x128xf32>, vector<128x32xf32>, vector<8x32xf32> -> vector<8x32xf32>
    %280 = vector.extract_strided_slice %279 {offsets = [0, 0], sizes = [4, 32], strides = [1, 1]} : vector<8x32xf32> to vector<4x32xf32>
    %281 = vector.extract_strided_slice %279 {offsets = [4, 0], sizes = [4, 32], strides = [1, 1]} : vector<8x32xf32> to vector<4x32xf32>
    %282 = tpu.concatenate %280, %281 in 1 : vector<4x32xf32>, vector<4x32xf32> -> vector<4x64xf32>
    %283 = vector.broadcast %256 : vector<1x64xf32> to vector<4x64xf32>
    %284 = arith.addf %282, %283 : vector<4x64xf32>
    %c0_133 = arith.constant 0 : index
    %c0_134 = arith.constant 0 : index
    %c0_135 = arith.constant 0 : index
    %285 = vector.load %arg7[%c0_133, %c0_134, %c0_135] : memref<3x32x32xf32, #tpu.memory_space<vmem>>, vector<1x32x32xf32>
    %286 = vector.shape_cast %285 : vector<1x32x32xf32> to vector<32x32xf32>
    %287 = vector.extract_strided_slice %286 {offsets = [0, 0], sizes = [8, 8], strides = [1, 1]} : vector<32x32xf32> to vector<8x8xf32>
    %c0_136 = arith.constant 0 : index
    %c0_137 = arith.constant 0 : index
    %c0_138 = arith.constant 0 : index
    %288 = vector.load %arg8[%c0_136, %c0_137, %c0_138] : memref<3x128x128xf32, #tpu.memory_space<vmem>>, vector<1x128x128xf32>
    %289 = vector.shape_cast %288 : vector<1x128x128xf32> to vector<128x128xf32>
    %cst_139 = arith.constant 0.000000e+00 : f32
    %290 = vector.broadcast %cst_139 : f32 to vector<4x64xf32>
    %cst_140 = arith.constant 0.000000e+00 : f32
    %291 = vector.broadcast %cst_140 : f32 to vector<4x64xf32>
    %292 = arith.cmpf oeq, %248, %291 : vector<4x64xf32>
    %293 = arith.select %292, %284, %290 : vector<4x64xi1>, vector<4x64xf32>
    %cst_141 = arith.constant 1.000000e+00 : f32
    %294 = vector.broadcast %cst_141 : f32 to vector<4x64xf32>
    %295 = arith.cmpf oeq, %248, %294 : vector<4x64xf32>
    %296 = arith.select %295, %284, %290 : vector<4x64xi1>, vector<4x64xf32>
    %297 = tpu.concatenate %293, %296 in 1 : vector<4x64xf32>, vector<4x64xf32> -> vector<4x128xf32>
    %cst_142 = arith.constant 2.000000e+00 : f32
    %298 = vector.broadcast %cst_142 : f32 to vector<4x64xf32>
    %299 = arith.cmpf oeq, %248, %298 : vector<4x64xf32>
    %300 = arith.select %299, %284, %290 : vector<4x64xi1>, vector<4x64xf32>
    %cst_143 = arith.constant 3.000000e+00 : f32
    %301 = vector.broadcast %cst_143 : f32 to vector<4x64xf32>
    %302 = arith.cmpf oeq, %248, %301 : vector<4x64xf32>
    %303 = arith.select %302, %284, %290 : vector<4x64xi1>, vector<4x64xf32>
    %304 = tpu.concatenate %300, %303 in 1 : vector<4x64xf32>, vector<4x64xf32> -> vector<4x128xf32>
    %cst_144 = arith.constant dense<0.000000e+00> : vector<4x128xf32>
    %305 = tpu.matmul %297, %289, %cst_144 {dimension_numbers = #tpu.dot_dimension_numbers<[1], [0], [0], [1], [0, 0, 1, 1], [], []>} : vector<4x128xf32>, vector<128x128xf32>, vector<4x128xf32> -> vector<4x128xf32>
    %cst_145 = arith.constant dense<0.000000e+00> : vector<4x128xf32>
    %306 = tpu.matmul %304, %289, %cst_145 {dimension_numbers = #tpu.dot_dimension_numbers<[1], [0], [0], [1], [0, 0, 1, 1], [], []>} : vector<4x128xf32>, vector<128x128xf32>, vector<4x128xf32> -> vector<4x128xf32>
    %307 = tpu.concatenate %305, %306 in 0 : vector<4x128xf32>, vector<4x128xf32> -> vector<8x128xf32>
    %cst_146 = arith.constant dense<0.000000e+00> : vector<8x128xf32>
    %308 = tpu.matmul %287, %307, %cst_146 {dimension_numbers = #tpu.dot_dimension_numbers<[1], [0], [0], [1], [0, 0, 1, 1], [], []>} : vector<8x8xf32>, vector<8x128xf32>, vector<8x128xf32> -> vector<8x128xf32>
    %c0_147 = arith.constant 0 : index
    %c0_148 = arith.constant 0 : index
    %c0_149 = arith.constant 0 : index
    %309 = vector.load %arg5[%c0_147, %c0_148, %c0_149] : memref<3x384x64xf32, #tpu.memory_space<vmem>>, vector<1x384x64xf32>
    %310 = vector.shape_cast %309 : vector<1x384x64xf32> to vector<384x64xf32>
    %c0_150 = arith.constant 0 : index
    %c0_151 = arith.constant 0 : index
    %c0_152 = arith.constant 0 : index
    %311 = vector.load %arg6[%c0_150, %c0_151, %c0_152] : memref<3x1x64xf32, #tpu.memory_space<vmem>>, vector<1x1x64xf32>
    %312 = vector.shape_cast %311 : vector<1x1x64xf32> to vector<1x64xf32>
    %313 = tpu.iota {dimensions = array<i32: 0>} : vector<8x128xi32>
    %c4_i32_153 = arith.constant 4 : i32
    %c0_i32_154 = arith.constant 0 : i32
    %314 = arith.cmpi eq, %c4_i32_153, %c0_i32_154 : i32
    %c1_i32_155 = arith.constant 1 : i32
    %315 = arith.select %314, %c1_i32_155, %c4_i32_153 : i32
    %316 = vector.broadcast %315 : i32 to vector<8x128xi32>
    %317 = arith.remsi %313, %316 : vector<8x128xi32>
    %c0_i32_156 = arith.constant 0 : i32
    %318 = vector.broadcast %c0_i32_156 : i32 to vector<8x128xi32>
    %319 = arith.cmpi ne, %317, %318 : vector<8x128xi32>
    %c0_i32_157 = arith.constant 0 : i32
    %320 = vector.broadcast %c0_i32_157 : i32 to vector<8x128xi32>
    %321 = arith.cmpi slt, %317, %320 : vector<8x128xi32>
    %c0_i32_158 = arith.constant 0 : i32
    %322 = arith.cmpi slt, %315, %c0_i32_158 : i32
    %323 = vector.broadcast %322 : i1 to vector<8x128xi1>
    %324 = vector.broadcast %323 : vector<8x128xi1> to vector<8x128xi1>
    %325 = arith.xori %321, %324 : vector<8x128xi1>
    %326 = arith.andi %325, %319 : vector<8x128xi1>
    %327 = vector.broadcast %315 : i32 to vector<8x128xi32>
    %328 = arith.addi %317, %327 : vector<8x128xi32>
    %329 = arith.select %326, %328, %317 : vector<8x128xi1>, vector<8x128xi32>
    %c0_i32_159 = arith.constant 0 : i32
    %330 = vector.broadcast %c0_i32_159 : i32 to vector<8x128xi32>
    %331 = arith.cmpi eq, %329, %330 : vector<8x128xi32>
    %c1_i32_160 = arith.constant 1 : i32
    %332 = tpu.dynamic_rotate %308 by %c1_i32_160 dim 0 : vector<8x128xf32>, i32 -> vector<8x128xf32>
    %cst_161 = arith.constant 0.000000e+00 : f32
    %333 = vector.broadcast %cst_161 : f32 to vector<8x128xf32>
    %334 = arith.select %331, %333, %332 : vector<8x128xi1>, vector<8x128xf32>
    %335 = tpu.iota {dimensions = array<i32: 0>} : vector<8x128xi32>
    %c4_i32_162 = arith.constant 4 : i32
    %c0_i32_163 = arith.constant 0 : i32
    %336 = arith.cmpi eq, %c4_i32_162, %c0_i32_163 : i32
    %c1_i32_164 = arith.constant 1 : i32
    %337 = arith.select %336, %c1_i32_164, %c4_i32_162 : i32
    %338 = vector.broadcast %337 : i32 to vector<8x128xi32>
    %339 = arith.remsi %335, %338 : vector<8x128xi32>
    %c0_i32_165 = arith.constant 0 : i32
    %340 = vector.broadcast %c0_i32_165 : i32 to vector<8x128xi32>
    %341 = arith.cmpi ne, %339, %340 : vector<8x128xi32>
    %c0_i32_166 = arith.constant 0 : i32
    %342 = vector.broadcast %c0_i32_166 : i32 to vector<8x128xi32>
    %343 = arith.cmpi slt, %339, %342 : vector<8x128xi32>
    %c0_i32_167 = arith.constant 0 : i32
    %344 = arith.cmpi slt, %337, %c0_i32_167 : i32
    %345 = vector.broadcast %344 : i1 to vector<8x128xi1>
    %346 = vector.broadcast %345 : vector<8x128xi1> to vector<8x128xi1>
    %347 = arith.xori %343, %346 : vector<8x128xi1>
    %348 = arith.andi %347, %341 : vector<8x128xi1>
    %349 = vector.broadcast %337 : i32 to vector<8x128xi32>
    %350 = arith.addi %339, %349 : vector<8x128xi32>
    %351 = arith.select %348, %350, %339 : vector<8x128xi1>, vector<8x128xi32>
    %c3_i32_168 = arith.constant 3 : i32
    %352 = vector.broadcast %c3_i32_168 : i32 to vector<8x128xi32>
    %353 = arith.cmpi eq, %351, %352 : vector<8x128xi32>
    %c7_i32_169 = arith.constant 7 : i32
    %354 = tpu.dynamic_rotate %308 by %c7_i32_169 dim 0 : vector<8x128xf32>, i32 -> vector<8x128xf32>
    %cst_170 = arith.constant 0.000000e+00 : f32
    %355 = vector.broadcast %cst_170 : f32 to vector<8x128xf32>
    %356 = arith.select %353, %355, %354 : vector<8x128xi1>, vector<8x128xf32>
    %357 = tpu.concatenate %334, %308, %356 in 1 : vector<8x128xf32>, vector<8x128xf32>, vector<8x128xf32> -> vector<8x384xf32>
    %cst_171 = arith.constant dense<0.000000e+00> : vector<8x64xf32>
    %358 = tpu.matmul %357, %310, %cst_171 {dimension_numbers = #tpu.dot_dimension_numbers<[1], [0], [0], [1], [0, 0, 1, 1], [], []>} : vector<8x384xf32>, vector<384x64xf32>, vector<8x64xf32> -> vector<8x64xf32>
    %359 = vector.broadcast %312 : vector<1x64xf32> to vector<8x64xf32>
    %360 = arith.addf %358, %359 : vector<8x64xf32>
    %c1_172 = arith.constant 1 : index
    %c0_173 = arith.constant 0 : index
    %c0_174 = arith.constant 0 : index
    %361 = vector.load %arg7[%c1_172, %c0_173, %c0_174] : memref<3x32x32xf32, #tpu.memory_space<vmem>>, vector<1x32x32xf32>
    %362 = vector.shape_cast %361 : vector<1x32x32xf32> to vector<32x32xf32>
    %363 = vector.extract_strided_slice %362 {offsets = [0, 0], sizes = [16, 16], strides = [1, 1]} : vector<32x32xf32> to vector<16x16xf32>
    %c1_175 = arith.constant 1 : index
    %c0_176 = arith.constant 0 : index
    %c0_177 = arith.constant 0 : index
    %364 = vector.load %arg8[%c1_175, %c0_176, %c0_177] : memref<3x128x128xf32, #tpu.memory_space<vmem>>, vector<1x128x128xf32>
    %365 = vector.shape_cast %364 : vector<1x128x128xf32> to vector<128x128xf32>
    %cst_178 = arith.constant 0.000000e+00 : f32
    %366 = vector.broadcast %cst_178 : f32 to vector<8x64xf32>
    %cst_179 = arith.constant 0.000000e+00 : f32
    %367 = vector.broadcast %cst_179 : f32 to vector<8x64xf32>
    %368 = arith.cmpf oeq, %165, %367 : vector<8x64xf32>
    %369 = arith.select %368, %360, %366 : vector<8x64xi1>, vector<8x64xf32>
    %cst_180 = arith.constant 1.000000e+00 : f32
    %370 = vector.broadcast %cst_180 : f32 to vector<8x64xf32>
    %371 = arith.cmpf oeq, %165, %370 : vector<8x64xf32>
    %372 = arith.select %371, %360, %366 : vector<8x64xi1>, vector<8x64xf32>
    %373 = tpu.concatenate %369, %372 in 1 : vector<8x64xf32>, vector<8x64xf32> -> vector<8x128xf32>
    %cst_181 = arith.constant 2.000000e+00 : f32
    %374 = vector.broadcast %cst_181 : f32 to vector<8x64xf32>
    %375 = arith.cmpf oeq, %165, %374 : vector<8x64xf32>
    %376 = arith.select %375, %360, %366 : vector<8x64xi1>, vector<8x64xf32>
    %cst_182 = arith.constant 3.000000e+00 : f32
    %377 = vector.broadcast %cst_182 : f32 to vector<8x64xf32>
    %378 = arith.cmpf oeq, %165, %377 : vector<8x64xf32>
    %379 = arith.select %378, %360, %366 : vector<8x64xi1>, vector<8x64xf32>
    %380 = tpu.concatenate %376, %379 in 1 : vector<8x64xf32>, vector<8x64xf32> -> vector<8x128xf32>
    %cst_183 = arith.constant dense<0.000000e+00> : vector<8x128xf32>
    %381 = tpu.matmul %373, %365, %cst_183 {dimension_numbers = #tpu.dot_dimension_numbers<[1], [0], [0], [1], [0, 0, 1, 1], [], []>} : vector<8x128xf32>, vector<128x128xf32>, vector<8x128xf32> -> vector<8x128xf32>
    %cst_184 = arith.constant dense<0.000000e+00> : vector<8x128xf32>
    %382 = tpu.matmul %380, %365, %cst_184 {dimension_numbers = #tpu.dot_dimension_numbers<[1], [0], [0], [1], [0, 0, 1, 1], [], []>} : vector<8x128xf32>, vector<128x128xf32>, vector<8x128xf32> -> vector<8x128xf32>
    %383 = tpu.concatenate %381, %382 in 0 : vector<8x128xf32>, vector<8x128xf32> -> vector<16x128xf32>
    %cst_185 = arith.constant dense<0.000000e+00> : vector<16x128xf32>
    %384 = tpu.matmul %363, %383, %cst_185 {dimension_numbers = #tpu.dot_dimension_numbers<[1], [0], [0], [1], [0, 0, 1, 1], [], []>} : vector<16x16xf32>, vector<16x128xf32>, vector<16x128xf32> -> vector<16x128xf32>
    %c1_186 = arith.constant 1 : index
    %c0_187 = arith.constant 0 : index
    %c0_188 = arith.constant 0 : index
    %385 = vector.load %arg5[%c1_186, %c0_187, %c0_188] : memref<3x384x64xf32, #tpu.memory_space<vmem>>, vector<1x384x64xf32>
    %386 = vector.shape_cast %385 : vector<1x384x64xf32> to vector<384x64xf32>
    %c1_189 = arith.constant 1 : index
    %c0_190 = arith.constant 0 : index
    %c0_191 = arith.constant 0 : index
    %387 = vector.load %arg6[%c1_189, %c0_190, %c0_191] : memref<3x1x64xf32, #tpu.memory_space<vmem>>, vector<1x1x64xf32>
    %388 = vector.shape_cast %387 : vector<1x1x64xf32> to vector<1x64xf32>
    %389 = tpu.iota {dimensions = array<i32: 0>} : vector<16x128xi32>
    %c8_i32_192 = arith.constant 8 : i32
    %c0_i32_193 = arith.constant 0 : i32
    %390 = arith.cmpi eq, %c8_i32_192, %c0_i32_193 : i32
    %c1_i32_194 = arith.constant 1 : i32
    %391 = arith.select %390, %c1_i32_194, %c8_i32_192 : i32
    %392 = vector.broadcast %391 : i32 to vector<16x128xi32>
    %393 = arith.remsi %389, %392 : vector<16x128xi32>
    %c0_i32_195 = arith.constant 0 : i32
    %394 = vector.broadcast %c0_i32_195 : i32 to vector<16x128xi32>
    %395 = arith.cmpi ne, %393, %394 : vector<16x128xi32>
    %c0_i32_196 = arith.constant 0 : i32
    %396 = vector.broadcast %c0_i32_196 : i32 to vector<16x128xi32>
    %397 = arith.cmpi slt, %393, %396 : vector<16x128xi32>
    %c0_i32_197 = arith.constant 0 : i32
    %398 = arith.cmpi slt, %391, %c0_i32_197 : i32
    %399 = vector.broadcast %398 : i1 to vector<16x128xi1>
    %400 = vector.broadcast %399 : vector<16x128xi1> to vector<16x128xi1>
    %401 = arith.xori %397, %400 : vector<16x128xi1>
    %402 = arith.andi %401, %395 : vector<16x128xi1>
    %403 = vector.broadcast %391 : i32 to vector<16x128xi32>
    %404 = arith.addi %393, %403 : vector<16x128xi32>
    %405 = arith.select %402, %404, %393 : vector<16x128xi1>, vector<16x128xi32>
    %c0_i32_198 = arith.constant 0 : i32
    %406 = vector.broadcast %c0_i32_198 : i32 to vector<16x128xi32>
    %407 = arith.cmpi eq, %405, %406 : vector<16x128xi32>
    %c1_i32_199 = arith.constant 1 : i32
    %408 = tpu.dynamic_rotate %384 by %c1_i32_199 dim 0 : vector<16x128xf32>, i32 -> vector<16x128xf32>
    %cst_200 = arith.constant 0.000000e+00 : f32
    %409 = vector.broadcast %cst_200 : f32 to vector<16x128xf32>
    %410 = arith.select %407, %409, %408 : vector<16x128xi1>, vector<16x128xf32>
    %411 = tpu.iota {dimensions = array<i32: 0>} : vector<16x128xi32>
    %c8_i32_201 = arith.constant 8 : i32
    %c0_i32_202 = arith.constant 0 : i32
    %412 = arith.cmpi eq, %c8_i32_201, %c0_i32_202 : i32
    %c1_i32_203 = arith.constant 1 : i32
    %413 = arith.select %412, %c1_i32_203, %c8_i32_201 : i32
    %414 = vector.broadcast %413 : i32 to vector<16x128xi32>
    %415 = arith.remsi %411, %414 : vector<16x128xi32>
    %c0_i32_204 = arith.constant 0 : i32
    %416 = vector.broadcast %c0_i32_204 : i32 to vector<16x128xi32>
    %417 = arith.cmpi ne, %415, %416 : vector<16x128xi32>
    %c0_i32_205 = arith.constant 0 : i32
    %418 = vector.broadcast %c0_i32_205 : i32 to vector<16x128xi32>
    %419 = arith.cmpi slt, %415, %418 : vector<16x128xi32>
    %c0_i32_206 = arith.constant 0 : i32
    %420 = arith.cmpi slt, %413, %c0_i32_206 : i32
    %421 = vector.broadcast %420 : i1 to vector<16x128xi1>
    %422 = vector.broadcast %421 : vector<16x128xi1> to vector<16x128xi1>
    %423 = arith.xori %419, %422 : vector<16x128xi1>
    %424 = arith.andi %423, %417 : vector<16x128xi1>
    %425 = vector.broadcast %413 : i32 to vector<16x128xi32>
    %426 = arith.addi %415, %425 : vector<16x128xi32>
    %427 = arith.select %424, %426, %415 : vector<16x128xi1>, vector<16x128xi32>
    %c7_i32_207 = arith.constant 7 : i32
    %428 = vector.broadcast %c7_i32_207 : i32 to vector<16x128xi32>
    %429 = arith.cmpi eq, %427, %428 : vector<16x128xi32>
    %c15_i32_208 = arith.constant 15 : i32
    %430 = tpu.dynamic_rotate %384 by %c15_i32_208 dim 0 : vector<16x128xf32>, i32 -> vector<16x128xf32>
    %cst_209 = arith.constant 0.000000e+00 : f32
    %431 = vector.broadcast %cst_209 : f32 to vector<16x128xf32>
    %432 = arith.select %429, %431, %430 : vector<16x128xi1>, vector<16x128xf32>
    %433 = tpu.concatenate %410, %384, %432 in 1 : vector<16x128xf32>, vector<16x128xf32>, vector<16x128xf32> -> vector<16x384xf32>
    %cst_210 = arith.constant dense<0.000000e+00> : vector<16x64xf32>
    %434 = tpu.matmul %433, %386, %cst_210 {dimension_numbers = #tpu.dot_dimension_numbers<[1], [0], [0], [1], [0, 0, 1, 1], [], []>} : vector<16x384xf32>, vector<384x64xf32>, vector<16x64xf32> -> vector<16x64xf32>
    %435 = vector.broadcast %388 : vector<1x64xf32> to vector<16x64xf32>
    %436 = arith.addf %434, %435 : vector<16x64xf32>
    %c2_211 = arith.constant 2 : index
    %c0_212 = arith.constant 0 : index
    %c0_213 = arith.constant 0 : index
    %437 = vector.load %arg7[%c2_211, %c0_212, %c0_213] : memref<3x32x32xf32, #tpu.memory_space<vmem>>, vector<1x32x32xf32>
    %438 = vector.shape_cast %437 : vector<1x32x32xf32> to vector<32x32xf32>
    %c2_214 = arith.constant 2 : index
    %c0_215 = arith.constant 0 : index
    %c0_216 = arith.constant 0 : index
    %439 = vector.load %arg8[%c2_214, %c0_215, %c0_216] : memref<3x128x128xf32, #tpu.memory_space<vmem>>, vector<1x128x128xf32>
    %440 = vector.shape_cast %439 : vector<1x128x128xf32> to vector<128x128xf32>
    %cst_217 = arith.constant 0.000000e+00 : f32
    %441 = vector.broadcast %cst_217 : f32 to vector<16x64xf32>
    %cst_218 = arith.constant 0.000000e+00 : f32
    %442 = vector.broadcast %cst_218 : f32 to vector<16x64xf32>
    %443 = arith.cmpf oeq, %82, %442 : vector<16x64xf32>
    %444 = arith.select %443, %436, %441 : vector<16x64xi1>, vector<16x64xf32>
    %cst_219 = arith.constant 1.000000e+00 : f32
    %445 = vector.broadcast %cst_219 : f32 to vector<16x64xf32>
    %446 = arith.cmpf oeq, %82, %445 : vector<16x64xf32>
    %447 = arith.select %446, %436, %441 : vector<16x64xi1>, vector<16x64xf32>
    %448 = tpu.concatenate %444, %447 in 1 : vector<16x64xf32>, vector<16x64xf32> -> vector<16x128xf32>
    %cst_220 = arith.constant 2.000000e+00 : f32
    %449 = vector.broadcast %cst_220 : f32 to vector<16x64xf32>
    %450 = arith.cmpf oeq, %82, %449 : vector<16x64xf32>
    %451 = arith.select %450, %436, %441 : vector<16x64xi1>, vector<16x64xf32>
    %cst_221 = arith.constant 3.000000e+00 : f32
    %452 = vector.broadcast %cst_221 : f32 to vector<16x64xf32>
    %453 = arith.cmpf oeq, %82, %452 : vector<16x64xf32>
    %454 = arith.select %453, %436, %441 : vector<16x64xi1>, vector<16x64xf32>
    %455 = tpu.concatenate %451, %454 in 1 : vector<16x64xf32>, vector<16x64xf32> -> vector<16x128xf32>
    %cst_222 = arith.constant dense<0.000000e+00> : vector<16x128xf32>
    %456 = tpu.matmul %448, %440, %cst_222 {dimension_numbers = #tpu.dot_dimension_numbers<[1], [0], [0], [1], [0, 0, 1, 1], [], []>} : vector<16x128xf32>, vector<128x128xf32>, vector<16x128xf32> -> vector<16x128xf32>
    %cst_223 = arith.constant dense<0.000000e+00> : vector<16x128xf32>
    %457 = tpu.matmul %455, %440, %cst_223 {dimension_numbers = #tpu.dot_dimension_numbers<[1], [0], [0], [1], [0, 0, 1, 1], [], []>} : vector<16x128xf32>, vector<128x128xf32>, vector<16x128xf32> -> vector<16x128xf32>
    %458 = tpu.concatenate %456, %457 in 0 : vector<16x128xf32>, vector<16x128xf32> -> vector<32x128xf32>
    %cst_224 = arith.constant dense<0.000000e+00> : vector<32x128xf32>
    %459 = tpu.matmul %438, %458, %cst_224 {dimension_numbers = #tpu.dot_dimension_numbers<[1], [0], [0], [1], [0, 0, 1, 1], [], []>} : vector<32x32xf32>, vector<32x128xf32>, vector<32x128xf32> -> vector<32x128xf32>
    %c2_225 = arith.constant 2 : index
    %c0_226 = arith.constant 0 : index
    %c0_227 = arith.constant 0 : index
    %460 = vector.load %arg5[%c2_225, %c0_226, %c0_227] : memref<3x384x64xf32, #tpu.memory_space<vmem>>, vector<1x384x64xf32>
    %461 = vector.shape_cast %460 : vector<1x384x64xf32> to vector<384x64xf32>
    %c2_228 = arith.constant 2 : index
    %c0_229 = arith.constant 0 : index
    %c0_230 = arith.constant 0 : index
    %462 = vector.load %arg6[%c2_228, %c0_229, %c0_230] : memref<3x1x64xf32, #tpu.memory_space<vmem>>, vector<1x1x64xf32>
    %463 = vector.shape_cast %462 : vector<1x1x64xf32> to vector<1x64xf32>
    %464 = tpu.iota {dimensions = array<i32: 0>} : vector<32x128xi32>
    %c16_i32_231 = arith.constant 16 : i32
    %c0_i32_232 = arith.constant 0 : i32
    %465 = arith.cmpi eq, %c16_i32_231, %c0_i32_232 : i32
    %c1_i32_233 = arith.constant 1 : i32
    %466 = arith.select %465, %c1_i32_233, %c16_i32_231 : i32
    %467 = vector.broadcast %466 : i32 to vector<32x128xi32>
    %468 = arith.remsi %464, %467 : vector<32x128xi32>
    %c0_i32_234 = arith.constant 0 : i32
    %469 = vector.broadcast %c0_i32_234 : i32 to vector<32x128xi32>
    %470 = arith.cmpi ne, %468, %469 : vector<32x128xi32>
    %c0_i32_235 = arith.constant 0 : i32
    %471 = vector.broadcast %c0_i32_235 : i32 to vector<32x128xi32>
    %472 = arith.cmpi slt, %468, %471 : vector<32x128xi32>
    %c0_i32_236 = arith.constant 0 : i32
    %473 = arith.cmpi slt, %466, %c0_i32_236 : i32
    %474 = vector.broadcast %473 : i1 to vector<32x128xi1>
    %475 = vector.broadcast %474 : vector<32x128xi1> to vector<32x128xi1>
    %476 = arith.xori %472, %475 : vector<32x128xi1>
    %477 = arith.andi %476, %470 : vector<32x128xi1>
    %478 = vector.broadcast %466 : i32 to vector<32x128xi32>
    %479 = arith.addi %468, %478 : vector<32x128xi32>
    %480 = arith.select %477, %479, %468 : vector<32x128xi1>, vector<32x128xi32>
    %c0_i32_237 = arith.constant 0 : i32
    %481 = vector.broadcast %c0_i32_237 : i32 to vector<32x128xi32>
    %482 = arith.cmpi eq, %480, %481 : vector<32x128xi32>
    %c1_i32_238 = arith.constant 1 : i32
    %483 = tpu.dynamic_rotate %459 by %c1_i32_238 dim 0 : vector<32x128xf32>, i32 -> vector<32x128xf32>
    %cst_239 = arith.constant 0.000000e+00 : f32
    %484 = vector.broadcast %cst_239 : f32 to vector<32x128xf32>
    %485 = arith.select %482, %484, %483 : vector<32x128xi1>, vector<32x128xf32>
    %486 = tpu.iota {dimensions = array<i32: 0>} : vector<32x128xi32>
    %c16_i32_240 = arith.constant 16 : i32
    %c0_i32_241 = arith.constant 0 : i32
    %487 = arith.cmpi eq, %c16_i32_240, %c0_i32_241 : i32
    %c1_i32_242 = arith.constant 1 : i32
    %488 = arith.select %487, %c1_i32_242, %c16_i32_240 : i32
    %489 = vector.broadcast %488 : i32 to vector<32x128xi32>
    %490 = arith.remsi %486, %489 : vector<32x128xi32>
    %c0_i32_243 = arith.constant 0 : i32
    %491 = vector.broadcast %c0_i32_243 : i32 to vector<32x128xi32>
    %492 = arith.cmpi ne, %490, %491 : vector<32x128xi32>
    %c0_i32_244 = arith.constant 0 : i32
    %493 = vector.broadcast %c0_i32_244 : i32 to vector<32x128xi32>
    %494 = arith.cmpi slt, %490, %493 : vector<32x128xi32>
    %c0_i32_245 = arith.constant 0 : i32
    %495 = arith.cmpi slt, %488, %c0_i32_245 : i32
    %496 = vector.broadcast %495 : i1 to vector<32x128xi1>
    %497 = vector.broadcast %496 : vector<32x128xi1> to vector<32x128xi1>
    %498 = arith.xori %494, %497 : vector<32x128xi1>
    %499 = arith.andi %498, %492 : vector<32x128xi1>
    %500 = vector.broadcast %488 : i32 to vector<32x128xi32>
    %501 = arith.addi %490, %500 : vector<32x128xi32>
    %502 = arith.select %499, %501, %490 : vector<32x128xi1>, vector<32x128xi32>
    %c15_i32_246 = arith.constant 15 : i32
    %503 = vector.broadcast %c15_i32_246 : i32 to vector<32x128xi32>
    %504 = arith.cmpi eq, %502, %503 : vector<32x128xi32>
    %c31_i32_247 = arith.constant 31 : i32
    %505 = tpu.dynamic_rotate %459 by %c31_i32_247 dim 0 : vector<32x128xf32>, i32 -> vector<32x128xf32>
    %cst_248 = arith.constant 0.000000e+00 : f32
    %506 = vector.broadcast %cst_248 : f32 to vector<32x128xf32>
    %507 = arith.select %504, %506, %505 : vector<32x128xi1>, vector<32x128xf32>
    %508 = tpu.concatenate %485, %459, %507 in 1 : vector<32x128xf32>, vector<32x128xf32>, vector<32x128xf32> -> vector<32x384xf32>
    %cst_249 = arith.constant dense<0.000000e+00> : vector<32x64xf32>
    %509 = tpu.matmul %508, %461, %cst_249 {dimension_numbers = #tpu.dot_dimension_numbers<[1], [0], [0], [1], [0, 0, 1, 1], [], []>} : vector<32x384xf32>, vector<384x64xf32>, vector<32x64xf32> -> vector<32x64xf32>
    %510 = vector.broadcast %463 : vector<1x64xf32> to vector<32x64xf32>
    %511 = arith.addf %509, %510 : vector<32x64xf32>
    %c0_250 = arith.constant 0 : index
    %c0_251 = arith.constant 0 : index
    %512 = vector.load %arg17[%c0_250, %c0_251] : memref<32x64xf32, #tpu.memory_space<vmem>>, vector<32x64xf32>
    tpu.vector_store %arg17[%c0_250, %c0_251], %511 {strides = array<i32>} : memref<32x64xf32, #tpu.memory_space<vmem>>, vector<32x64xf32>,
    return
  }
}

</mosaic_0001>

<llo_original>
// kernel: deep_ae_forward.1
$region0: #{deep_ae_forward.1}
  #allocation0 [shape = 'u32[]', space=smem, size = 0x4, offset = 0x4, fixed_abs, tag = 'smem constant byte address 0x4 - core index']
  #allocation1 [shape = 'u32[144,128]{1,0:T(1,128)}', space=vmem, size = 0x12000, scoped, tag = 'internal scratch']
  %s0 = inlined_call_operand.vmem [shape: f32[32,64], index: 0, kind: input, shape index: {}]
  %s1 = inlined_call_operand.vmem [shape: f32[3,192,128], index: 1, kind: input, shape index: {}]
  %s2 = inlined_call_operand.vmem [shape: f32[3,1,128], index: 2, kind: input, shape index: {}]
  %s3 = inlined_call_operand.vmem [shape: f32[3,32,32], index: 3, kind: input, shape index: {}]
  %s4 = inlined_call_operand.vmem [shape: f32[3,128,128], index: 4, kind: input, shape index: {}]
  %s5 = inlined_call_operand.vmem [shape: f32[3,384,64], index: 5, kind: input, shape index: {}]
  %s6 = inlined_call_operand.vmem [shape: f32[3,1,64], index: 6, kind: input, shape index: {}]
  %s7 = inlined_call_operand.vmem [shape: f32[3,32,32], index: 7, kind: input, shape index: {}]
  %s8 = inlined_call_operand.vmem [shape: f32[3,128,128], index: 8, kind: input, shape index: {}]
  %s9 = inlined_call_operand.vmem [shape: f32[128,8], index: 9, kind: input, shape index: {}]
  %s10 = inlined_call_operand.vmem [shape: f32[128,1], index: 10, kind: input, shape index: {}]
  %s11 = inlined_call_operand.vmem [shape: f32[64,128], index: 11, kind: input, shape index: {}]
  %s12 = inlined_call_operand.vmem [shape: f32[64,1], index: 12, kind: input, shape index: {}]
  %s13 = inlined_call_operand.vmem [shape: f32[128,64], index: 13, kind: input, shape index: {}]
  %s14 = inlined_call_operand.vmem [shape: f32[128,1], index: 14, kind: input, shape index: {}]
  %s15 = inlined_call_operand.vmem [shape: f32[8,128], index: 15, kind: input, shape index: {}]
  %s16 = inlined_call_operand.vmem [shape: f32[1,64], index: 16, kind: input, shape index: {}]
  %s17 = inlined_call_operand.vmem [shape: f32[32,64], index: 17, kind: output, shape index: {}]
  %s18 = sld [smem:[#allocation0]]
  $region78: #{deep_ae_forward.1} parent=0
    _
  %s20 = ssub.s32 1, %s18
  %s21 = scalar_select 0, %s20, %s18
  // Predicated region
  $region2: #{deep_ae_forward.1} parent=0 // pred_check
    _
  $region3: #{deep_ae_forward.1} parent=0 // pred_check_branch
    %23 = sbr.rel (0) target = $region5
  $region4: #{deep_ae_forward.1} parent=0 // pred_region
    _
  $region5: #{deep_ae_forward.1} parent=0 // pred_fallthru
    _
  // Predicated region
  $region6: #{deep_ae_forward.1} parent=0 // pred_check
    _
  $region7: #{deep_ae_forward.1} parent=0 // pred_check_branch
    %25 = sbr.rel (0) target = $region9
  $region8: #{deep_ae_forward.1} parent=0 // pred_region
    _
  $region9: #{deep_ae_forward.1} parent=0 // pred_fallthru
    _
  // Predicated region
  $region10: #{deep_ae_forward.1} parent=0 // pred_check
    _
  $region11: #{deep_ae_forward.1} parent=0 // pred_check_branch
    %27 = sbr.rel (0) target = $region13
  $region12: #{deep_ae_forward.1} parent=0 // pred_region
    _
  $region13: #{deep_ae_forward.1} parent=0 // pred_fallthru
    _
  // Predicated region
  $region14: #{deep_ae_forward.1} parent=0 // pred_check
    _
  $region15: #{deep_ae_forward.1} parent=0 // pred_check_branch
    %29 = sbr.rel (0) target = $region17
  $region16: #{deep_ae_forward.1} parent=0 // pred_region
    _
  $region17: #{deep_ae_forward.1} parent=0 // pred_fallthru
    _
  // Predicated region
  $region18: #{deep_ae_forward.1} parent=0 // pred_check
    _
  $region19: #{deep_ae_forward.1} parent=0 // pred_check_branch
    %31 = sbr.rel (0) target = $region21
  $region20: #{deep_ae_forward.1} parent=0 // pred_region
    _
  $region21: #{deep_ae_forward.1} parent=0 // pred_fallthru
    _
  // Predicated region
  $region22: #{deep_ae_forward.1} parent=0 // pred_check
    _
  $region23: #{deep_ae_forward.1} parent=0 // pred_check_branch
    %33 = sbr.rel (0) target = $region25
  $region24: #{deep_ae_forward.1} parent=0 // pred_region
    _
  $region25: #{deep_ae_forward.1} parent=0 // pred_fallthru
    _
  // Predicated region
  $region26: #{deep_ae_forward.1} parent=0 // pred_check
    _
  $region27: #{deep_ae_forward.1} parent=0 // pred_check_branch
    %35 = sbr.rel (0) target = $region29
  $region28: #{deep_ae_forward.1} parent=0 // pred_region
    _
  $region29: #{deep_ae_forward.1} parent=0 // pred_fallthru
    _
  // Predicated region
  $region30: #{deep_ae_forward.1} parent=0 // pred_check
    _
  $region31: #{deep_ae_forward.1} parent=0 // pred_check_branch
    %37 = sbr.rel (0) target = $region33
  $region32: #{deep_ae_forward.1} parent=0 // pred_region
    _
  $region33: #{deep_ae_forward.1} parent=0 // pred_fallthru
    _
  // Predicated region
  $region34: #{deep_ae_forward.1} parent=0 // pred_check
    _
  $region35: #{deep_ae_forward.1} parent=0 // pred_check_branch
    %39 = sbr.rel (0) target = $region37
  $region36: #{deep_ae_forward.1} parent=0 // pred_region
    _
  $region37: #{deep_ae_forward.1} parent=0 // pred_fallthru
    _
  // Predicated region
  $region38: #{deep_ae_forward.1} parent=0 // pred_check
    _
  $region39: #{deep_ae_forward.1} parent=0 // pred_check_branch
    %41 = sbr.rel (0) target = $region41
  $region40: #{deep_ae_forward.1} parent=0 // pred_region
    _
  $region41: #{deep_ae_forward.1} parent=0 // pred_fallthru
    _
  // Predicated region
  $region42: #{deep_ae_forward.1} parent=0 // pred_check
    _
  $region43: #{deep_ae_forward.1} parent=0 // pred_check_branch
    %43 = sbr.rel (0) target = $region45
  $region44: #{deep_ae_forward.1} parent=0 // pred_region
    _
  $region45: #{deep_ae_forward.1} parent=0 // pred_fallthru
    _
  // Predicated region
  $region46: #{deep_ae_forward.1} parent=0 // pred_check
    _
  $region47: #{deep_ae_forward.1} parent=0 // pred_check_branch
    %45 = sbr.rel (0) target = $region49
  $region48: #{deep_ae_forward.1} parent=0 // pred_region
    _
  $region49: #{deep_ae_forward.1} parent=0 // pred_fallthru
    _
  // Predicated region
  $region50: #{deep_ae_forward.1} parent=0 // pred_check
    _
  $region51: #{deep_ae_forward.1} parent=0 // pred_check_branch
    %47 = sbr.rel (0) target = $region53
  $region52: #{deep_ae_forward.1} parent=0 // pred_region
    _
  $region53: #{deep_ae_forward.1} parent=0 // pred_fallthru
    _
  // Predicated region
  $region54: #{deep_ae_forward.1} parent=0 // pred_check
    _
  $region55: #{deep_ae_forward.1} parent=0 // pred_check_branch
    %49 = sbr.rel (0) target = $region57
  $region56: #{deep_ae_forward.1} parent=0 // pred_region
    _
  $region57: #{deep_ae_forward.1} parent=0 // pred_fallthru
    _
  // Predicated region
  $region58: #{deep_ae_forward.1} parent=0 // pred_check
    _
  $region59: #{deep_ae_forward.1} parent=0 // pred_check_branch
    %51 = sbr.rel (0) target = $region61
  $region60: #{deep_ae_forward.1} parent=0 // pred_region
    _
  $region61: #{deep_ae_forward.1} parent=0 // pred_fallthru
    _
  // Predicated region
  $region62: #{deep_ae_forward.1} parent=0 // pred_check
    _
  $region63: #{deep_ae_forward.1} parent=0 // pred_check_branch
    %53 = sbr.rel (0) target = $region65
  $region64: #{deep_ae_forward.1} parent=0 // pred_region
    _
  $region65: #{deep_ae_forward.1} parent=0 // pred_fallthru
    _
  // Predicated region
  $region66: #{deep_ae_forward.1} parent=0 // pred_check
    _
  $region67: #{deep_ae_forward.1} parent=0 // pred_check_branch
    %55 = sbr.rel (0) target = $region69
  $region68: #{deep_ae_forward.1} parent=0 // pred_region
    _
  $region69: #{deep_ae_forward.1} parent=0 // pred_fallthru
    _
  %v56 = vld [vmem:[%s0] sm:$0xff]
  %v57 = vld [vmem:[%s0 + $0x8] sm:$0xff]
  %v58 = vld [vmem:[%s0 + $0x10] sm:$0xff]
  %v59 = vld [vmem:[%s0 + $0x18] sm:$0xff]
  %v60 = vld [vmem:[%s1] sm:$0xff]
  %v61 = vld [vmem:[%s1 + $0x8] sm:$0xff]
  %v62 = vld [vmem:[%s1 + $0x10] sm:$0xff]
  %v63 = vld [vmem:[%s1 + $0x18] sm:$0xff]
  %v64 = vld [vmem:[%s1 + $0x20] sm:$0xff]
  %v65 = vld [vmem:[%s1 + $0x28] sm:$0xff]
  %v66 = vld [vmem:[%s1 + $0x30] sm:$0xff]
  %v67 = vld [vmem:[%s1 + $0x38] sm:$0xff]
  %v68 = vld [vmem:[%s1 + $0x40] sm:$0xff]
  %v69 = vld [vmem:[%s1 + $0x48] sm:$0xff]
  %v70 = vld [vmem:[%s1 + $0x50] sm:$0xff]
  %v71 = vld [vmem:[%s1 + $0x58] sm:$0xff]
  %v72 = vld [vmem:[%s1 + $0x60] sm:$0xff]
  %v73 = vld [vmem:[%s1 + $0x68] sm:$0xff]
  %v74 = vld [vmem:[%s1 + $0x70] sm:$0xff]
  %v75 = vld [vmem:[%s1 + $0x78] sm:$0xff]
  %v76 = vld [vmem:[%s1 + $0x80] sm:$0xff]
  %v77 = vld [vmem:[%s1 + $0x88] sm:$0xff]
  %v78 = vld [vmem:[%s1 + $0x90] sm:$0xff]
  %v79 = vld [vmem:[%s1 + $0x98] sm:$0xff]
  %v80 = vld [vmem:[%s1 + $0xa0] sm:$0xff]
  %v81 = vld [vmem:[%s1 + $0xa8] sm:$0xff]
  %v82 = vld [vmem:[%s1 + $0xb0] sm:$0xff]
  %v83 = vld [vmem:[%s1 + $0xb8] sm:$0xff]
  %v84 = vld [vmem:[%s2] sm:$0x1]
  %v85 = vlaneseq
  %v86 = vshrl.u32 %v85, 7
  %v87 = vadd.s32 %v86, 8
  %v88 = vadd.s32 %v86, 16
  %v89 = vadd.s32 %v86, 24
  %vm90 = vcmp.lt.s32.totalorder %v86, 0
  %v91 = vsub.s32 0, %v86
  %v92 = vsel %vm90, %v91, %v86
  %v93 = vshrl.u32 %v92, 4
  %v94 = vand.u32 %v92, 15
  %v95 = vsub.s32 0, %v94
  %v96 = vsel %vm90, %v95, %v94
  %vm97 = vcmp.lt.s32.totalorder %v87, 0
  %v98 = vsub.s32 0, %v87
  %v99 = vsel %vm97, %v98, %v87
  %v100 = vshrl.u32 %v99, 4
  %v101 = vand.u32 %v99, 15
  %v102 = vsub.s32 0, %v101
  %v103 = vsel %vm97, %v102, %v101
  %vm104 = vcmp.lt.s32.totalorder %v88, 0
  %v105 = vsub.s32 0, %v88
  %v106 = vsel %vm104, %v105, %v88
  %v107 = vshrl.u32 %v106, 4
  %v108 = vand.u32 %v106, 15
  %v109 = vsub.s32 0, %v108
  %v110 = vsel %vm104, %v109, %v108
  %vm111 = vcmp.lt.s32.totalorder %v89, 0
  %v112 = vsub.s32 0, %v89
  %v113 = vsel %vm111, %v112, %v89
  %v114 = vshrl.u32 %v113, 4
  %v115 = vand.u32 %v113, 15
  %v116 = vsub.s32 0, %v115
  %v117 = vsel %vm111, %v116, %v115
  %vm118 = vcmp.ne.s32.totalorder %v96, 0
  %vm119 = vcmp.ne.s32.totalorder %v103, 0
  %vm120 = vcmp.ne.s32.totalorder %v110, 0
  %vm121 = vcmp.ne.s32.totalorder %v117, 0
  %vm122 = vcmp.lt.s32.totalorder %v96, 0
  %vm123 = vcmp.lt.s32.totalorder %v103, 0
  %vm124 = vcmp.lt.s32.totalorder %v110, 0
  %vm125 = vcmp.lt.s32.totalorder %v117, 0
  %vm126 = vmand %vm122, %vm118
  %vm127 = vmand %vm123, %vm119
  %vm128 = vmand %vm124, %vm120
  %vm129 = vmand %vm125, %vm121
  %v130 = vadd.s32 %v96, 16
  %v131 = vadd.s32 %v103, 16
  %v132 = vadd.s32 %v110, 16
  %v133 = vadd.s32 %v117, 16
  %v134 = vsel %vm126, %v130, %v96
  %v135 = vsel %vm127, %v131, %v103
  %v136 = vsel %vm128, %v132, %v110
  %v137 = vsel %vm129, %v133, %v117
  %vm138 = vcmp.eq.s32.totalorder %v134, 0
  %vm139 = vcmp.eq.s32.totalorder %v135, 0
  %vm140 = vcmp.eq.s32.totalorder %v136, 0
  %vm141 = vcmp.eq.s32.totalorder %v137, 0
  %v142 = vrot.slane %v56, 7
  %v143 = vrot.slane %v57, 7
  %v144 = vrot.slane %v58, 7
  %v145 = vrot.slane %v59, 7
  %vm146 = vcmp.lt.s32.totalorder %v86, 1
  %v147 = vsel %vm146, %v144, %v145
  %v148 = vsel %vm146, %v143, %v144
  %v149 = vsel %vm146, %v142, %v143
  %v150 = vsel %vm146, %v145, %v142
  %v151 = vsel %vm138, 0.0, %v150
  %v152 = vsel %vm139, 0.0, %v149
  %v153 = vsel %vm140, 0.0, %v148
  %v154 = vsel %vm141, 0.0, %v147
  %vm155 = vcmp.eq.s32.totalorder %v134, 15
  %vm156 = vcmp.eq.s32.totalorder %v135, 15
  %vm157 = vcmp.eq.s32.totalorder %v136, 15
  %vm158 = vcmp.eq.s32.totalorder %v137, 15
  %v159 = vrot.slane %v56, 1
  %v160 = vrot.slane %v57, 1
  %v161 = vrot.slane %v58, 1
  %v162 = vrot.slane %v59, 1
  %vm163 = vcmp.lt.s32.totalorder %v86, 7
  %v164 = vsel %vm163, %v161, %v162
  %v165 = vsel %vm163, %v160, %v161
  %v166 = vsel %vm163, %v159, %v160
  %v167 = vsel %vm163, %v162, %v159
  %v168 = vsel %vm155, 0.0, %v166
  %v169 = vsel %vm156, 0.0, %v165
  %v170 = vsel %vm157, 0.0, %v164
  %v171 = vsel %vm158, 0.0, %v167
  %176 = vrot.lane.b32.xlu0 %v56, 64
  %v177 = vpop.permute.xlu0 %176
  %178 = vrot.lane.b32.xlu0 %v57, 64
  %v179 = vpop.permute.xlu0 %178
  %180 = vrot.lane.b32.xlu0 %v58, 64
  %v181 = vpop.permute.xlu0 %180
  %182 = vrot.lane.b32.xlu0 %v59, 64
  %v183 = vpop.permute.xlu0 %182
  %vm188 = vcmask 523264
  %v189 = vsel %vm188, %v151, %v177
  %v190 = vsel %vm188, %v152, %v179
  %v191 = vsel %vm188, %v153, %v181
  %v192 = vsel %vm188, %v154, %v183
  %v194 = vlaneseq
  %v195 = vshrl.u32 %v194, 7
  %v196 = vsub.s32 0, %v195
  %v197 = vrot.slane %v84, %v196
  %v200 = vsel %vm188, %v168, 0
  %v203 = vsel %vm188, %v169, 0
  %v206 = vsel %vm188, %v170, 0
  %v209 = vsel %vm188, %v171, 0
  %211 = vmatprep.subr.mxu0 0.0
  %212 = vmatpush1.msra.mxu0 %v60
  %213 = vmatprep.subr.mxu0 0.0
  %214 = vmatpush1.msra.mxu0 %v61
  %215 = vmatprep.subr.mxu0 0.0
  %216 = vmatpush1.msra.mxu0 %v62
  %217 = vmatprep.subr.mxu0 0.0
  %218 = vmatpush1.msra.mxu0 %v63
  %219 = vmatprep.subr.mxu0 0.0
  %220 = vmatpush1.msra.mxu0 %v64
  %221 = vmatprep.subr.mxu0 0.0
  %222 = vmatpush1.msra.mxu0 %v65
  %223 = vmatprep.subr.mxu0 0.0
  %224 = vmatpush1.msra.mxu0 %v66
  %225 = vmatprep.subr.mxu0 0.0
  %226 = vmatpush1.msra.mxu0 %v67
  %227 = vmatprep.subr.mxu0 0.0
  %228 = vmatpush1.msra.mxu0 %v68
  %229 = vmatprep.subr.mxu0 0.0
  %230 = vmatpush1.msra.mxu0 %v69
  %231 = vmatprep.subr.mxu0 0.0
  %232 = vmatpush1.msra.mxu0 %v70
  %233 = vmatprep.subr.mxu0 0.0
  %234 = vmatpush1.msra.mxu0 %v71
  %235 = vmatprep.subr.mxu0 0.0
  %236 = vmatpush1.msra.mxu0 %v72
  %237 = vmatprep.subr.mxu0 0.0
  %238 = vmatpush1.msra.mxu0 %v73
  %239 = vmatprep.subr.mxu0 0.0
  %240 = vmatpush1.msra.mxu0 %v74
  %241 = vmatprep.subr.mxu0 0.0
  %242 = vmatpush1.msra.mxu0 %v75
  %243 = vmatprep.subr.mxu0 0.0
  %244 = vmatpush1.msra.mxu0 %v76
  %245 = vmatprep.subr.mxu0 0.0
  %246 = vmatpush1.msra.mxu0 %v77
  %247 = vmatprep.subr.mxu0 0.0
  %248 = vmatpush1.msra.mxu0 %v78
  %249 = vmatprep.subr.mxu0 0.0
  %250 = vmatpush1.msra.mxu0 %v79
  %251 = vmatprep.subr.mxu0 0.0
  %252 = vmatpush1.msra.mxu0 %v80
  %253 = vmatprep.subr.mxu0 0.0
  %254 = vmatpush1.msra.mxu0 %v81
  %255 = vmatprep.subr.mxu0 0.0
  %256 = vmatpush1.msra.mxu0 %v82
  %257 = vmatprep.subr.mxu0 0.0
  %258 = vmatpush1.msra.mxu0 %v83
  %259 = vmatprep.subr.mxu0 0.0
  %260 = vmatpush1.msra.mxu0 0.0
  %261 = vmatprep.subr.mxu0 0.0
  %262 = vmatpush1.msra.mxu0 0.0
  %263 = vmatprep.subr.mxu0 0.0
  %264 = vmatpush1.msra.mxu0 0.0
  %265 = vmatprep.subr.mxu0 0.0
  %266 = vmatpush1.msra.mxu0 0.0
  %267 = vmatprep.subr.mxu0 0.0
  %268 = vmatpush1.msra.mxu0 0.0
  %269 = vmatprep.subr.mxu0 0.0
  %270 = vmatpush1.msra.mxu0 0.0
  %271 = vmatprep.subr.mxu0 0.0
  %272 = vmatpush1.msra.mxu0 0.0
  %273 = vmatprep.subr.mxu0 0.0
  %274 = vmatpush1.msra.mxu0 0.0
  %275 = vmatprep.mubr.f32.mxu0 %v200
  %276 = vmatmul.mubr.f32.gmra.mrb[0].mxu0 %v189
  %v277 = vpop.f32.mrb[0].mxu0
  %v278 = vadd.f32 %v197, %v277
  %v279 = vpop.f32.mrb[0].mxu0
  %280 = vmatprep.mubr.f32.mxu0 %v203
  %281 = vmatmul.mubr.f32.gmra.mrb[0].mxu0 %v190
  %v282 = vpop.f32.mrb[0].mxu0
  %v283 = vadd.f32 %v197, %v282
  %v284 = vpop.f32.mrb[0].mxu0
  %285 = vmatprep.mubr.f32.mxu0 %v206
  %286 = vmatmul.mubr.f32.gmra.mrb[0].mxu0 %v191
  %v287 = vpop.f32.mrb[0].mxu0
  %v288 = vadd.f32 %v197, %v287
  %v289 = vpop.f32.mrb[0].mxu0
  %290 = vmatprep.mubr.f32.mxu0 %v209
  %291 = vmatmul.mubr.f32.gmra.mrb[0].mxu0 %v192
  %v292 = vpop.f32.mrb[0].mxu0
  %v293 = vadd.f32 %v197, %v292
  %v294 = vpop.f32.mrb[0].mxu0
  %295 = vdwg.mxu0
  %vm296 = vcmp.ge.f32.partialorder %v278, 0.0
  %vm297 = vcmp.ge.f32.partialorder %v283, 0.0
  %vm298 = vcmp.ge.f32.partialorder %v288, 0.0
  %vm299 = vcmp.ge.f32.partialorder %v293, 0.0
  %v300 = vmul.f32 %v278, 0.01
  %v301 = vmul.f32 %v283, 0.01
  %v302 = vmul.f32 %v288, 0.01
  %v303 = vmul.f32 %v293, 0.01
  %v304 = vsel %vm296, %v278, %v300
  %v305 = vsel %vm297, %v283, %v301
  %v306 = vsel %vm298, %v288, %v302
  %v307 = vsel %vm299, %v293, %v303
  %v308 = vld [vmem:[%s3] sm:$0xff]
  %v309 = vld [vmem:[%s3 + $0x8] sm:$0xff]
  %v310 = vld [vmem:[%s3 + $0x10] sm:$0xff]
  %v311 = vld [vmem:[%s3 + $0x18] sm:$0xff]
  %v312 = vld [vmem:[%s4] sm:$0xff]
  %v313 = vld [vmem:[%s4 + $0x8] sm:$0xff]
  %v314 = vld [vmem:[%s4 + $0x10] sm:$0xff]
  %v315 = vld [vmem:[%s4 + $0x18] sm:$0xff]
  %v316 = vld [vmem:[%s4 + $0x20] sm:$0xff]
  %v317 = vld [vmem:[%s4 + $0x28] sm:$0xff]
  %v318 = vld [vmem:[%s4 + $0x30] sm:$0xff]
  %v319 = vld [vmem:[%s4 + $0x38] sm:$0xff]
  %v320 = vld [vmem:[%s4 + $0x40] sm:$0xff]
  %v321 = vld [vmem:[%s4 + $0x48] sm:$0xff]
  %v322 = vld [vmem:[%s4 + $0x50] sm:$0xff]
  %v323 = vld [vmem:[%s4 + $0x58] sm:$0xff]
  %v324 = vld [vmem:[%s4 + $0x60] sm:$0xff]
  %v325 = vld [vmem:[%s4 + $0x68] sm:$0xff]
  %v326 = vld [vmem:[%s4 + $0x70] sm:$0xff]
  %v327 = vld [vmem:[%s4 + $0x78] sm:$0xff]
  %vm328 = vcmask 261120
  %v330 = vsel %vm328, %v308, 0
  %v333 = vsel %vm328, %v309, 0
  %v336 = vsel %vm328, %v310, 0
  %v339 = vsel %vm328, %v311, 0
  %341 = vmatprep.subr.mxu0 0.0
  %342 = vmatpush1.msra.mxu0 %v304
  %343 = vmatprep.subr.mxu0 0.0
  %344 = vmatpush1.msra.mxu0 %v305
  %345 = vmatprep.subr.mxu0 0.0
  %346 = vmatpush1.msra.mxu0 %v306
  %347 = vmatprep.subr.mxu0 0.0
  %348 = vmatpush1.msra.mxu0 %v307
  %349 = vmatprep.subr.mxu0 0.0
  %350 = vmatpush1.msra.mxu0 0.0
  %351 = vmatprep.subr.mxu0 0.0
  %352 = vmatpush1.msra.mxu0 0.0
  %353 = vmatprep.subr.mxu0 0.0
  %354 = vmatpush1.msra.mxu0 0.0
  %355 = vmatprep.subr.mxu0 0.0
  %356 = vmatpush1.msra.mxu0 0.0
  %357 = vmatprep.subr.mxu0 0.0
  %358 = vmatpush1.msra.mxu0 0.0
  %359 = vmatprep.subr.mxu0 0.0
  %360 = vmatpush1.msra.mxu0 0.0
  %361 = vmatprep.subr.mxu0 0.0
  %362 = vmatpush1.msra.mxu0 0.0
  %363 = vmatprep.subr.mxu0 0.0
  %364 = vmatpush1.msra.mxu0 0.0
  %365 = vmatprep.subr.mxu0 0.0
  %366 = vmatpush1.msra.mxu0 0.0
  %367 = vmatprep.subr.mxu0 0.0
  %368 = vmatpush1.msra.mxu0 0.0
  %369 = vmatprep.subr.mxu0 0.0
  %370 = vmatpush1.msra.mxu0 0.0
  %371 = vmatprep.subr.mxu0 0.0
  %372 = vmatpush1.msra.mxu0 0.0
  %373 = vmatprep.subr.mxu0 0.0
  %374 = vmatpush1.msra.mxu0 0.0
  %375 = vmatprep.subr.mxu0 0.0
  %376 = vmatpush1.msra.mxu0 0.0
  %377 = vmatprep.subr.mxu0 0.0
  %378 = vmatpush1.msra.mxu0 0.0
  %379 = vmatprep.subr.mxu0 0.0
  %380 = vmatpush1.msra.mxu0 0.0
  %381 = vmatprep.subr.mxu0 0.0
  %382 = vmatpush1.msra.mxu0 0.0
  %383 = vmatprep.subr.mxu0 0.0
  %384 = vmatpush1.msra.mxu0 0.0
  %385 = vmatprep.subr.mxu0 0.0
  %386 = vmatpush1.msra.mxu0 0.0
  %387 = vmatprep.subr.mxu0 0.0
  %388 = vmatpush1.msra.mxu0 0.0
  %389 = vmatprep.subr.mxu0 0.0
  %390 = vmatpush1.msra.mxu0 0.0
  %391 = vmatprep.subr.mxu0 0.0
  %392 = vmatpush1.msra.mxu0 0.0
  %393 = vmatprep.subr.mxu0 0.0
  %394 = vmatpush1.msra.mxu0 0.0
  %395 = vmatprep.subr.mxu0 0.0
  %396 = vmatpush1.msra.mxu0 0.0
  %397 = vmatprep.subr.mxu0 0.0
  %398 = vmatpush1.msra.mxu0 0.0
  %399 = vmatprep.subr.mxu0 0.0
  %400 = vmatpush1.msra.mxu0 0.0
  %401 = vmatprep.subr.mxu0 0.0
  %402 = vmatpush1.msra.mxu0 0.0
  %403 = vmatprep.subr.mxu0 0.0
  %404 = vmatpush1.msra.mxu0 0.0
  %405 = vmatprep.mubr.f32.mxu0 0.0
  %406 = vmatmul.mubr.f32.gmra.mrb[0].mxu0 %v330
  %v407 = vpop.f32.mrb[0].mxu0
  %v408 = vadd.f32 0.0, %v407
  %v409 = vpop.f32.mrb[0].mxu0
  %410 = vmatprep.mubr.f32.mxu0 0.0
  %411 = vmatmul.mubr.f32.gmra.mrb[0].mxu0 %v333
  %v412 = vpop.f32.mrb[0].mxu0
  %v413 = vadd.f32 0.0, %v412
  %v414 = vpop.f32.mrb[0].mxu0
  %415 = vmatprep.mubr.f32.mxu0 0.0
  %416 = vmatmul.mubr.f32.gmra.mrb[0].mxu0 %v336
  %v417 = vpop.f32.mrb[0].mxu0
  %v418 = vadd.f32 0.0, %v417
  %v419 = vpop.f32.mrb[0].mxu0
  %420 = vmatprep.mubr.f32.mxu0 0.0
  %421 = vmatmul.mubr.f32.gmra.mrb[0].mxu0 %v339
  %v422 = vpop.f32.mrb[0].mxu0
  %v423 = vadd.f32 0.0, %v422
  %v424 = vpop.f32.mrb[0].mxu0
  %425 = vdwg.mxu0
  %426 = vmatprep.subr.mxu0 0.0
  %427 = vmatpush1.msra.mxu0 %v312
  %428 = vmatprep.subr.mxu0 0.0
  %429 = vmatpush1.msra.mxu0 %v313
  %430 = vmatprep.subr.mxu0 0.0
  %431 = vmatpush1.msra.mxu0 %v314
  %432 = vmatprep.subr.mxu0 0.0
  %433 = vmatpush1.msra.mxu0 %v315
  %434 = vmatprep.subr.mxu0 0.0
  %435 = vmatpush1.msra.mxu0 %v316
  %436 = vmatprep.subr.mxu0 0.0
  %437 = vmatpush1.msra.mxu0 %v317
  %438 = vmatprep.subr.mxu0 0.0
  %439 = vmatpush1.msra.mxu0 %v318
  %440 = vmatprep.subr.mxu0 0.0
  %441 = vmatpush1.msra.mxu0 %v319
  %442 = vmatprep.subr.mxu0 0.0
  %443 = vmatpush1.msra.mxu0 %v320
  %444 = vmatprep.subr.mxu0 0.0
  %445 = vmatpush1.msra.mxu0 %v321
  %446 = vmatprep.subr.mxu0 0.0
  %447 = vmatpush1.msra.mxu0 %v322
  %448 = vmatprep.subr.mxu0 0.0
  %449 = vmatpush1.msra.mxu0 %v323
  %450 = vmatprep.subr.mxu0 0.0
  %451 = vmatpush1.msra.mxu0 %v324
  %452 = vmatprep.subr.mxu0 0.0
  %453 = vmatpush1.msra.mxu0 %v325
  %454 = vmatprep.subr.mxu0 0.0
  %455 = vmatpush1.msra.mxu0 %v326
  %456 = vmatprep.subr.mxu0 0.0
  %457 = vmatpush1.msra.mxu0 %v327
  %458 = vmatprep.subr.mxu0 0.0
  %459 = vmatpush1.msra.mxu0 0.0
  %460 = vmatprep.subr.mxu0 0.0
  %461 = vmatpush1.msra.mxu0 0.0
  %462 = vmatprep.subr.mxu0 0.0
  %463 = vmatpush1.msra.mxu0 0.0
  %464 = vmatprep.subr.mxu0 0.0
  %465 = vmatpush1.msra.mxu0 0.0
  %466 = vmatprep.subr.mxu0 0.0
  %467 = vmatpush1.msra.mxu0 0.0
  %468 = vmatprep.subr.mxu0 0.0
  %469 = vmatpush1.msra.mxu0 0.0
  %470 = vmatprep.subr.mxu0 0.0
  %471 = vmatpush1.msra.mxu0 0.0
  %472 = vmatprep.subr.mxu0 0.0
  %473 = vmatpush1.msra.mxu0 0.0
  %474 = vmatprep.subr.mxu0 0.0
  %475 = vmatpush1.msra.mxu0 0.0
  %476 = vmatprep.subr.mxu0 0.0
  %477 = vmatpush1.msra.mxu0 0.0
  %478 = vmatprep.subr.mxu0 0.0
  %479 = vmatpush1.msra.mxu0 0.0
  %480 = vmatprep.subr.mxu0 0.0
  %481 = vmatpush1.msra.mxu0 0.0
  %482 = vmatprep.subr.mxu0 0.0
  %483 = vmatpush1.msra.mxu0 0.0
  %484 = vmatprep.subr.mxu0 0.0
  %485 = vmatpush1.msra.mxu0 0.0
  %486 = vmatprep.subr.mxu0 0.0
  %487 = vmatpush1.msra.mxu0 0.0
  %488 = vmatprep.subr.mxu0 0.0
  %489 = vmatpush1.msra.mxu0 0.0
  %490 = vmatprep.mubr.f32.mxu0 0.0
  %491 = vmatmul.mubr.f32.gmra.mrb[0].mxu0 %v408
  %v492 = vpop.f32.mrb[0].mxu0
  %v493 = vadd.f32 0.0, %v492
  %v494 = vpop.f32.mrb[0].mxu0
  %495 = vmatprep.mubr.f32.mxu0 0.0
  %496 = vmatmul.mubr.f32.gmra.mrb[0].mxu0 %v413
  %v497 = vpop.f32.mrb[0].mxu0
  %v498 = vadd.f32 0.0, %v497
  %v499 = vpop.f32.mrb[0].mxu0
  %500 = vmatprep.mubr.f32.mxu0 0.0
  %501 = vmatmul.mubr.f32.gmra.mrb[0].mxu0 %v418
  %v502 = vpop.f32.mrb[0].mxu0
  %v503 = vadd.f32 0.0, %v502
  %v504 = vpop.f32.mrb[0].mxu0
  %505 = vmatprep.mubr.f32.mxu0 0.0
  %506 = vmatmul.mubr.f32.gmra.mrb[0].mxu0 %v423
  %v507 = vpop.f32.mrb[0].mxu0
  %v508 = vadd.f32 0.0, %v507
  %v509 = vpop.f32.mrb[0].mxu0
  %510 = vdwg.mxu0
  %513 = vrot.lane.b32.xlu0 %v493, 64
  %v514 = vpop.permute.xlu0 %513
  %515 = vrot.lane.b32.xlu0 %v498, 64
  %v516 = vpop.permute.xlu0 %515
  %v519 = vmax.f32 %v493, %v514
  %v520 = vmax.f32 %v498, %v516
  %vm521 = vcmp.ge.f32.partialorder %v493, %v514
  %vm522 = vcmp.ge.f32.partialorder %v498, %v516
  %v523 = vsel %vm521, 0.0, 1.0
  %v524 = vsel %vm522, 0.0, 1.0
  %527 = vrot.lane.b32.xlu0 %v503, 64
  %v528 = vpop.permute.xlu0 %527
  %529 = vrot.lane.b32.xlu0 %v508, 64
  %v530 = vpop.permute.xlu0 %529
  %v533 = vmax.f32 %v503, %v528
  %v534 = vmax.f32 %v508, %v530
  %vm535 = vcmp.ge.f32.partialorder %v503, %v528
  %vm536 = vcmp.ge.f32.partialorder %v508, %v530
  %v537 = vsel %vm535, 0.0, 1.0
  %v538 = vsel %vm536, 0.0, 1.0
  %vm539 = vcmp.ge.f32.partialorder %v519, %v533
  %vm540 = vcmp.ge.f32.partialorder %v520, %v534
  %v541 = vmax.f32 %v519, %v533
  %v542 = vmax.f32 %v520, %v534
  %v543 = vadd.f32 %v537, 2.0
  %v544 = vadd.f32 %v538, 2.0
  %v545 = vsel %vm539, %v523, %v543
  %v546 = vsel %vm540, %v524, %v544
  %s547 = scalar_lea.vmem %s1, 192
  %v548 = vld [vmem:[%s547] sm:$0xff]
  %v549 = vld [vmem:[%s547 + $0x8] sm:$0xff]
  %v550 = vld [vmem:[%s547 + $0x10] sm:$0xff]
  %v551 = vld [vmem:[%s547 + $0x18] sm:$0xff]
  %v552 = vld [vmem:[%s547 + $0x20] sm:$0xff]
  %v553 = vld [vmem:[%s547 + $0x28] sm:$0xff]
  %v554 = vld [vmem:[%s547 + $0x30] sm:$0xff]
  %v555 = vld [vmem:[%s547 + $0x38] sm:$0xff]
  %v556 = vld [vmem:[%s547 + $0x40] sm:$0xff]
  %v557 = vld [vmem:[%s547 + $0x48] sm:$0xff]
  %v558 = vld [vmem:[%s547 + $0x50] sm:$0xff]
  %v559 = vld [vmem:[%s547 + $0x58] sm:$0xff]
  %v560 = vld [vmem:[%s547 + $0x60] sm:$0xff]
  %v561 = vld [vmem:[%s547 + $0x68] sm:$0xff]
  %v562 = vld [vmem:[%s547 + $0x70] sm:$0xff]
  %v563 = vld [vmem:[%s547 + $0x78] sm:$0xff]
  %v564 = vld [vmem:[%s547 + $0x80] sm:$0xff]
  %v565 = vld [vmem:[%s547 + $0x88] sm:$0xff]
  %v566 = vld [vmem:[%s547 + $0x90] sm:$0xff]
  %v567 = vld [vmem:[%s547 + $0x98] sm:$0xff]
  %v568 = vld [vmem:[%s547 + $0xa0] sm:$0xff]
  %v569 = vld [vmem:[%s547 + $0xa8] sm:$0xff]
  %v570 = vld [vmem:[%s547 + $0xb0] sm:$0xff]
  %v571 = vld [vmem:[%s547 + $0xb8] sm:$0xff]
  %s572 = scalar_lea.vmem %s2, 1
  %v573 = vld [vmem:[%s572] sm:$0x1]
  %vm574 = vcmp.lt.s32.totalorder %v86, 0
  %v575 = vsub.s32 0, %v86
  %v576 = vsel %vm574, %v575, %v86
  %v577 = vshrl.u32 %v576, 3
  %v578 = vand.u32 %v576, 7
  %v579 = vsub.s32 0, %v578
  %v580 = vsel %vm574, %v579, %v578
  %vm581 = vcmp.lt.s32.totalorder %v87, 0
  %v582 = vsub.s32 0, %v87
  %v583 = vsel %vm581, %v582, %v87
  %v584 = vshrl.u32 %v583, 3
  %v585 = vand.u32 %v583, 7
  %v586 = vsub.s32 0, %v585
  %v587 = vsel %vm581, %v586, %v585
  %vm588 = vcmp.ne.s32.totalorder %v580, 0
  %vm589 = vcmp.ne.s32.totalorder %v587, 0
  %vm590 = vcmp.lt.s32.totalorder %v580, 0
  %vm591 = vcmp.lt.s32.totalorder %v587, 0
  %vm592 = vmand %vm590, %vm588
  %vm593 = vmand %vm591, %vm589
  %v594 = vadd.s32 %v580, 8
  %v595 = vadd.s32 %v587, 8
  %v596 = vsel %vm592, %v594, %v580
  %v597 = vsel %vm593, %v595, %v587
  %vm598 = vcmp.eq.s32.totalorder %v596, 0
  %vm599 = vcmp.eq.s32.totalorder %v597, 0
  %v600 = vrot.slane %v541, 7
  %v601 = vrot.slane %v542, 7
  %v602 = vsel %vm146, %v600, %v601
  %v603 = vsel %vm146, %v601, %v600
  %v604 = vsel %vm598, 0.0, %v603
  %v605 = vsel %vm599, 0.0, %v602
  %vm606 = vcmp.eq.s32.totalorder %v596, 7
  %vm607 = vcmp.eq.s32.totalorder %v597, 7
  %v608 = vrot.slane %v541, 1
  %v609 = vrot.slane %v542, 1
  %v610 = vsel %vm163, %v608, %v609
  %v611 = vsel %vm163, %v609, %v608
  %v612 = vsel %vm606, 0.0, %v610
  %v613 = vsel %vm607, 0.0, %v611
  %616 = vrot.lane.b32.xlu0 %v541, 64
  %v617 = vpop.permute.xlu0 %616
  %618 = vrot.lane.b32.xlu0 %v542, 64
  %v619 = vpop.permute.xlu0 %618
  %v622 = vsel %vm188, %v604, %v617
  %v623 = vsel %vm188, %v605, %v619
  %v625 = vlaneseq
  %v626 = vshrl.u32 %v625, 7
  %v627 = vsub.s32 0, %v626
  %v628 = vrot.slane %v573, %v627
  %v631 = vsel %vm188, %v612, 0
  %v634 = vsel %vm188, %v613, 0
  %636 = vmatprep.subr.mxu0 0.0
  %637 = vmatpush1.msra.mxu0 %v548
  %638 = vmatprep.subr.mxu0 0.0
  %639 = vmatpush1.msra.mxu0 %v549
  %640 = vmatprep.subr.mxu0 0.0
  %641 = vmatpush1.msra.mxu0 %v550
  %642 = vmatprep.subr.mxu0 0.0
  %643 = vmatpush1.msra.mxu0 %v551
  %644 = vmatprep.subr.mxu0 0.0
  %645 = vmatpush1.msra.mxu0 %v552
  %646 = vmatprep.subr.mxu0 0.0
  %647 = vmatpush1.msra.mxu0 %v553
  %648 = vmatprep.subr.mxu0 0.0
  %649 = vmatpush1.msra.mxu0 %v554
  %650 = vmatprep.subr.mxu0 0.0
  %651 = vmatpush1.msra.mxu0 %v555
  %652 = vmatprep.subr.mxu0 0.0
  %653 = vmatpush1.msra.mxu0 %v556
  %654 = vmatprep.subr.mxu0 0.0
  %655 = vmatpush1.msra.mxu0 %v557
  %656 = vmatprep.subr.mxu0 0.0
  %657 = vmatpush1.msra.mxu0 %v558
  %658 = vmatprep.subr.mxu0 0.0
  %659 = vmatpush1.msra.mxu0 %v559
  %660 = vmatprep.subr.mxu0 0.0
  %661 = vmatpush1.msra.mxu0 %v560
  %662 = vmatprep.subr.mxu0 0.0
  %663 = vmatpush1.msra.mxu0 %v561
  %664 = vmatprep.subr.mxu0 0.0
  %665 = vmatpush1.msra.mxu0 %v562
  %666 = vmatprep.subr.mxu0 0.0
  %667 = vmatpush1.msra.mxu0 %v563
  %668 = vmatprep.subr.mxu0 0.0
  %669 = vmatpush1.msra.mxu0 %v564
  %670 = vmatprep.subr.mxu0 0.0
  %671 = vmatpush1.msra.mxu0 %v565
  %672 = vmatprep.subr.mxu0 0.0
  %673 = vmatpush1.msra.mxu0 %v566
  %674 = vmatprep.subr.mxu0 0.0
  %675 = vmatpush1.msra.mxu0 %v567
  %676 = vmatprep.subr.mxu0 0.0
  %677 = vmatpush1.msra.mxu0 %v568
  %678 = vmatprep.subr.mxu0 0.0
  %679 = vmatpush1.msra.mxu0 %v569
  %680 = vmatprep.subr.mxu0 0.0
  %681 = vmatpush1.msra.mxu0 %v570
  %682 = vmatprep.subr.mxu0 0.0
  %683 = vmatpush1.msra.mxu0 %v571
  %684 = vmatprep.subr.mxu0 0.0
  %685 = vmatpush1.msra.mxu0 0.0
  %686 = vmatprep.subr.mxu0 0.0
  %687 = vmatpush1.msra.mxu0 0.0
  %688 = vmatprep.subr.mxu0 0.0
  %689 = vmatpush1.msra.mxu0 0.0
  %690 = vmatprep.subr.mxu0 0.0
  %691 = vmatpush1.msra.mxu0 0.0
  %692 = vmatprep.subr.mxu0 0.0
  %693 = vmatpush1.msra.mxu0 0.0
  %694 = vmatprep.subr.mxu0 0.0
  %695 = vmatpush1.msra.mxu0 0.0
  %696 = vmatprep.subr.mxu0 0.0
  %697 = vmatpush1.msra.mxu0 0.0
  %698 = vmatprep.subr.mxu0 0.0
  %699 = vmatpush1.msra.mxu0 0.0
  %700 = vmatprep.mubr.f32.mxu0 %v631
  %701 = vmatmul.mubr.f32.gmra.mrb[0].mxu0 %v622
  %v702 = vpop.f32.mrb[0].mxu0
  %v703 = vadd.f32 %v628, %v702
  %v704 = vpop.f32.mrb[0].mxu0
  %705 = vmatprep.mubr.f32.mxu0 %v634
  %706 = vmatmul.mubr.f32.gmra.mrb[0].mxu0 %v623
  %v707 = vpop.f32.mrb[0].mxu0
  %v708 = vadd.f32 %v628, %v707
  %v709 = vpop.f32.mrb[0].mxu0
  %710 = vdwg.mxu0
  %vm711 = vcmp.ge.f32.partialorder %v703, 0.0
  %vm712 = vcmp.ge.f32.partialorder %v708, 0.0
  %v713 = vmul.f32 %v703, 0.01
  %v714 = vmul.f32 %v708, 0.01
  %v715 = vsel %vm711, %v703, %v713
  %v716 = vsel %vm712, %v708, %v714
  %s717 = scalar_lea.vmem %s3, 32
  %v718 = vld [vmem:[%s717] sm:$0xff]
  %v719 = vld [vmem:[%s717 + $0x8] sm:$0xff]
  %s720 = scalar_lea.vmem %s4, 128
  %v721 = vld [vmem:[%s720] sm:$0xff]
  %v722 = vld [vmem:[%s720 + $0x8] sm:$0xff]
  %v723 = vld [vmem:[%s720 + $0x10] sm:$0xff]
  %v724 = vld [vmem:[%s720 + $0x18] sm:$0xff]
  %v725 = vld [vmem:[%s720 + $0x20] sm:$0xff]
  %v726 = vld [vmem:[%s720 + $0x28] sm:$0xff]
  %v727 = vld [vmem:[%s720 + $0x30] sm:$0xff]
  %v728 = vld [vmem:[%s720 + $0x38] sm:$0xff]
  %v729 = vld [vmem:[%s720 + $0x40] sm:$0xff]
  %v730 = vld [vmem:[%s720 + $0x48] sm:$0xff]
  %v731 = vld [vmem:[%s720 + $0x50] sm:$0xff]
  %v732 = vld [vmem:[%s720 + $0x58] sm:$0xff]
  %v733 = vld [vmem:[%s720 + $0x60] sm:$0xff]
  %v734 = vld [vmem:[%s720 + $0x68] sm:$0xff]
  %v735 = vld [vmem:[%s720 + $0x70] sm:$0xff]
  %v736 = vld [vmem:[%s720 + $0x78] sm:$0xff]
  %vm737 = vcmask 130048
  %v739 = vsel %vm737, %v718, 0
  %v742 = vsel %vm737, %v719, 0
  %744 = vmatprep.subr.mxu0 0.0
  %745 = vmatpush1.msra.mxu0 %v715
  %746 = vmatprep.subr.mxu0 0.0
  %747 = vmatpush1.msra.mxu0 %v716
  %748 = vmatprep.subr.mxu0 0.0
  %749 = vmatpush1.msra.mxu0 0.0
  %750 = vmatprep.subr.mxu0 0.0
  %751 = vmatpush1.msra.mxu0 0.0
  %752 = vmatprep.subr.mxu0 0.0
  %753 = vmatpush1.msra.mxu0 0.0
  %754 = vmatprep.subr.mxu0 0.0
  %755 = vmatpush1.msra.mxu0 0.0
  %756 = vmatprep.subr.mxu0 0.0
  %757 = vmatpush1.msra.mxu0 0.0
  %758 = vmatprep.subr.mxu0 0.0
  %759 = vmatpush1.msra.mxu0 0.0
  %760 = vmatprep.subr.mxu0 0.0
  %761 = vmatpush1.msra.mxu0 0.0
  %762 = vmatprep.subr.mxu0 0.0
  %763 = vmatpush1.msra.mxu0 0.0
  %764 = vmatprep.subr.mxu0 0.0
  %765 = vmatpush1.msra.mxu0 0.0
  %766 = vmatprep.subr.mxu0 0.0
  %767 = vmatpush1.msra.mxu0 0.0
  %768 = vmatprep.subr.mxu0 0.0
  %769 = vmatpush1.msra.mxu0 0.0
  %770 = vmatprep.subr.mxu0 0.0
  %771 = vmatpush1.msra.mxu0 0.0
  %772 = vmatprep.subr.mxu0 0.0
  %773 = vmatpush1.msra.mxu0 0.0
  %774 = vmatprep.subr.mxu0 0.0
  %775 = vmatpush1.msra.mxu0 0.0
  %776 = vmatprep.subr.mxu0 0.0
  %777 = vmatpush1.msra.mxu0 0.0
  %778 = vmatprep.subr.mxu0 0.0
  %779 = vmatpush1.msra.mxu0 0.0
  %780 = vmatprep.subr.mxu0 0.0
  %781 = vmatpush1.msra.mxu0 0.0
  %782 = vmatprep.subr.mxu0 0.0
  %783 = vmatpush1.msra.mxu0 0.0
  %784 = vmatprep.subr.mxu0 0.0
  %785 = vmatpush1.msra.mxu0 0.0
  %786 = vmatprep.subr.mxu0 0.0
  %787 = vmatpush1.msra.mxu0 0.0
  %788 = vmatprep.subr.mxu0 0.0
  %789 = vmatpush1.msra.mxu0 0.0
  %790 = vmatprep.subr.mxu0 0.0
  %791 = vmatpush1.msra.mxu0 0.0
  %792 = vmatprep.subr.mxu0 0.0
  %793 = vmatpush1.msra.mxu0 0.0
  %794 = vmatprep.subr.mxu0 0.0
  %795 = vmatpush1.msra.mxu0 0.0
  %796 = vmatprep.subr.mxu0 0.0
  %797 = vmatpush1.msra.mxu0 0.0
  %798 = vmatprep.subr.mxu0 0.0
  %799 = vmatpush1.msra.mxu0 0.0
  %800 = vmatprep.subr.mxu0 0.0
  %801 = vmatpush1.msra.mxu0 0.0
  %802 = vmatprep.subr.mxu0 0.0
  %803 = vmatpush1.msra.mxu0 0.0
  %804 = vmatprep.subr.mxu0 0.0
  %805 = vmatpush1.msra.mxu0 0.0
  %806 = vmatprep.subr.mxu0 0.0
  %807 = vmatpush1.msra.mxu0 0.0
  %808 = vmatprep.mubr.f32.mxu0 0.0
  %809 = vmatmul.mubr.f32.gmra.mrb[0].mxu0 %v739
  %v810 = vpop.f32.mrb[0].mxu0
  %v811 = vadd.f32 0.0, %v810
  %v812 = vpop.f32.mrb[0].mxu0
  %813 = vmatprep.mubr.f32.mxu0 0.0
  %814 = vmatmul.mubr.f32.gmra.mrb[0].mxu0 %v742
  %v815 = vpop.f32.mrb[0].mxu0
  %v816 = vadd.f32 0.0, %v815
  %v817 = vpop.f32.mrb[0].mxu0
  %818 = vdwg.mxu0
  %819 = vmatprep.subr.mxu0 0.0
  %820 = vmatpush1.msra.mxu0 %v721
  %821 = vmatprep.subr.mxu0 0.0
  %822 = vmatpush1.msra.mxu0 %v722
  %823 = vmatprep.subr.mxu0 0.0
  %824 = vmatpush1.msra.mxu0 %v723
  %825 = vmatprep.subr.mxu0 0.0
  %826 = vmatpush1.msra.mxu0 %v724
  %827 = vmatprep.subr.mxu0 0.0
  %828 = vmatpush1.msra.mxu0 %v725
  %829 = vmatprep.subr.mxu0 0.0
  %830 = vmatpush1.msra.mxu0 %v726
  %831 = vmatprep.subr.mxu0 0.0
  %832 = vmatpush1.msra.mxu0 %v727
  %833 = vmatprep.subr.mxu0 0.0
  %834 = vmatpush1.msra.mxu0 %v728
  %835 = vmatprep.subr.mxu0 0.0
  %836 = vmatpush1.msra.mxu0 %v729
  %837 = vmatprep.subr.mxu0 0.0
  %838 = vmatpush1.msra.mxu0 %v730
  %839 = vmatprep.subr.mxu0 0.0
  %840 = vmatpush1.msra.mxu0 %v731
  %841 = vmatprep.subr.mxu0 0.0
  %842 = vmatpush1.msra.mxu0 %v732
  %843 = vmatprep.subr.mxu0 0.0
  %844 = vmatpush1.msra.mxu0 %v733
  %845 = vmatprep.subr.mxu0 0.0
  %846 = vmatpush1.msra.mxu0 %v734
  %847 = vmatprep.subr.mxu0 0.0
  %848 = vmatpush1.msra.mxu0 %v735
  %849 = vmatprep.subr.mxu0 0.0
  %850 = vmatpush1.msra.mxu0 %v736
  %851 = vmatprep.subr.mxu0 0.0
  %852 = vmatpush1.msra.mxu0 0.0
  %853 = vmatprep.subr.mxu0 0.0
  %854 = vmatpush1.msra.mxu0 0.0
  %855 = vmatprep.subr.mxu0 0.0
  %856 = vmatpush1.msra.mxu0 0.0
  %857 = vmatprep.subr.mxu0 0.0
  %858 = vmatpush1.msra.mxu0 0.0
  %859 = vmatprep.subr.mxu0 0.0
  %860 = vmatpush1.msra.mxu0 0.0
  %861 = vmatprep.subr.mxu0 0.0
  %862 = vmatpush1.msra.mxu0 0.0
  %863 = vmatprep.subr.mxu0 0.0
  %864 = vmatpush1.msra.mxu0 0.0
  %865 = vmatprep.subr.mxu0 0.0
  %866 = vmatpush1.msra.mxu0 0.0
  %867 = vmatprep.subr.mxu0 0.0
  %868 = vmatpush1.msra.mxu0 0.0
  %869 = vmatprep.subr.mxu0 0.0
  %870 = vmatpush1.msra.mxu0 0.0
  %871 = vmatprep.subr.mxu0 0.0
  %872 = vmatpush1.msra.mxu0 0.0
  %873 = vmatprep.subr.mxu0 0.0
  %874 = vmatpush1.msra.mxu0 0.0
  %875 = vmatprep.subr.mxu0 0.0
  %876 = vmatpush1.msra.mxu0 0.0
  %877 = vmatprep.subr.mxu0 0.0
  %878 = vmatpush1.msra.mxu0 0.0
  %879 = vmatprep.subr.mxu0 0.0
  %880 = vmatpush1.msra.mxu0 0.0
  %881 = vmatprep.subr.mxu0 0.0
  %882 = vmatpush1.msra.mxu0 0.0
  %883 = vmatprep.mubr.f32.mxu0 0.0
  %884 = vmatmul.mubr.f32.gmra.mrb[0].mxu0 %v811
  %v885 = vpop.f32.mrb[0].mxu0
  %v886 = vadd.f32 0.0, %v885
  %v887 = vpop.f32.mrb[0].mxu0
  %888 = vmatprep.mubr.f32.mxu0 0.0
  %889 = vmatmul.mubr.f32.gmra.mrb[0].mxu0 %v816
  %v890 = vpop.f32.mrb[0].mxu0
  %v891 = vadd.f32 0.0, %v890
  %v892 = vpop.f32.mrb[0].mxu0
  %893 = vdwg.mxu0
  %895 = vrot.lane.b32.xlu0 %v886, 64
  %v896 = vpop.permute.xlu0 %895
  %v898 = vmax.f32 %v886, %v896
  %vm899 = vcmp.ge.f32.partialorder %v886, %v896
  %v900 = vsel %vm899, 0.0, 1.0
  %902 = vrot.lane.b32.xlu0 %v891, 64
  %v903 = vpop.permute.xlu0 %902
  %v905 = vmax.f32 %v891, %v903
  %vm906 = vcmp.ge.f32.partialorder %v891, %v903
  %v907 = vsel %vm906, 0.0, 1.0
  %vm908 = vcmp.ge.f32.partialorder %v898, %v905
  %v909 = vmax.f32 %v898, %v905
  %v910 = vadd.f32 %v907, 2.0
  %v911 = vsel %vm908, %v900, %v910
  %s912 = scalar_lea.vmem %s1, 384
  %v913 = vld [vmem:[%s912] sm:$0xff]
  %v914 = vld [vmem:[%s912 + $0x8] sm:$0xff]
  %v915 = vld [vmem:[%s912 + $0x10] sm:$0xff]
  %v916 = vld [vmem:[%s912 + $0x18] sm:$0xff]
  %v917 = vld [vmem:[%s912 + $0x20] sm:$0xff]
  %v918 = vld [vmem:[%s912 + $0x28] sm:$0xff]
  %v919 = vld [vmem:[%s912 + $0x30] sm:$0xff]
  %v920 = vld [vmem:[%s912 + $0x38] sm:$0xff]
  %v921 = vld [vmem:[%s912 + $0x40] sm:$0xff]
  %v922 = vld [vmem:[%s912 + $0x48] sm:$0xff]
  %v923 = vld [vmem:[%s912 + $0x50] sm:$0xff]
  %v924 = vld [vmem:[%s912 + $0x58] sm:$0xff]
  %v925 = vld [vmem:[%s912 + $0x60] sm:$0xff]
  %v926 = vld [vmem:[%s912 + $0x68] sm:$0xff]
  %v927 = vld [vmem:[%s912 + $0x70] sm:$0xff]
  %v928 = vld [vmem:[%s912 + $0x78] sm:$0xff]
  %v929 = vld [vmem:[%s912 + $0x80] sm:$0xff]
  %v930 = vld [vmem:[%s912 + $0x88] sm:$0xff]
  %v931 = vld [vmem:[%s912 + $0x90] sm:$0xff]
  %v932 = vld [vmem:[%s912 + $0x98] sm:$0xff]
  %v933 = vld [vmem:[%s912 + $0xa0] sm:$0xff]
  %v934 = vld [vmem:[%s912 + $0xa8] sm:$0xff]
  %v935 = vld [vmem:[%s912 + $0xb0] sm:$0xff]
  %v936 = vld [vmem:[%s912 + $0xb8] sm:$0xff]
  %s937 = scalar_lea.vmem %s2, 2
  %v938 = vld [vmem:[%s937] sm:$0x1]
  %vm939 = vcmp.lt.s32.totalorder %v86, 0
  %v940 = vsub.s32 0, %v86
  %v941 = vsel %vm939, %v940, %v86
  %v942 = vshrl.u32 %v941, 2
  %v943 = vand.u32 %v941, 3
  %v944 = vsub.s32 0, %v943
  %v945 = vsel %vm939, %v944, %v943
  %vm946 = vcmp.ne.s32.totalorder %v945, 0
  %vm947 = vcmp.lt.s32.totalorder %v945, 0
  %vm948 = vmand %vm947, %vm946
  %v949 = vadd.s32 %v945, 4
  %v950 = vsel %vm948, %v949, %v945
  %vm951 = vcmp.eq.s32.totalorder %v950, 0
  %v952 = vrot.slane %v909, 7
  %v953 = vsel %vm951, 0.0, %v952
  %vm954 = vcmp.eq.s32.totalorder %v950, 3
  %v955 = vrot.slane %v909, 1
  %v956 = vsel %vm954, 0.0, %v955
  %958 = vrot.lane.b32.xlu0 %v909, 64
  %v959 = vpop.permute.xlu0 %958
  %v961 = vsel %vm188, %v953, %v959
  %v963 = vlaneseq
  %v964 = vshrl.u32 %v963, 7
  %v965 = vsub.s32 0, %v964
  %v966 = vrot.slane %v938, %v965
  %v969 = vsel %vm188, %v956, 0
  %971 = vmatprep.subr.mxu0 0.0
  %972 = vmatpush1.msra.mxu0 %v913
  %973 = vmatprep.subr.mxu0 0.0
  %974 = vmatpush1.msra.mxu0 %v914
  %975 = vmatprep.subr.mxu0 0.0
  %976 = vmatpush1.msra.mxu0 %v915
  %977 = vmatprep.subr.mxu0 0.0
  %978 = vmatpush1.msra.mxu0 %v916
  %979 = vmatprep.subr.mxu0 0.0
  %980 = vmatpush1.msra.mxu0 %v917
  %981 = vmatprep.subr.mxu0 0.0
  %982 = vmatpush1.msra.mxu0 %v918
  %983 = vmatprep.subr.mxu0 0.0
  %984 = vmatpush1.msra.mxu0 %v919
  %985 = vmatprep.subr.mxu0 0.0
  %986 = vmatpush1.msra.mxu0 %v920
  %987 = vmatprep.subr.mxu0 0.0
  %988 = vmatpush1.msra.mxu0 %v921
  %989 = vmatprep.subr.mxu0 0.0
  %990 = vmatpush1.msra.mxu0 %v922
  %991 = vmatprep.subr.mxu0 0.0
  %992 = vmatpush1.msra.mxu0 %v923
  %993 = vmatprep.subr.mxu0 0.0
  %994 = vmatpush1.msra.mxu0 %v924
  %995 = vmatprep.subr.mxu0 0.0
  %996 = vmatpush1.msra.mxu0 %v925
  %997 = vmatprep.subr.mxu0 0.0
  %998 = vmatpush1.msra.mxu0 %v926
  %999 = vmatprep.subr.mxu0 0.0
  %1000 = vmatpush1.msra.mxu0 %v927
  %1001 = vmatprep.subr.mxu0 0.0
  %1002 = vmatpush1.msra.mxu0 %v928
  %1003 = vmatprep.subr.mxu0 0.0
  %1004 = vmatpush1.msra.mxu0 %v929
  %1005 = vmatprep.subr.mxu0 0.0
  %1006 = vmatpush1.msra.mxu0 %v930
  %1007 = vmatprep.subr.mxu0 0.0
  %1008 = vmatpush1.msra.mxu0 %v931
  %1009 = vmatprep.subr.mxu0 0.0
  %1010 = vmatpush1.msra.mxu0 %v932
  %1011 = vmatprep.subr.mxu0 0.0
  %1012 = vmatpush1.msra.mxu0 %v933
  %1013 = vmatprep.subr.mxu0 0.0
  %1014 = vmatpush1.msra.mxu0 %v934
  %1015 = vmatprep.subr.mxu0 0.0
  %1016 = vmatpush1.msra.mxu0 %v935
  %1017 = vmatprep.subr.mxu0 0.0
  %1018 = vmatpush1.msra.mxu0 %v936
  %1019 = vmatprep.subr.mxu0 0.0
  %1020 = vmatpush1.msra.mxu0 0.0
  %1021 = vmatprep.subr.mxu0 0.0
  %1022 = vmatpush1.msra.mxu0 0.0
  %1023 = vmatprep.subr.mxu0 0.0
  %1024 = vmatpush1.msra.mxu0 0.0
  %1025 = vmatprep.subr.mxu0 0.0
  %1026 = vmatpush1.msra.mxu0 0.0
  %1027 = vmatprep.subr.mxu0 0.0
  %1028 = vmatpush1.msra.mxu0 0.0
  %1029 = vmatprep.subr.mxu0 0.0
  %1030 = vmatpush1.msra.mxu0 0.0
  %1031 = vmatprep.subr.mxu0 0.0
  %1032 = vmatpush1.msra.mxu0 0.0
  %1033 = vmatprep.subr.mxu0 0.0
  %1034 = vmatpush1.msra.mxu0 0.0
  %1035 = vmatprep.mubr.f32.mxu0 %v969
  %1036 = vmatmul.mubr.f32.gmra.mrb[0].mxu0 %v961
  %v1037 = vpop.f32.mrb[0].mxu0
  %v1038 = vadd.f32 %v966, %v1037
  %v1039 = vpop.f32.mrb[0].mxu0
  %1040 = vdwg.mxu0
  %vm1041 = vcmp.ge.f32.partialorder %v1038, 0.0
  %v1042 = vmul.f32 %v1038, 0.01
  %v1043 = vsel %vm1041, %v1038, %v1042
  %s1044 = scalar_lea.vmem %s3, 64
  %v1045 = vld [vmem:[%s1044] sm:$0xff]
  %s1046 = scalar_lea.vmem %s4, 256
  %v1047 = vld [vmem:[%s1046] sm:$0xff]
  %v1048 = vld [vmem:[%s1046 + $0x8] sm:$0xff]
  %v1049 = vld [vmem:[%s1046 + $0x10] sm:$0xff]
  %v1050 = vld [vmem:[%s1046 + $0x18] sm:$0xff]
  %v1051 = vld [vmem:[%s1046 + $0x20] sm:$0xff]
  %v1052 = vld [vmem:[%s1046 + $0x28] sm:$0xff]
  %v1053 = vld [vmem:[%s1046 + $0x30] sm:$0xff]
  %v1054 = vld [vmem:[%s1046 + $0x38] sm:$0xff]
  %v1055 = vld [vmem:[%s1046 + $0x40] sm:$0xff]
  %v1056 = vld [vmem:[%s1046 + $0x48] sm:$0xff]
  %v1057 = vld [vmem:[%s1046 + $0x50] sm:$0xff]
  %v1058 = vld [vmem:[%s1046 + $0x58] sm:$0xff]
  %v1059 = vld [vmem:[%s1046 + $0x60] sm:$0xff]
  %v1060 = vld [vmem:[%s1046 + $0x68] sm:$0xff]
  %v1061 = vld [vmem:[%s1046 + $0x70] sm:$0xff]
  %v1062 = vld [vmem:[%s1046 + $0x78] sm:$0xff]
  %vm1063 = vcmask 64512
  %v1065 = vsel %vm1063, %v1045, 0
  %1067 = vmatprep.subr.mxu0 0.0
  %1068 = vmatpush1.msra.mxu0 %v1043
  %1069 = vmatprep.subr.mxu0 0.0
  %1070 = vmatpush1.msra.mxu0 0.0
  %1071 = vmatprep.subr.mxu0 0.0
  %1072 = vmatpush1.msra.mxu0 0.0
  %1073 = vmatprep.subr.mxu0 0.0
  %1074 = vmatpush1.msra.mxu0 0.0
  %1075 = vmatprep.subr.mxu0 0.0
  %1076 = vmatpush1.msra.mxu0 0.0
  %1077 = vmatprep.subr.mxu0 0.0
  %1078 = vmatpush1.msra.mxu0 0.0
  %1079 = vmatprep.subr.mxu0 0.0
  %1080 = vmatpush1.msra.mxu0 0.0
  %1081 = vmatprep.subr.mxu0 0.0
  %1082 = vmatpush1.msra.mxu0 0.0
  %1083 = vmatprep.subr.mxu0 0.0
  %1084 = vmatpush1.msra.mxu0 0.0
  %1085 = vmatprep.subr.mxu0 0.0
  %1086 = vmatpush1.msra.mxu0 0.0
  %1087 = vmatprep.subr.mxu0 0.0
  %1088 = vmatpush1.msra.mxu0 0.0
  %1089 = vmatprep.subr.mxu0 0.0
  %1090 = vmatpush1.msra.mxu0 0.0
  %1091 = vmatprep.subr.mxu0 0.0
  %1092 = vmatpush1.msra.mxu0 0.0
  %1093 = vmatprep.subr.mxu0 0.0
  %1094 = vmatpush1.msra.mxu0 0.0
  %1095 = vmatprep.subr.mxu0 0.0
  %1096 = vmatpush1.msra.mxu0 0.0
  %1097 = vmatprep.subr.mxu0 0.0
  %1098 = vmatpush1.msra.mxu0 0.0
  %1099 = vmatprep.subr.mxu0 0.0
  %1100 = vmatpush1.msra.mxu0 0.0
  %1101 = vmatprep.subr.mxu0 0.0
  %1102 = vmatpush1.msra.mxu0 0.0
  %1103 = vmatprep.subr.mxu0 0.0
  %1104 = vmatpush1.msra.mxu0 0.0
  %1105 = vmatprep.subr.mxu0 0.0
  %1106 = vmatpush1.msra.mxu0 0.0
  %1107 = vmatprep.subr.mxu0 0.0
  %1108 = vmatpush1.msra.mxu0 0.0
  %1109 = vmatprep.subr.mxu0 0.0
  %1110 = vmatpush1.msra.mxu0 0.0
  %1111 = vmatprep.subr.mxu0 0.0
  %1112 = vmatpush1.msra.mxu0 0.0
  %1113 = vmatprep.subr.mxu0 0.0
  %1114 = vmatpush1.msra.mxu0 0.0
  %1115 = vmatprep.subr.mxu0 0.0
  %1116 = vmatpush1.msra.mxu0 0.0
  %1117 = vmatprep.subr.mxu0 0.0
  %1118 = vmatpush1.msra.mxu0 0.0
  %1119 = vmatprep.subr.mxu0 0.0
  %1120 = vmatpush1.msra.mxu0 0.0
  %1121 = vmatprep.subr.mxu0 0.0
  %1122 = vmatpush1.msra.mxu0 0.0
  %1123 = vmatprep.subr.mxu0 0.0
  %1124 = vmatpush1.msra.mxu0 0.0
  %1125 = vmatprep.subr.mxu0 0.0
  %1126 = vmatpush1.msra.mxu0 0.0
  %1127 = vmatprep.subr.mxu0 0.0
  %1128 = vmatpush1.msra.mxu0 0.0
  %1129 = vmatprep.subr.mxu0 0.0
  %1130 = vmatpush1.msra.mxu0 0.0
  %1131 = vmatprep.mubr.f32.mxu0 0.0
  %1132 = vmatmul.mubr.f32.gmra.mrb[0].mxu0 %v1065
  %v1133 = vpop.f32.mrb[0].mxu0
  %v1134 = vadd.f32 0.0, %v1133
  %v1135 = vpop.f32.mrb[0].mxu0
  %1136 = vdwg.mxu0
  %1137 = vmatprep.subr.mxu0 0.0
  %1138 = vmatpush1.msra.mxu0 %v1047
  %1139 = vmatprep.subr.mxu0 0.0
  %1140 = vmatpush1.msra.mxu0 %v1048
  %1141 = vmatprep.subr.mxu0 0.0
  %1142 = vmatpush1.msra.mxu0 %v1049
  %1143 = vmatprep.subr.mxu0 0.0
  %1144 = vmatpush1.msra.mxu0 %v1050
  %1145 = vmatprep.subr.mxu0 0.0
  %1146 = vmatpush1.msra.mxu0 %v1051
  %1147 = vmatprep.subr.mxu0 0.0
  %1148 = vmatpush1.msra.mxu0 %v1052
  %1149 = vmatprep.subr.mxu0 0.0
  %1150 = vmatpush1.msra.mxu0 %v1053
  %1151 = vmatprep.subr.mxu0 0.0
  %1152 = vmatpush1.msra.mxu0 %v1054
  %1153 = vmatprep.subr.mxu0 0.0
  %1154 = vmatpush1.msra.mxu0 %v1055
  %1155 = vmatprep.subr.mxu0 0.0
  %1156 = vmatpush1.msra.mxu0 %v1056
  %1157 = vmatprep.subr.mxu0 0.0
  %1158 = vmatpush1.msra.mxu0 %v1057
  %1159 = vmatprep.subr.mxu0 0.0
  %1160 = vmatpush1.msra.mxu0 %v1058
  %1161 = vmatprep.subr.mxu0 0.0
  %1162 = vmatpush1.msra.mxu0 %v1059
  %1163 = vmatprep.subr.mxu0 0.0
  %1164 = vmatpush1.msra.mxu0 %v1060
  %1165 = vmatprep.subr.mxu0 0.0
  %1166 = vmatpush1.msra.mxu0 %v1061
  %1167 = vmatprep.subr.mxu0 0.0
  %1168 = vmatpush1.msra.mxu0 %v1062
  %1169 = vmatprep.subr.mxu0 0.0
  %1170 = vmatpush1.msra.mxu0 0.0
  %1171 = vmatprep.subr.mxu0 0.0
  %1172 = vmatpush1.msra.mxu0 0.0
  %1173 = vmatprep.subr.mxu0 0.0
  %1174 = vmatpush1.msra.mxu0 0.0
  %1175 = vmatprep.subr.mxu0 0.0
  %1176 = vmatpush1.msra.mxu0 0.0
  %1177 = vmatprep.subr.mxu0 0.0
  %1178 = vmatpush1.msra.mxu0 0.0
  %1179 = vmatprep.subr.mxu0 0.0
  %1180 = vmatpush1.msra.mxu0 0.0
  %1181 = vmatprep.subr.mxu0 0.0
  %1182 = vmatpush1.msra.mxu0 0.0
  %1183 = vmatprep.subr.mxu0 0.0
  %1184 = vmatpush1.msra.mxu0 0.0
  %1185 = vmatprep.subr.mxu0 0.0
  %1186 = vmatpush1.msra.mxu0 0.0
  %1187 = vmatprep.subr.mxu0 0.0
  %1188 = vmatpush1.msra.mxu0 0.0
  %1189 = vmatprep.subr.mxu0 0.0
  %1190 = vmatpush1.msra.mxu0 0.0
  %1191 = vmatprep.subr.mxu0 0.0
  %1192 = vmatpush1.msra.mxu0 0.0
  %1193 = vmatprep.subr.mxu0 0.0
  %1194 = vmatpush1.msra.mxu0 0.0
  %1195 = vmatprep.subr.mxu0 0.0
  %1196 = vmatpush1.msra.mxu0 0.0
  %1197 = vmatprep.subr.mxu0 0.0
  %1198 = vmatpush1.msra.mxu0 0.0
  %1199 = vmatprep.subr.mxu0 0.0
  %1200 = vmatpush1.msra.mxu0 0.0
  %1201 = vmatprep.mubr.f32.mxu0 0.0
  %1202 = vmatmul.mubr.f32.gmra.mrb[0].mxu0 %v1134
  %v1203 = vpop.f32.mrb[0].mxu0
  %v1204 = vadd.f32 0.0, %v1203
  %v1205 = vpop.f32.mrb[0].mxu0
  %1206 = vdwg.mxu0
  %1208 = vrot.lane.b32.xlu0 %v1204, 64
  %v1209 = vpop.permute.xlu0 %1208
  %v1211 = vmax.f32 %v1204, %v1209
  %vm1212 = vcmp.ge.f32.partialorder %v1204, %v1209
  %v1213 = vsel %vm1212, 0.0, 1.0
  %v1215 = vrot.slane %v1211, 4
  %vm1217 = vcmp.ge.f32.partialorder %v1211, %v1215
  %v1218 = vmax.f32 %v1211, %v1215
  %v1219 = vadd.f32 %v1213, 2.0
  %v1221 = vrot.slane %v1219, 4
  %v1223 = vsel %vm1217, %v1213, %v1221
  %v1224 = vld [vmem:[%s9] sm:$0xff]
  %v1225 = vld [vmem:[%s9 + $0x8] sm:$0xff]
  %v1226 = vld [vmem:[%s9 + $0x10] sm:$0xff]
  %v1227 = vld [vmem:[%s9 + $0x18] sm:$0xff]
  %v1228 = vld [vmem:[%s9 + $0x20] sm:$0xff]
  %v1229 = vld [vmem:[%s9 + $0x28] sm:$0xff]
  %v1230 = vld [vmem:[%s9 + $0x30] sm:$0xff]
  %v1231 = vld [vmem:[%s9 + $0x38] sm:$0xff]
  %v1232 = vld [vmem:[%s9 + $0x40] sm:$0xff]
  %v1233 = vld [vmem:[%s9 + $0x48] sm:$0xff]
  %v1234 = vld [vmem:[%s9 + $0x50] sm:$0xff]
  %v1235 = vld [vmem:[%s9 + $0x58] sm:$0xff]
  %v1236 = vld [vmem:[%s9 + $0x60] sm:$0xff]
  %v1237 = vld [vmem:[%s9 + $0x68] sm:$0xff]
  %v1238 = vld [vmem:[%s9 + $0x70] sm:$0xff]
  %v1239 = vld [vmem:[%s9 + $0x78] sm:$0xff]
  %v1240 = vld [vmem:[%s10] sm:$0xff]
  %v1241 = vld [vmem:[%s10 + $0x8] sm:$0xff]
  %v1242 = vld [vmem:[%s10 + $0x10] sm:$0xff]
  %v1243 = vld [vmem:[%s10 + $0x18] sm:$0xff]
  %v1244 = vld [vmem:[%s10 + $0x20] sm:$0xff]
  %v1245 = vld [vmem:[%s10 + $0x28] sm:$0xff]
  %v1246 = vld [vmem:[%s10 + $0x30] sm:$0xff]
  %v1247 = vld [vmem:[%s10 + $0x38] sm:$0xff]
  %v1248 = vld [vmem:[%s10 + $0x40] sm:$0xff]
  %v1249 = vld [vmem:[%s10 + $0x48] sm:$0xff]
  %v1250 = vld [vmem:[%s10 + $0x50] sm:$0xff]
  %v1251 = vld [vmem:[%s10 + $0x58] sm:$0xff]
  %v1252 = vld [vmem:[%s10 + $0x60] sm:$0xff]
  %v1253 = vld [vmem:[%s10 + $0x68] sm:$0xff]
  %v1254 = vld [vmem:[%s10 + $0x70] sm:$0xff]
  %v1255 = vld [vmem:[%s10 + $0x78] sm:$0xff]
  %v1256 = vld [vmem:[%s11] sm:$0xff]
  %v1257 = vld [vmem:[%s11 + $0x8] sm:$0xff]
  %v1258 = vld [vmem:[%s11 + $0x10] sm:$0xff]
  %v1259 = vld [vmem:[%s11 + $0x18] sm:$0xff]
  %v1260 = vld [vmem:[%s11 + $0x20] sm:$0xff]
  %v1261 = vld [vmem:[%s11 + $0x28] sm:$0xff]
  %v1262 = vld [vmem:[%s11 + $0x30] sm:$0xff]
  %v1263 = vld [vmem:[%s11 + $0x38] sm:$0xff]
  %v1264 = vld [vmem:[%s12] sm:$0xff]
  %v1265 = vld [vmem:[%s12 + $0x8] sm:$0xff]
  %v1266 = vld [vmem:[%s12 + $0x10] sm:$0xff]
  %v1267 = vld [vmem:[%s12 + $0x18] sm:$0xff]
  %v1268 = vld [vmem:[%s12 + $0x20] sm:$0xff]
  %v1269 = vld [vmem:[%s12 + $0x28] sm:$0xff]
  %v1270 = vld [vmem:[%s12 + $0x30] sm:$0xff]
  %v1271 = vld [vmem:[%s12 + $0x38] sm:$0xff]
  %v1272 = vld [vmem:[%s13] sm:$0xff]
  %v1273 = vld [vmem:[%s13 + $0x8] sm:$0xff]
  %v1274 = vld [vmem:[%s13 + $0x10] sm:$0xff]
  %v1275 = vld [vmem:[%s13 + $0x18] sm:$0xff]
  %v1276 = vld [vmem:[%s13 + $0x20] sm:$0xff]
  %v1277 = vld [vmem:[%s13 + $0x28] sm:$0xff]
  %v1278 = vld [vmem:[%s13 + $0x30] sm:$0xff]
  %v1279 = vld [vmem:[%s13 + $0x38] sm:$0xff]
  %v1280 = vld [vmem:[%s13 + $0x40] sm:$0xff]
  %v1281 = vld [vmem:[%s13 + $0x48] sm:$0xff]
  %v1282 = vld [vmem:[%s13 + $0x50] sm:$0xff]
  %v1283 = vld [vmem:[%s13 + $0x58] sm:$0xff]
  %v1284 = vld [vmem:[%s13 + $0x60] sm:$0xff]
  %v1285 = vld [vmem:[%s13 + $0x68] sm:$0xff]
  %v1286 = vld [vmem:[%s13 + $0x70] sm:$0xff]
  %v1287 = vld [vmem:[%s13 + $0x78] sm:$0xff]
  %v1288 = vld [vmem:[%s14] sm:$0xff]
  %v1289 = vld [vmem:[%s14 + $0x8] sm:$0xff]
  %v1290 = vld [vmem:[%s14 + $0x10] sm:$0xff]
  %v1291 = vld [vmem:[%s14 + $0x18] sm:$0xff]
  %v1292 = vld [vmem:[%s14 + $0x20] sm:$0xff]
  %v1293 = vld [vmem:[%s14 + $0x28] sm:$0xff]
  %v1294 = vld [vmem:[%s14 + $0x30] sm:$0xff]
  %v1295 = vld [vmem:[%s14 + $0x38] sm:$0xff]
  %v1296 = vld [vmem:[%s14 + $0x40] sm:$0xff]
  %v1297 = vld [vmem:[%s14 + $0x48] sm:$0xff]
  %v1298 = vld [vmem:[%s14 + $0x50] sm:$0xff]
  %v1299 = vld [vmem:[%s14 + $0x58] sm:$0xff]
  %v1300 = vld [vmem:[%s14 + $0x60] sm:$0xff]
  %v1301 = vld [vmem:[%s14 + $0x68] sm:$0xff]
  %v1302 = vld [vmem:[%s14 + $0x70] sm:$0xff]
  %v1303 = vld [vmem:[%s14 + $0x78] sm:$0xff]
  %v1304 = vld [vmem:[%s15] sm:$0xff]
  %v1305 = vld [vmem:[%s16] sm:$0x1]
  %v1307 = vrot.slane %v1218, 4
  %1308 = vrot.lane.b32.xlu0 %v1307, 96
  %v1309 = vpop.permute.xlu0 %1308
  %vm1311 = vcmask 1043456
  %v1312 = vsel %vm1311, %v1218, %v1309
  %1314 = vset.pattern.permute.xlu0 0
  %1315 = vperm.xlu0 %1314, %v1240
  %v1316 = vpop.permute.xlu0 %1315
  %1319 = vset.pattern.permute.xlu0 0
  %1320 = vperm.xlu0 %1319, %v1241
  %v1321 = vpop.permute.xlu0 %1320
  %1324 = vset.pattern.permute.xlu0 0
  %1325 = vperm.xlu0 %1324, %v1242
  %v1326 = vpop.permute.xlu0 %1325
  %1329 = vset.pattern.permute.xlu0 0
  %1330 = vperm.xlu0 %1329, %v1243
  %v1331 = vpop.permute.xlu0 %1330
  %1334 = vset.pattern.permute.xlu0 0
  %1335 = vperm.xlu0 %1334, %v1244
  %v1336 = vpop.permute.xlu0 %1335
  %1339 = vset.pattern.permute.xlu0 0
  %1340 = vperm.xlu0 %1339, %v1245
  %v1341 = vpop.permute.xlu0 %1340
  %1344 = vset.pattern.permute.xlu0 0
  %1345 = vperm.xlu0 %1344, %v1246
  %v1346 = vpop.permute.xlu0 %1345
  %1349 = vset.pattern.permute.xlu0 0
  %1350 = vperm.xlu0 %1349, %v1247
  %v1351 = vpop.permute.xlu0 %1350
  %1354 = vset.pattern.permute.xlu0 0
  %1355 = vperm.xlu0 %1354, %v1248
  %v1356 = vpop.permute.xlu0 %1355
  %1359 = vset.pattern.permute.xlu0 0
  %1360 = vperm.xlu0 %1359, %v1249
  %v1361 = vpop.permute.xlu0 %1360
  %1364 = vset.pattern.permute.xlu0 0
  %1365 = vperm.xlu0 %1364, %v1250
  %v1366 = vpop.permute.xlu0 %1365
  %1369 = vset.pattern.permute.xlu0 0
  %1370 = vperm.xlu0 %1369, %v1251
  %v1371 = vpop.permute.xlu0 %1370
  %1374 = vset.pattern.permute.xlu0 0
  %1375 = vperm.xlu0 %1374, %v1252
  %v1376 = vpop.permute.xlu0 %1375
  %1379 = vset.pattern.permute.xlu0 0
  %1380 = vperm.xlu0 %1379, %v1253
  %v1381 = vpop.permute.xlu0 %1380
  %1384 = vset.pattern.permute.xlu0 0
  %1385 = vperm.xlu0 %1384, %v1254
  %v1386 = vpop.permute.xlu0 %1385
  %1389 = vset.pattern.permute.xlu0 0
  %1390 = vperm.xlu0 %1389, %v1255
  %v1391 = vpop.permute.xlu0 %1390
  %v1394 = vsel %vm1063, %v1224, 0
  %v1397 = vsel %vm1063, %v1225, 0
  %v1400 = vsel %vm1063, %v1226, 0
  %v1403 = vsel %vm1063, %v1227, 0
  %v1406 = vsel %vm1063, %v1228, 0
  %v1409 = vsel %vm1063, %v1229, 0
  %v1412 = vsel %vm1063, %v1230, 0
  %v1415 = vsel %vm1063, %v1231, 0
  %v1418 = vsel %vm1063, %v1232, 0
  %v1421 = vsel %vm1063, %v1233, 0
  %v1424 = vsel %vm1063, %v1234, 0
  %v1427 = vsel %vm1063, %v1235, 0
  %v1430 = vsel %vm1063, %v1236, 0
  %v1433 = vsel %vm1063, %v1237, 0
  %v1436 = vsel %vm1063, %v1238, 0
  %v1439 = vsel %vm1063, %v1239, 0
  %1441 = vmatprep.subr.mxu0 0.0
  %1442 = vmatpush1.msra.mxu0 %v1312
  %1443 = vmatprep.subr.mxu0 0.0
  %1444 = vmatpush1.msra.mxu0 0.0
  %1445 = vmatprep.subr.mxu0 0.0
  %1446 = vmatpush1.msra.mxu0 0.0
  %1447 = vmatprep.subr.mxu0 0.0
  %1448 = vmatpush1.msra.mxu0 0.0
  %1449 = vmatprep.subr.mxu0 0.0
  %1450 = vmatpush1.msra.mxu0 0.0
  %1451 = vmatprep.subr.mxu0 0.0
  %1452 = vmatpush1.msra.mxu0 0.0
  %1453 = vmatprep.subr.mxu0 0.0
  %1454 = vmatpush1.msra.mxu0 0.0
  %1455 = vmatprep.subr.mxu0 0.0
  %1456 = vmatpush1.msra.mxu0 0.0
  %1457 = vmatprep.subr.mxu0 0.0
  %1458 = vmatpush1.msra.mxu0 0.0
  %1459 = vmatprep.subr.mxu0 0.0
  %1460 = vmatpush1.msra.mxu0 0.0
  %1461 = vmatprep.subr.mxu0 0.0
  %1462 = vmatpush1.msra.mxu0 0.0
  %1463 = vmatprep.subr.mxu0 0.0
  %1464 = vmatpush1.msra.mxu0 0.0
  %1465 = vmatprep.subr.mxu0 0.0
  %1466 = vmatpush1.msra.mxu0 0.0
  %1467 = vmatprep.subr.mxu0 0.0
  %1468 = vmatpush1.msra.mxu0 0.0
  %1469 = vmatprep.subr.mxu0 0.0
  %1470 = vmatpush1.msra.mxu0 0.0
  %1471 = vmatprep.subr.mxu0 0.0
  %1472 = vmatpush1.msra.mxu0 0.0
  %1473 = vmatprep.subr.mxu0 0.0
  %1474 = vmatpush1.msra.mxu0 0.0
  %1475 = vmatprep.subr.mxu0 0.0
  %1476 = vmatpush1.msra.mxu0 0.0
  %1477 = vmatprep.subr.mxu0 0.0
  %1478 = vmatpush1.msra.mxu0 0.0
  %1479 = vmatprep.subr.mxu0 0.0
  %1480 = vmatpush1.msra.mxu0 0.0
  %1481 = vmatprep.subr.mxu0 0.0
  %1482 = vmatpush1.msra.mxu0 0.0
  %1483 = vmatprep.subr.mxu0 0.0
  %1484 = vmatpush1.msra.mxu0 0.0
  %1485 = vmatprep.subr.mxu0 0.0
  %1486 = vmatpush1.msra.mxu0 0.0
  %1487 = vmatprep.subr.mxu0 0.0
  %1488 = vmatpush1.msra.mxu0 0.0
  %1489 = vmatprep.subr.mxu0 0.0
  %1490 = vmatpush1.msra.mxu0 0.0
  %1491 = vmatprep.subr.mxu0 0.0
  %1492 = vmatpush1.msra.mxu0 0.0
  %1493 = vmatprep.subr.mxu0 0.0
  %1494 = vmatpush1.msra.mxu0 0.0
  %1495 = vmatprep.subr.mxu0 0.0
  %1496 = vmatpush1.msra.mxu0 0.0
  %1497 = vmatprep.subr.mxu0 0.0
  %1498 = vmatpush1.msra.mxu0 0.0
  %1499 = vmatprep.subr.mxu0 0.0
  %1500 = vmatpush1.msra.mxu0 0.0
  %1501 = vmatprep.subr.mxu0 0.0
  %1502 = vmatpush1.msra.mxu0 0.0
  %1503 = vmatprep.subr.mxu0 0.0
  %1504 = vmatpush1.msra.mxu0 0.0
  %1505 = vmatprep.mubr.f32.mxu0 0.0
  %1506 = vmatmul.mubr.f32.gmra.mrb[0].mxu0 %v1394
  %v1507 = vpop.f32.mrb[0].mxu0
  %v1508 = vadd.f32 %v1316, %v1507
  %v1509 = vpop.f32.mrb[0].mxu0
  %1510 = vmatprep.mubr.f32.mxu0 0.0
  %1511 = vmatmul.mubr.f32.gmra.mrb[0].mxu0 %v1397
  %v1512 = vpop.f32.mrb[0].mxu0
  %v1513 = vadd.f32 %v1321, %v1512
  %v1514 = vpop.f32.mrb[0].mxu0
  %1515 = vmatprep.mubr.f32.mxu0 0.0
  %1516 = vmatmul.mubr.f32.gmra.mrb[0].mxu0 %v1400
  %v1517 = vpop.f32.mrb[0].mxu0
  %v1518 = vadd.f32 %v1326, %v1517
  %v1519 = vpop.f32.mrb[0].mxu0
  %1520 = vmatprep.mubr.f32.mxu0 0.0
  %1521 = vmatmul.mubr.f32.gmra.mrb[0].mxu0 %v1403
  %v1522 = vpop.f32.mrb[0].mxu0
  %v1523 = vadd.f32 %v1331, %v1522
  %v1524 = vpop.f32.mrb[0].mxu0
  %1525 = vmatprep.mubr.f32.mxu0 0.0
  %1526 = vmatmul.mubr.f32.gmra.mrb[0].mxu0 %v1406
  %v1527 = vpop.f32.mrb[0].mxu0
  %v1528 = vadd.f32 %v1336, %v1527
  %v1529 = vpop.f32.mrb[0].mxu0
  %1530 = vmatprep.mubr.f32.mxu0 0.0
  %1531 = vmatmul.mubr.f32.gmra.mrb[0].mxu0 %v1409
  %v1532 = vpop.f32.mrb[0].mxu0
  %v1533 = vadd.f32 %v1341, %v1532
  %v1534 = vpop.f32.mrb[0].mxu0
  %1535 = vmatprep.mubr.f32.mxu0 0.0
  %1536 = vmatmul.mubr.f32.gmra.mrb[0].mxu0 %v1412
  %v1537 = vpop.f32.mrb[0].mxu0
  %v1538 = vadd.f32 %v1346, %v1537
  %v1539 = vpop.f32.mrb[0].mxu0
  %1540 = vmatprep.mubr.f32.mxu0 0.0
  %1541 = vmatmul.mubr.f32.gmra.mrb[0].mxu0 %v1415
  %v1542 = vpop.f32.mrb[0].mxu0
  %v1543 = vadd.f32 %v1351, %v1542
  %v1544 = vpop.f32.mrb[0].mxu0
  %1545 = vmatprep.mubr.f32.mxu0 0.0
  %1546 = vmatmul.mubr.f32.gmra.mrb[0].mxu0 %v1418
  %v1547 = vpop.f32.mrb[0].mxu0
  %v1548 = vadd.f32 %v1356, %v1547
  %v1549 = vpop.f32.mrb[0].mxu0
  %1550 = vmatprep.mubr.f32.mxu0 0.0
  %1551 = vmatmul.mubr.f32.gmra.mrb[0].mxu0 %v1421
  %v1552 = vpop.f32.mrb[0].mxu0
  %v1553 = vadd.f32 %v1361, %v1552
  %v1554 = vpop.f32.mrb[0].mxu0
  %1555 = vmatprep.mubr.f32.mxu0 0.0
  %1556 = vmatmul.mubr.f32.gmra.mrb[0].mxu0 %v1424
  %v1557 = vpop.f32.mrb[0].mxu0
  %v1558 = vadd.f32 %v1366, %v1557
  %v1559 = vpop.f32.mrb[0].mxu0
  %1560 = vmatprep.mubr.f32.mxu0 0.0
  %1561 = vmatmul.mubr.f32.gmra.mrb[0].mxu0 %v1427
  %v1562 = vpop.f32.mrb[0].mxu0
  %v1563 = vadd.f32 %v1371, %v1562
  %v1564 = vpop.f32.mrb[0].mxu0
  %1565 = vmatprep.mubr.f32.mxu0 0.0
  %1566 = vmatmul.mubr.f32.gmra.mrb[0].mxu0 %v1430
  %v1567 = vpop.f32.mrb[0].mxu0
  %v1568 = vadd.f32 %v1376, %v1567
  %v1569 = vpop.f32.mrb[0].mxu0
  %1570 = vmatprep.mubr.f32.mxu0 0.0
  %1571 = vmatmul.mubr.f32.gmra.mrb[0].mxu0 %v1433
  %v1572 = vpop.f32.mrb[0].mxu0
  %v1573 = vadd.f32 %v1381, %v1572
  %v1574 = vpop.f32.mrb[0].mxu0
  %1575 = vmatprep.mubr.f32.mxu0 0.0
  %1576 = vmatmul.mubr.f32.gmra.mrb[0].mxu0 %v1436
  %v1577 = vpop.f32.mrb[0].mxu0
  %v1578 = vadd.f32 %v1386, %v1577
  %v1579 = vpop.f32.mrb[0].mxu0
  %1580 = vmatprep.mubr.f32.mxu0 0.0
  %1581 = vmatmul.mubr.f32.gmra.mrb[0].mxu0 %v1439
  %v1582 = vpop.f32.mrb[0].mxu0
  %v1583 = vadd.f32 %v1391, %v1582
  %v1584 = vpop.f32.mrb[0].mxu0
  %1585 = vdwg.mxu0
  %vm1586 = vcmp.ge.f32.partialorder %v1508, 0.0
  %vm1587 = vcmp.ge.f32.partialorder %v1513, 0.0
  %vm1588 = vcmp.ge.f32.partialorder %v1518, 0.0
  %vm1589 = vcmp.ge.f32.partialorder %v1523, 0.0
  %vm1590 = vcmp.ge.f32.partialorder %v1528, 0.0
  %vm1591 = vcmp.ge.f32.partialorder %v1533, 0.0
  %vm1592 = vcmp.ge.f32.partialorder %v1538, 0.0
  %vm1593 = vcmp.ge.f32.partialorder %v1543, 0.0
  %vm1594 = vcmp.ge.f32.partialorder %v1548, 0.0
  %vm1595 = vcmp.ge.f32.partialorder %v1553, 0.0
  %vm1596 = vcmp.ge.f32.partialorder %v1558, 0.0
  %vm1597 = vcmp.ge.f32.partialorder %v1563, 0.0
  %vm1598 = vcmp.ge.f32.partialorder %v1568, 0.0
  %vm1599 = vcmp.ge.f32.partialorder %v1573, 0.0
  %vm1600 = vcmp.ge.f32.partialorder %v1578, 0.0
  %vm1601 = vcmp.ge.f32.partialorder %v1583, 0.0
  %v1602 = vmul.f32 %v1508, 0.01
  %v1603 = vmul.f32 %v1513, 0.01
  %v1604 = vmul.f32 %v1518, 0.01
  %v1605 = vmul.f32 %v1523, 0.01
  %v1606 = vmul.f32 %v1528, 0.01
  %v1607 = vmul.f32 %v1533, 0.01
  %v1608 = vmul.f32 %v1538, 0.01
  %v1609 = vmul.f32 %v1543, 0.01
  %v1610 = vmul.f32 %v1548, 0.01
  %v1611 = vmul.f32 %v1553, 0.01
  %v1612 = vmul.f32 %v1558, 0.01
  %v1613 = vmul.f32 %v1563, 0.01
  %v1614 = vmul.f32 %v1568, 0.01
  %v1615 = vmul.f32 %v1573, 0.01
  %v1616 = vmul.f32 %v1578, 0.01
  %v1617 = vmul.f32 %v1583, 0.01
  %v1618 = vsel %vm1586, %v1508, %v1602
  %v1619 = vsel %vm1587, %v1513, %v1603
  %v1620 = vsel %vm1588, %v1518, %v1604
  %v1621 = vsel %vm1589, %v1523, %v1605
  %v1622 = vsel %vm1590, %v1528, %v1606
  %v1623 = vsel %vm1591, %v1533, %v1607
  %v1624 = vsel %vm1592, %v1538, %v1608
  %v1625 = vsel %vm1593, %v1543, %v1609
  %v1626 = vsel %vm1594, %v1548, %v1610
  %v1627 = vsel %vm1595, %v1553, %v1611
  %v1628 = vsel %vm1596, %v1558, %v1612
  %v1629 = vsel %vm1597, %v1563, %v1613
  %v1630 = vsel %vm1598, %v1568, %v1614
  %v1631 = vsel %vm1599, %v1573, %v1615
  %v1632 = vsel %vm1600, %v1578, %v1616
  %v1633 = vsel %vm1601, %v1583, %v1617
  %1635 = vset.pattern.permute.xlu0 0
  %1636 = vperm.xlu0 %1635, %v1264
  %v1637 = vpop.permute.xlu0 %1636
  %1640 = vset.pattern.permute.xlu0 0
  %1641 = vperm.xlu0 %1640, %v1265
  %v1642 = vpop.permute.xlu0 %1641
  %1645 = vset.pattern.permute.xlu0 0
  %1646 = vperm.xlu0 %1645, %v1266
  %v1647 = vpop.permute.xlu0 %1646
  %1650 = vset.pattern.permute.xlu0 0
  %1651 = vperm.xlu0 %1650, %v1267
  %v1652 = vpop.permute.xlu0 %1651
  %1655 = vset.pattern.permute.xlu0 0
  %1656 = vperm.xlu0 %1655, %v1268
  %v1657 = vpop.permute.xlu0 %1656
  %1660 = vset.pattern.permute.xlu0 0
  %1661 = vperm.xlu0 %1660, %v1269
  %v1662 = vpop.permute.xlu0 %1661
  %1665 = vset.pattern.permute.xlu0 0
  %1666 = vperm.xlu0 %1665, %v1270
  %v1667 = vpop.permute.xlu0 %1666
  %1670 = vset.pattern.permute.xlu0 0
  %1671 = vperm.xlu0 %1670, %v1271
  %v1672 = vpop.permute.xlu0 %1671
  %1674 = vmatprep.subr.mxu0 0.0
  %1675 = vmatpush1.msra.mxu0 %v1618
  %1676 = vmatprep.subr.mxu0 0.0
  %1677 = vmatpush1.msra.mxu0 %v1619
  %1678 = vmatprep.subr.mxu0 0.0
  %1679 = vmatpush1.msra.mxu0 %v1620
  %1680 = vmatprep.subr.mxu0 0.0
  %1681 = vmatpush1.msra.mxu0 %v1621
  %1682 = vmatprep.subr.mxu0 0.0
  %1683 = vmatpush1.msra.mxu0 %v1622
  %1684 = vmatprep.subr.mxu0 0.0
  %1685 = vmatpush1.msra.mxu0 %v1623
  %1686 = vmatprep.subr.mxu0 0.0
  %1687 = vmatpush1.msra.mxu0 %v1624
  %1688 = vmatprep.subr.mxu0 0.0
  %1689 = vmatpush1.msra.mxu0 %v1625
  %1690 = vmatprep.subr.mxu0 0.0
  %1691 = vmatpush1.msra.mxu0 %v1626
  %1692 = vmatprep.subr.mxu0 0.0
  %1693 = vmatpush1.msra.mxu0 %v1627
  %1694 = vmatprep.subr.mxu0 0.0
  %1695 = vmatpush1.msra.mxu0 %v1628
  %1696 = vmatprep.subr.mxu0 0.0
  %1697 = vmatpush1.msra.mxu0 %v1629
  %1698 = vmatprep.subr.mxu0 0.0
  %1699 = vmatpush1.msra.mxu0 %v1630
  %1700 = vmatprep.subr.mxu0 0.0
  %1701 = vmatpush1.msra.mxu0 %v1631
  %1702 = vmatprep.subr.mxu0 0.0
  %1703 = vmatpush1.msra.mxu0 %v1632
  %1704 = vmatprep.subr.mxu0 0.0
  %1705 = vmatpush1.msra.mxu0 %v1633
  %1706 = vmatprep.subr.mxu0 0.0
  %1707 = vmatpush1.msra.mxu0 0.0
  %1708 = vmatprep.subr.mxu0 0.0
  %1709 = vmatpush1.msra.mxu0 0.0
  %1710 = vmatprep.subr.mxu0 0.0
  %1711 = vmatpush1.msra.mxu0 0.0
  %1712 = vmatprep.subr.mxu0 0.0
  %1713 = vmatpush1.msra.mxu0 0.0
  %1714 = vmatprep.subr.mxu0 0.0
  %1715 = vmatpush1.msra.mxu0 0.0
  %1716 = vmatprep.subr.mxu0 0.0
  %1717 = vmatpush1.msra.mxu0 0.0
  %1718 = vmatprep.subr.mxu0 0.0
  %1719 = vmatpush1.msra.mxu0 0.0
  %1720 = vmatprep.subr.mxu0 0.0
  %1721 = vmatpush1.msra.mxu0 0.0
  %1722 = vmatprep.subr.mxu0 0.0
  %1723 = vmatpush1.msra.mxu0 0.0
  %1724 = vmatprep.subr.mxu0 0.0
  %1725 = vmatpush1.msra.mxu0 0.0
  %1726 = vmatprep.subr.mxu0 0.0
  %1727 = vmatpush1.msra.mxu0 0.0
  %1728 = vmatprep.subr.mxu0 0.0
  %1729 = vmatpush1.msra.mxu0 0.0
  %1730 = vmatprep.subr.mxu0 0.0
  %1731 = vmatpush1.msra.mxu0 0.0
  %1732 = vmatprep.subr.mxu0 0.0
  %1733 = vmatpush1.msra.mxu0 0.0
  %1734 = vmatprep.subr.mxu0 0.0
  %1735 = vmatpush1.msra.mxu0 0.0
  %1736 = vmatprep.subr.mxu0 0.0
  %1737 = vmatpush1.msra.mxu0 0.0
  %1738 = vmatprep.mubr.f32.mxu0 0.0
  %1739 = vmatmul.mubr.f32.gmra.mrb[0].mxu0 %v1256
  %v1740 = vpop.f32.mrb[0].mxu0
  %v1741 = vadd.f32 %v1637, %v1740
  %v1742 = vpop.f32.mrb[0].mxu0
  %1743 = vmatprep.mubr.f32.mxu0 0.0
  %1744 = vmatmul.mubr.f32.gmra.mrb[0].mxu0 %v1257
  %v1745 = vpop.f32.mrb[0].mxu0
  %v1746 = vadd.f32 %v1642, %v1745
  %v1747 = vpop.f32.mrb[0].mxu0
  %1748 = vmatprep.mubr.f32.mxu0 0.0
  %1749 = vmatmul.mubr.f32.gmra.mrb[0].mxu0 %v1258
  %v1750 = vpop.f32.mrb[0].mxu0
  %v1751 = vadd.f32 %v1647, %v1750
  %v1752 = vpop.f32.mrb[0].mxu0
  %1753 = vmatprep.mubr.f32.mxu0 0.0
  %1754 = vmatmul.mubr.f32.gmra.mrb[0].mxu0 %v1259
  %v1755 = vpop.f32.mrb[0].mxu0
  %v1756 = vadd.f32 %v1652, %v1755
  %v1757 = vpop.f32.mrb[0].mxu0
  %1758 = vmatprep.mubr.f32.mxu0 0.0
  %1759 = vmatmul.mubr.f32.gmra.mrb[0].mxu0 %v1260
  %v1760 = vpop.f32.mrb[0].mxu0
  %v1761 = vadd.f32 %v1657, %v1760
  %v1762 = vpop.f32.mrb[0].mxu0
  %1763 = vmatprep.mubr.f32.mxu0 0.0
  %1764 = vmatmul.mubr.f32.gmra.mrb[0].mxu0 %v1261
  %v1765 = vpop.f32.mrb[0].mxu0
  %v1766 = vadd.f32 %v1662, %v1765
  %v1767 = vpop.f32.mrb[0].mxu0
  %1768 = vmatprep.mubr.f32.mxu0 0.0
  %1769 = vmatmul.mubr.f32.gmra.mrb[0].mxu0 %v1262
  %v1770 = vpop.f32.mrb[0].mxu0
  %v1771 = vadd.f32 %v1667, %v1770
  %v1772 = vpop.f32.mrb[0].mxu0
  %1773 = vmatprep.mubr.f32.mxu0 0.0
  %1774 = vmatmul.mubr.f32.gmra.mrb[0].mxu0 %v1263
  %v1775 = vpop.f32.mrb[0].mxu0
  %v1776 = vadd.f32 %v1672, %v1775
  %v1777 = vpop.f32.mrb[0].mxu0
  %1778 = vdwg.mxu0
  %vm1779 = vcmp.ge.f32.partialorder %v1741, 0.0
  %vm1780 = vcmp.ge.f32.partialorder %v1746, 0.0
  %vm1781 = vcmp.ge.f32.partialorder %v1751, 0.0
  %vm1782 = vcmp.ge.f32.partialorder %v1756, 0.0
  %vm1783 = vcmp.ge.f32.partialorder %v1761, 0.0
  %vm1784 = vcmp.ge.f32.partialorder %v1766, 0.0
  %vm1785 = vcmp.ge.f32.partialorder %v1771, 0.0
  %vm1786 = vcmp.ge.f32.partialorder %v1776, 0.0
  %v1787 = vmul.f32 %v1741, 0.01
  %v1788 = vmul.f32 %v1746, 0.01
  %v1789 = vmul.f32 %v1751, 0.01
  %v1790 = vmul.f32 %v1756, 0.01
  %v1791 = vmul.f32 %v1761, 0.01
  %v1792 = vmul.f32 %v1766, 0.01
  %v1793 = vmul.f32 %v1771, 0.01
  %v1794 = vmul.f32 %v1776, 0.01
  %v1795 = vsel %vm1779, %v1741, %v1787
  %v1796 = vsel %vm1780, %v1746, %v1788
  %v1797 = vsel %vm1781, %v1751, %v1789
  %v1798 = vsel %vm1782, %v1756, %v1790
  %v1799 = vsel %vm1783, %v1761, %v1791
  %v1800 = vsel %vm1784, %v1766, %v1792
  %v1801 = vsel %vm1785, %v1771, %v1793
  %v1802 = vsel %vm1786, %v1776, %v1794
  %1804 = vset.pattern.permute.xlu0 0
  %1805 = vperm.xlu0 %1804, %v1288
  %v1806 = vpop.permute.xlu0 %1805
  %1809 = vset.pattern.permute.xlu0 0
  %1810 = vperm.xlu0 %1809, %v1289
  %v1811 = vpop.permute.xlu0 %1810
  %1814 = vset.pattern.permute.xlu0 0
  %1815 = vperm.xlu0 %1814, %v1290
  %v1816 = vpop.permute.xlu0 %1815
  %1819 = vset.pattern.permute.xlu0 0
  %1820 = vperm.xlu0 %1819, %v1291
  %v1821 = vpop.permute.xlu0 %1820
  %1824 = vset.pattern.permute.xlu0 0
  %1825 = vperm.xlu0 %1824, %v1292
  %v1826 = vpop.permute.xlu0 %1825
  %1829 = vset.pattern.permute.xlu0 0
  %1830 = vperm.xlu0 %1829, %v1293
  %v1831 = vpop.permute.xlu0 %1830
  %1834 = vset.pattern.permute.xlu0 0
  %1835 = vperm.xlu0 %1834, %v1294
  %v1836 = vpop.permute.xlu0 %1835
  %1839 = vset.pattern.permute.xlu0 0
  %1840 = vperm.xlu0 %1839, %v1295
  %v1841 = vpop.permute.xlu0 %1840
  %1844 = vset.pattern.permute.xlu0 0
  %1845 = vperm.xlu0 %1844, %v1296
  %v1846 = vpop.permute.xlu0 %1845
  %1849 = vset.pattern.permute.xlu0 0
  %1850 = vperm.xlu0 %1849, %v1297
  %v1851 = vpop.permute.xlu0 %1850
  %1854 = vset.pattern.permute.xlu0 0
  %1855 = vperm.xlu0 %1854, %v1298
  %v1856 = vpop.permute.xlu0 %1855
  %1859 = vset.pattern.permute.xlu0 0
  %1860 = vperm.xlu0 %1859, %v1299
  %v1861 = vpop.permute.xlu0 %1860
  %1864 = vset.pattern.permute.xlu0 0
  %1865 = vperm.xlu0 %1864, %v1300
  %v1866 = vpop.permute.xlu0 %1865
  %1869 = vset.pattern.permute.xlu0 0
  %1870 = vperm.xlu0 %1869, %v1301
  %v1871 = vpop.permute.xlu0 %1870
  %1874 = vset.pattern.permute.xlu0 0
  %1875 = vperm.xlu0 %1874, %v1302
  %v1876 = vpop.permute.xlu0 %1875
  %1879 = vset.pattern.permute.xlu0 0
  %1880 = vperm.xlu0 %1879, %v1303
  %v1881 = vpop.permute.xlu0 %1880
  %v1884 = vsel %vm188, %v1272, 0
  %v1887 = vsel %vm188, %v1273, 0
  %v1890 = vsel %vm188, %v1274, 0
  %v1893 = vsel %vm188, %v1275, 0
  %v1896 = vsel %vm188, %v1276, 0
  %v1899 = vsel %vm188, %v1277, 0
  %v1902 = vsel %vm188, %v1278, 0
  %v1905 = vsel %vm188, %v1279, 0
  %v1908 = vsel %vm188, %v1280, 0
  %v1911 = vsel %vm188, %v1281, 0
  %v1914 = vsel %vm188, %v1282, 0
  %v1917 = vsel %vm188, %v1283, 0
  %v1920 = vsel %vm188, %v1284, 0
  %v1923 = vsel %vm188, %v1285, 0
  %v1926 = vsel %vm188, %v1286, 0
  %v1929 = vsel %vm188, %v1287, 0
  %1931 = vmatprep.subr.mxu0 0.0
  %1932 = vmatpush1.msra.mxu0 %v1795
  %1933 = vmatprep.subr.mxu0 0.0
  %1934 = vmatpush1.msra.mxu0 %v1796
  %1935 = vmatprep.subr.mxu0 0.0
  %1936 = vmatpush1.msra.mxu0 %v1797
  %1937 = vmatprep.subr.mxu0 0.0
  %1938 = vmatpush1.msra.mxu0 %v1798
  %1939 = vmatprep.subr.mxu0 0.0
  %1940 = vmatpush1.msra.mxu0 %v1799
  %1941 = vmatprep.subr.mxu0 0.0
  %1942 = vmatpush1.msra.mxu0 %v1800
  %1943 = vmatprep.subr.mxu0 0.0
  %1944 = vmatpush1.msra.mxu0 %v1801
  %1945 = vmatprep.subr.mxu0 0.0
  %1946 = vmatpush1.msra.mxu0 %v1802
  %1947 = vmatprep.subr.mxu0 0.0
  %1948 = vmatpush1.msra.mxu0 0.0
  %1949 = vmatprep.subr.mxu0 0.0
  %1950 = vmatpush1.msra.mxu0 0.0
  %1951 = vmatprep.subr.mxu0 0.0
  %1952 = vmatpush1.msra.mxu0 0.0
  %1953 = vmatprep.subr.mxu0 0.0
  %1954 = vmatpush1.msra.mxu0 0.0
  %1955 = vmatprep.subr.mxu0 0.0
  %1956 = vmatpush1.msra.mxu0 0.0
  %1957 = vmatprep.subr.mxu0 0.0
  %1958 = vmatpush1.msra.mxu0 0.0
  %1959 = vmatprep.subr.mxu0 0.0
  %1960 = vmatpush1.msra.mxu0 0.0
  %1961 = vmatprep.subr.mxu0 0.0
  %1962 = vmatpush1.msra.mxu0 0.0
  %1963 = vmatprep.subr.mxu0 0.0
  %1964 = vmatpush1.msra.mxu0 0.0
  %1965 = vmatprep.subr.mxu0 0.0
  %1966 = vmatpush1.msra.mxu0 0.0
  %1967 = vmatprep.subr.mxu0 0.0
  %1968 = vmatpush1.msra.mxu0 0.0
  %1969 = vmatprep.subr.mxu0 0.0
  %1970 = vmatpush1.msra.mxu0 0.0
  %1971 = vmatprep.subr.mxu0 0.0
  %1972 = vmatpush1.msra.mxu0 0.0
  %1973 = vmatprep.subr.mxu0 0.0
  %1974 = vmatpush1.msra.mxu0 0.0
  %1975 = vmatprep.subr.mxu0 0.0
  %1976 = vmatpush1.msra.mxu0 0.0
  %1977 = vmatprep.subr.mxu0 0.0
  %1978 = vmatpush1.msra.mxu0 0.0
  %1979 = vmatprep.subr.mxu0 0.0
  %1980 = vmatpush1.msra.mxu0 0.0
  %1981 = vmatprep.subr.mxu0 0.0
  %1982 = vmatpush1.msra.mxu0 0.0
  %1983 = vmatprep.subr.mxu0 0.0
  %1984 = vmatpush1.msra.mxu0 0.0
  %1985 = vmatprep.subr.mxu0 0.0
  %1986 = vmatpush1.msra.mxu0 0.0
  %1987 = vmatprep.subr.mxu0 0.0
  %1988 = vmatpush1.msra.mxu0 0.0
  %1989 = vmatprep.subr.mxu0 0.0
  %1990 = vmatpush1.msra.mxu0 0.0
  %1991 = vmatprep.subr.mxu0 0.0
  %1992 = vmatpush1.msra.mxu0 0.0
  %1993 = vmatprep.subr.mxu0 0.0
  %1994 = vmatpush1.msra.mxu0 0.0
  %1995 = vmatprep.mubr.f32.mxu0 0.0
  %1996 = vmatmul.mubr.f32.gmra.mrb[0].mxu0 %v1884
  %v1997 = vpop.f32.mrb[0].mxu0
  %v1998 = vadd.f32 %v1806, %v1997
  %v1999 = vpop.f32.mrb[0].mxu0
  %2000 = vmatprep.mubr.f32.mxu0 0.0
  %2001 = vmatmul.mubr.f32.gmra.mrb[0].mxu0 %v1887
  %v2002 = vpop.f32.mrb[0].mxu0
  %v2003 = vadd.f32 %v1811, %v2002
  %v2004 = vpop.f32.mrb[0].mxu0
  %2005 = vmatprep.mubr.f32.mxu0 0.0
  %2006 = vmatmul.mubr.f32.gmra.mrb[0].mxu0 %v1890
  %v2007 = vpop.f32.mrb[0].mxu0
  %v2008 = vadd.f32 %v1816, %v2007
  %v2009 = vpop.f32.mrb[0].mxu0
  %2010 = vmatprep.mubr.f32.mxu0 0.0
  %2011 = vmatmul.mubr.f32.gmra.mrb[0].mxu0 %v1893
  %v2012 = vpop.f32.mrb[0].mxu0
  %v2013 = vadd.f32 %v1821, %v2012
  %v2014 = vpop.f32.mrb[0].mxu0
  %2015 = vmatprep.mubr.f32.mxu0 0.0
  %2016 = vmatmul.mubr.f32.gmra.mrb[0].mxu0 %v1896
  %v2017 = vpop.f32.mrb[0].mxu0
  %v2018 = vadd.f32 %v1826, %v2017
  %v2019 = vpop.f32.mrb[0].mxu0
  %2020 = vmatprep.mubr.f32.mxu0 0.0
  %2021 = vmatmul.mubr.f32.gmra.mrb[0].mxu0 %v1899
  %v2022 = vpop.f32.mrb[0].mxu0
  %v2023 = vadd.f32 %v1831, %v2022
  %v2024 = vpop.f32.mrb[0].mxu0
  %2025 = vmatprep.mubr.f32.mxu0 0.0
  %2026 = vmatmul.mubr.f32.gmra.mrb[0].mxu0 %v1902
  %v2027 = vpop.f32.mrb[0].mxu0
  %v2028 = vadd.f32 %v1836, %v2027
  %v2029 = vpop.f32.mrb[0].mxu0
  %2030 = vmatprep.mubr.f32.mxu0 0.0
  %2031 = vmatmul.mubr.f32.gmra.mrb[0].mxu0 %v1905
  %v2032 = vpop.f32.mrb[0].mxu0
  %v2033 = vadd.f32 %v1841, %v2032
  %v2034 = vpop.f32.mrb[0].mxu0
  %2035 = vmatprep.mubr.f32.mxu0 0.0
  %2036 = vmatmul.mubr.f32.gmra.mrb[0].mxu0 %v1908
  %v2037 = vpop.f32.mrb[0].mxu0
  %v2038 = vadd.f32 %v1846, %v2037
  %v2039 = vpop.f32.mrb[0].mxu0
  %2040 = vmatprep.mubr.f32.mxu0 0.0
  %2041 = vmatmul.mubr.f32.gmra.mrb[0].mxu0 %v1911
  %v2042 = vpop.f32.mrb[0].mxu0
  %v2043 = vadd.f32 %v1851, %v2042
  %v2044 = vpop.f32.mrb[0].mxu0
  %2045 = vmatprep.mubr.f32.mxu0 0.0
  %2046 = vmatmul.mubr.f32.gmra.mrb[0].mxu0 %v1914
  %v2047 = vpop.f32.mrb[0].mxu0
  %v2048 = vadd.f32 %v1856, %v2047
  %v2049 = vpop.f32.mrb[0].mxu0
  %2050 = vmatprep.mubr.f32.mxu0 0.0
  %2051 = vmatmul.mubr.f32.gmra.mrb[0].mxu0 %v1917
  %v2052 = vpop.f32.mrb[0].mxu0
  %v2053 = vadd.f32 %v1861, %v2052
  %v2054 = vpop.f32.mrb[0].mxu0
  %2055 = vmatprep.mubr.f32.mxu0 0.0
  %2056 = vmatmul.mubr.f32.gmra.mrb[0].mxu0 %v1920
  %v2057 = vpop.f32.mrb[0].mxu0
  %v2058 = vadd.f32 %v1866, %v2057
  %v2059 = vpop.f32.mrb[0].mxu0
  %2060 = vmatprep.mubr.f32.mxu0 0.0
  %2061 = vmatmul.mubr.f32.gmra.mrb[0].mxu0 %v1923
  %v2062 = vpop.f32.mrb[0].mxu0
  %v2063 = vadd.f32 %v1871, %v2062
  %v2064 = vpop.f32.mrb[0].mxu0
  %2065 = vmatprep.mubr.f32.mxu0 0.0
  %2066 = vmatmul.mubr.f32.gmra.mrb[0].mxu0 %v1926
  %v2067 = vpop.f32.mrb[0].mxu0
  %v2068 = vadd.f32 %v1876, %v2067
  %v2069 = vpop.f32.mrb[0].mxu0
  %2070 = vmatprep.mubr.f32.mxu0 0.0
  %2071 = vmatmul.mubr.f32.gmra.mrb[0].mxu0 %v1929
  %v2072 = vpop.f32.mrb[0].mxu0
  %v2073 = vadd.f32 %v1881, %v2072
  %v2074 = vpop.f32.mrb[0].mxu0
  %2075 = vdwg.mxu0
  %2076 = vmatprep.subr.mxu0 0.0
  %2077 = vmatpush1.msra.mxu0 %v1998
  %2078 = vmatprep.subr.mxu0 0.0
  %2079 = vmatpush1.msra.mxu0 %v2003
  %2080 = vmatprep.subr.mxu0 0.0
  %2081 = vmatpush1.msra.mxu0 %v2008
  %2082 = vmatprep.subr.mxu0 0.0
  %2083 = vmatpush1.msra.mxu0 %v2013
  %2084 = vmatprep.subr.mxu0 0.0
  %2085 = vmatpush1.msra.mxu0 %v2018
  %2086 = vmatprep.subr.mxu0 0.0
  %2087 = vmatpush1.msra.mxu0 %v2023
  %2088 = vmatprep.subr.mxu0 0.0
  %2089 = vmatpush1.msra.mxu0 %v2028
  %2090 = vmatprep.subr.mxu0 0.0
  %2091 = vmatpush1.msra.mxu0 %v2033
  %2092 = vmatprep.subr.mxu0 0.0
  %2093 = vmatpush1.msra.mxu0 %v2038
  %2094 = vmatprep.subr.mxu0 0.0
  %2095 = vmatpush1.msra.mxu0 %v2043
  %2096 = vmatprep.subr.mxu0 0.0
  %2097 = vmatpush1.msra.mxu0 %v2048
  %2098 = vmatprep.subr.mxu0 0.0
  %2099 = vmatpush1.msra.mxu0 %v2053
  %2100 = vmatprep.subr.mxu0 0.0
  %2101 = vmatpush1.msra.mxu0 %v2058
  %2102 = vmatprep.subr.mxu0 0.0
  %2103 = vmatpush1.msra.mxu0 %v2063
  %2104 = vmatprep.subr.mxu0 0.0
  %2105 = vmatpush1.msra.mxu0 %v2068
  %2106 = vmatprep.subr.mxu0 0.0
  %2107 = vmatpush1.msra.mxu0 %v2073
  %2108 = vmatprep.subr.mxu0 0.0
  %2109 = vmatpush1.msra.mxu0 0.0
  %2110 = vmatprep.subr.mxu0 0.0
  %2111 = vmatpush1.msra.mxu0 0.0
  %2112 = vmatprep.subr.mxu0 0.0
  %2113 = vmatpush1.msra.mxu0 0.0
  %2114 = vmatprep.subr.mxu0 0.0
  %2115 = vmatpush1.msra.mxu0 0.0
  %2116 = vmatprep.subr.mxu0 0.0
  %2117 = vmatpush1.msra.mxu0 0.0
  %2118 = vmatprep.subr.mxu0 0.0
  %2119 = vmatpush1.msra.mxu0 0.0
  %2120 = vmatprep.subr.mxu0 0.0
  %2121 = vmatpush1.msra.mxu0 0.0
  %2122 = vmatprep.subr.mxu0 0.0
  %2123 = vmatpush1.msra.mxu0 0.0
  %2124 = vmatprep.subr.mxu0 0.0
  %2125 = vmatpush1.msra.mxu0 0.0
  %2126 = vmatprep.subr.mxu0 0.0
  %2127 = vmatpush1.msra.mxu0 0.0
  %2128 = vmatprep.subr.mxu0 0.0
  %2129 = vmatpush1.msra.mxu0 0.0
  %2130 = vmatprep.subr.mxu0 0.0
  %2131 = vmatpush1.msra.mxu0 0.0
  %2132 = vmatprep.subr.mxu0 0.0
  %2133 = vmatpush1.msra.mxu0 0.0
  %2134 = vmatprep.subr.mxu0 0.0
  %2135 = vmatpush1.msra.mxu0 0.0
  %2136 = vmatprep.subr.mxu0 0.0
  %2137 = vmatpush1.msra.mxu0 0.0
  %2138 = vmatprep.subr.mxu0 0.0
  %2139 = vmatpush1.msra.mxu0 0.0
  %2140 = vmatprep.mubr.f32.mxu0 0.0
  %2141 = vmatmul.mubr.f32.gmra.mrb[0].mxu0 %v1304
  %v2142 = vpop.f32.mrb[0].mxu0
  %v2143 = vadd.f32 0.0, %v2142
  %v2144 = vpop.f32.mrb[0].mxu0
  %2145 = vdwg.mxu0
  %v2147 = vrot.slane %v2143, 4
  %2148 = vrot.lane.b32.xlu0 %v2147, 32
  %v2149 = vpop.permute.xlu0 %2148
  %v2151 = vsel %vm328, %v2143, %v2149
  %v2153 = vlaneseq
  %v2154 = vshrl.u32 %v2153, 7
  %v2155 = vsub.s32 0, %v2154
  %v2156 = vrot.slane %v1305, %v2155
  %v2158 = vadd.f32 %v2151, %v2156
  %v2159 = vld [vmem:[%s7] sm:$0xff]
  %v2160 = vld [vmem:[%s8] sm:$0xff]
  %v2161 = vld [vmem:[%s8 + $0x8] sm:$0xff]
  %v2162 = vld [vmem:[%s8 + $0x10] sm:$0xff]
  %v2163 = vld [vmem:[%s8 + $0x18] sm:$0xff]
  %v2164 = vld [vmem:[%s8 + $0x20] sm:$0xff]
  %v2165 = vld [vmem:[%s8 + $0x28] sm:$0xff]
  %v2166 = vld [vmem:[%s8 + $0x30] sm:$0xff]
  %v2167 = vld [vmem:[%s8 + $0x38] sm:$0xff]
  %v2168 = vld [vmem:[%s8 + $0x40] sm:$0xff]
  %v2169 = vld [vmem:[%s8 + $0x48] sm:$0xff]
  %v2170 = vld [vmem:[%s8 + $0x50] sm:$0xff]
  %v2171 = vld [vmem:[%s8 + $0x58] sm:$0xff]
  %v2172 = vld [vmem:[%s8 + $0x60] sm:$0xff]
  %v2173 = vld [vmem:[%s8 + $0x68] sm:$0xff]
  %v2174 = vld [vmem:[%s8 + $0x70] sm:$0xff]
  %v2175 = vld [vmem:[%s8 + $0x78] sm:$0xff]
  %vm2176 = vcmp.eq.f32.partialorder %v1223, 0.0
  %v2177 = vsel %vm2176, %v2158, 0.0
  %vm2178 = vcmp.eq.f32.partialorder %v1223, 1.0
  %v2179 = vsel %vm2178, %v2158, 0.0
  %2181 = vrot.lane.b32.xlu0 %v2179, 64
  %v2182 = vpop.permute.xlu0 %2181
  %v2184 = vsel %vm188, %v2177, %v2182
  %vm2185 = vcmp.eq.f32.partialorder %v1223, 2.0
  %v2186 = vsel %vm2185, %v2158, 0.0
  %vm2187 = vcmp.eq.f32.partialorder %v1223, 3.0
  %v2188 = vsel %vm2187, %v2158, 0.0
  %2190 = vrot.lane.b32.xlu0 %v2188, 64
  %v2191 = vpop.permute.xlu0 %2190
  %v2193 = vsel %vm188, %v2186, %v2191
  %2194 = vmatprep.subr.mxu0 0.0
  %2195 = vmatpush1.msra.mxu0 %v2160
  %2196 = vmatprep.subr.mxu0 0.0
  %2197 = vmatpush1.msra.mxu0 %v2161
  %2198 = vmatprep.subr.mxu0 0.0
  %2199 = vmatpush1.msra.mxu0 %v2162
  %2200 = vmatprep.subr.mxu0 0.0
  %2201 = vmatpush1.msra.mxu0 %v2163
  %2202 = vmatprep.subr.mxu0 0.0
  %2203 = vmatpush1.msra.mxu0 %v2164
  %2204 = vmatprep.subr.mxu0 0.0
  %2205 = vmatpush1.msra.mxu0 %v2165
  %2206 = vmatprep.subr.mxu0 0.0
  %2207 = vmatpush1.msra.mxu0 %v2166
  %2208 = vmatprep.subr.mxu0 0.0
  %2209 = vmatpush1.msra.mxu0 %v2167
  %2210 = vmatprep.subr.mxu0 0.0
  %2211 = vmatpush1.msra.mxu0 %v2168
  %2212 = vmatprep.subr.mxu0 0.0
  %2213 = vmatpush1.msra.mxu0 %v2169
  %2214 = vmatprep.subr.mxu0 0.0
  %2215 = vmatpush1.msra.mxu0 %v2170
  %2216 = vmatprep.subr.mxu0 0.0
  %2217 = vmatpush1.msra.mxu0 %v2171
  %2218 = vmatprep.subr.mxu0 0.0
  %2219 = vmatpush1.msra.mxu0 %v2172
  %2220 = vmatprep.subr.mxu0 0.0
  %2221 = vmatpush1.msra.mxu0 %v2173
  %2222 = vmatprep.subr.mxu0 0.0
  %2223 = vmatpush1.msra.mxu0 %v2174
  %2224 = vmatprep.subr.mxu0 0.0
  %2225 = vmatpush1.msra.mxu0 %v2175
  %2226 = vmatprep.subr.mxu0 0.0
  %2227 = vmatpush1.msra.mxu0 0.0
  %2228 = vmatprep.subr.mxu0 0.0
  %2229 = vmatpush1.msra.mxu0 0.0
  %2230 = vmatprep.subr.mxu0 0.0
  %2231 = vmatpush1.msra.mxu0 0.0
  %2232 = vmatprep.subr.mxu0 0.0
  %2233 = vmatpush1.msra.mxu0 0.0
  %2234 = vmatprep.subr.mxu0 0.0
  %2235 = vmatpush1.msra.mxu0 0.0
  %2236 = vmatprep.subr.mxu0 0.0
  %2237 = vmatpush1.msra.mxu0 0.0
  %2238 = vmatprep.subr.mxu0 0.0
  %2239 = vmatpush1.msra.mxu0 0.0
  %2240 = vmatprep.subr.mxu0 0.0
  %2241 = vmatpush1.msra.mxu0 0.0
  %2242 = vmatprep.subr.mxu0 0.0
  %2243 = vmatpush1.msra.mxu0 0.0
  %2244 = vmatprep.subr.mxu0 0.0
  %2245 = vmatpush1.msra.mxu0 0.0
  %2246 = vmatprep.subr.mxu0 0.0
  %2247 = vmatpush1.msra.mxu0 0.0
  %2248 = vmatprep.subr.mxu0 0.0
  %2249 = vmatpush1.msra.mxu0 0.0
  %2250 = vmatprep.subr.mxu0 0.0
  %2251 = vmatpush1.msra.mxu0 0.0
  %2252 = vmatprep.subr.mxu0 0.0
  %2253 = vmatpush1.msra.mxu0 0.0
  %2254 = vmatprep.subr.mxu0 0.0
  %2255 = vmatpush1.msra.mxu0 0.0
  %2256 = vmatprep.subr.mxu0 0.0
  %2257 = vmatpush1.msra.mxu0 0.0
  %2258 = vmatprep.mubr.f32.mxu0 0.0
  %2259 = vmatmul.mubr.f32.gmra.mrb[0].mxu0 %v2184
  %v2260 = vpop.f32.mrb[0].mxu0
  %v2261 = vadd.f32 0.0, %v2260
  %v2262 = vpop.f32.mrb[0].mxu0
  %2263 = vdwg.mxu0
  %2264 = vmatprep.subr.mxu0 0.0
  %2265 = vmatpush1.msra.mxu0 %v2160
  %2266 = vmatprep.subr.mxu0 0.0
  %2267 = vmatpush1.msra.mxu0 %v2161
  %2268 = vmatprep.subr.mxu0 0.0
  %2269 = vmatpush1.msra.mxu0 %v2162
  %2270 = vmatprep.subr.mxu0 0.0
  %2271 = vmatpush1.msra.mxu0 %v2163
  %2272 = vmatprep.subr.mxu0 0.0
  %2273 = vmatpush1.msra.mxu0 %v2164
  %2274 = vmatprep.subr.mxu0 0.0
  %2275 = vmatpush1.msra.mxu0 %v2165
  %2276 = vmatprep.subr.mxu0 0.0
  %2277 = vmatpush1.msra.mxu0 %v2166
  %2278 = vmatprep.subr.mxu0 0.0
  %2279 = vmatpush1.msra.mxu0 %v2167
  %2280 = vmatprep.subr.mxu0 0.0
  %2281 = vmatpush1.msra.mxu0 %v2168
  %2282 = vmatprep.subr.mxu0 0.0
  %2283 = vmatpush1.msra.mxu0 %v2169
  %2284 = vmatprep.subr.mxu0 0.0
  %2285 = vmatpush1.msra.mxu0 %v2170
  %2286 = vmatprep.subr.mxu0 0.0
  %2287 = vmatpush1.msra.mxu0 %v2171
  %2288 = vmatprep.subr.mxu0 0.0
  %2289 = vmatpush1.msra.mxu0 %v2172
  %2290 = vmatprep.subr.mxu0 0.0
  %2291 = vmatpush1.msra.mxu0 %v2173
  %2292 = vmatprep.subr.mxu0 0.0
  %2293 = vmatpush1.msra.mxu0 %v2174
  %2294 = vmatprep.subr.mxu0 0.0
  %2295 = vmatpush1.msra.mxu0 %v2175
  %2296 = vmatprep.subr.mxu0 0.0
  %2297 = vmatpush1.msra.mxu0 0.0
  %2298 = vmatprep.subr.mxu0 0.0
  %2299 = vmatpush1.msra.mxu0 0.0
  %2300 = vmatprep.subr.mxu0 0.0
  %2301 = vmatpush1.msra.mxu0 0.0
  %2302 = vmatprep.subr.mxu0 0.0
  %2303 = vmatpush1.msra.mxu0 0.0
  %2304 = vmatprep.subr.mxu0 0.0
  %2305 = vmatpush1.msra.mxu0 0.0
  %2306 = vmatprep.subr.mxu0 0.0
  %2307 = vmatpush1.msra.mxu0 0.0
  %2308 = vmatprep.subr.mxu0 0.0
  %2309 = vmatpush1.msra.mxu0 0.0
  %2310 = vmatprep.subr.mxu0 0.0
  %2311 = vmatpush1.msra.mxu0 0.0
  %2312 = vmatprep.subr.mxu0 0.0
  %2313 = vmatpush1.msra.mxu0 0.0
  %2314 = vmatprep.subr.mxu0 0.0
  %2315 = vmatpush1.msra.mxu0 0.0
  %2316 = vmatprep.subr.mxu0 0.0
  %2317 = vmatpush1.msra.mxu0 0.0
  %2318 = vmatprep.subr.mxu0 0.0
  %2319 = vmatpush1.msra.mxu0 0.0
  %2320 = vmatprep.subr.mxu0 0.0
  %2321 = vmatpush1.msra.mxu0 0.0
  %2322 = vmatprep.subr.mxu0 0.0
  %2323 = vmatpush1.msra.mxu0 0.0
  %2324 = vmatprep.subr.mxu0 0.0
  %2325 = vmatpush1.msra.mxu0 0.0
  %2326 = vmatprep.subr.mxu0 0.0
  %2327 = vmatpush1.msra.mxu0 0.0
  %2328 = vmatprep.mubr.f32.mxu0 0.0
  %2329 = vmatmul.mubr.f32.gmra.mrb[0].mxu0 %v2193
  %v2330 = vpop.f32.mrb[0].mxu0
  %v2331 = vadd.f32 0.0, %v2330
  %v2332 = vpop.f32.mrb[0].mxu0
  %2333 = vdwg.mxu0
  %v2335 = vrot.slane %v2331, 4
  %v2337 = vsel %vm1311, %v2261, %v2335
  %v2339 = vsel %vm1063, %v2159, 0
  %2341 = vmatprep.subr.mxu0 0.0
  %2342 = vmatpush1.msra.mxu0 %v2337
  %2343 = vmatprep.subr.mxu0 0.0
  %2344 = vmatpush1.msra.mxu0 0.0
  %2345 = vmatprep.subr.mxu0 0.0
  %2346 = vmatpush1.msra.mxu0 0.0
  %2347 = vmatprep.subr.mxu0 0.0
  %2348 = vmatpush1.msra.mxu0 0.0
  %2349 = vmatprep.subr.mxu0 0.0
  %2350 = vmatpush1.msra.mxu0 0.0
  %2351 = vmatprep.subr.mxu0 0.0
  %2352 = vmatpush1.msra.mxu0 0.0
  %2353 = vmatprep.subr.mxu0 0.0
  %2354 = vmatpush1.msra.mxu0 0.0
  %2355 = vmatprep.subr.mxu0 0.0
  %2356 = vmatpush1.msra.mxu0 0.0
  %2357 = vmatprep.subr.mxu0 0.0
  %2358 = vmatpush1.msra.mxu0 0.0
  %2359 = vmatprep.subr.mxu0 0.0
  %2360 = vmatpush1.msra.mxu0 0.0
  %2361 = vmatprep.subr.mxu0 0.0
  %2362 = vmatpush1.msra.mxu0 0.0
  %2363 = vmatprep.subr.mxu0 0.0
  %2364 = vmatpush1.msra.mxu0 0.0
  %2365 = vmatprep.subr.mxu0 0.0
  %2366 = vmatpush1.msra.mxu0 0.0
  %2367 = vmatprep.subr.mxu0 0.0
  %2368 = vmatpush1.msra.mxu0 0.0
  %2369 = vmatprep.subr.mxu0 0.0
  %2370 = vmatpush1.msra.mxu0 0.0
  %2371 = vmatprep.subr.mxu0 0.0
  %2372 = vmatpush1.msra.mxu0 0.0
  %2373 = vmatprep.subr.mxu0 0.0
  %2374 = vmatpush1.msra.mxu0 0.0
  %2375 = vmatprep.subr.mxu0 0.0
  %2376 = vmatpush1.msra.mxu0 0.0
  %2377 = vmatprep.subr.mxu0 0.0
  %2378 = vmatpush1.msra.mxu0 0.0
  %2379 = vmatprep.subr.mxu0 0.0
  %2380 = vmatpush1.msra.mxu0 0.0
  %2381 = vmatprep.subr.mxu0 0.0
  %2382 = vmatpush1.msra.mxu0 0.0
  %2383 = vmatprep.subr.mxu0 0.0
  %2384 = vmatpush1.msra.mxu0 0.0
  %2385 = vmatprep.subr.mxu0 0.0
  %2386 = vmatpush1.msra.mxu0 0.0
  %2387 = vmatprep.subr.mxu0 0.0
  %2388 = vmatpush1.msra.mxu0 0.0
  %2389 = vmatprep.subr.mxu0 0.0
  %2390 = vmatpush1.msra.mxu0 0.0
  %2391 = vmatprep.subr.mxu0 0.0
  %2392 = vmatpush1.msra.mxu0 0.0
  %2393 = vmatprep.subr.mxu0 0.0
  %2394 = vmatpush1.msra.mxu0 0.0
  %2395 = vmatprep.subr.mxu0 0.0
  %2396 = vmatpush1.msra.mxu0 0.0
  %2397 = vmatprep.subr.mxu0 0.0
  %2398 = vmatpush1.msra.mxu0 0.0
  %2399 = vmatprep.subr.mxu0 0.0
  %2400 = vmatpush1.msra.mxu0 0.0
  %2401 = vmatprep.subr.mxu0 0.0
  %2402 = vmatpush1.msra.mxu0 0.0
  %2403 = vmatprep.subr.mxu0 0.0
  %2404 = vmatpush1.msra.mxu0 0.0
  %2405 = vmatprep.mubr.f32.mxu0 0.0
  %2406 = vmatmul.mubr.f32.gmra.mrb[0].mxu0 %v2339
  %v2407 = vpop.f32.mrb[0].mxu0
  %v2408 = vadd.f32 0.0, %v2407
  %v2409 = vpop.f32.mrb[0].mxu0
  %2410 = vdwg.mxu0
  %v2411 = vld [vmem:[%s5] sm:$0xff]
  %v2412 = vld [vmem:[%s5 + $0x8] sm:$0xff]
  %v2413 = vld [vmem:[%s5 + $0x10] sm:$0xff]
  %v2414 = vld [vmem:[%s5 + $0x18] sm:$0xff]
  %v2415 = vld [vmem:[%s5 + $0x20] sm:$0xff]
  %v2416 = vld [vmem:[%s5 + $0x28] sm:$0xff]
  %v2417 = vld [vmem:[%s5 + $0x30] sm:$0xff]
  %v2418 = vld [vmem:[%s5 + $0x38] sm:$0xff]
  %v2419 = vld [vmem:[%s5 + $0x40] sm:$0xff]
  %v2420 = vld [vmem:[%s5 + $0x48] sm:$0xff]
  %v2421 = vld [vmem:[%s5 + $0x50] sm:$0xff]
  %v2422 = vld [vmem:[%s5 + $0x58] sm:$0xff]
  %v2423 = vld [vmem:[%s5 + $0x60] sm:$0xff]
  %v2424 = vld [vmem:[%s5 + $0x68] sm:$0xff]
  %v2425 = vld [vmem:[%s5 + $0x70] sm:$0xff]
  %v2426 = vld [vmem:[%s5 + $0x78] sm:$0xff]
  %v2427 = vld [vmem:[%s5 + $0x80] sm:$0xff]
  %v2428 = vld [vmem:[%s5 + $0x88] sm:$0xff]
  %v2429 = vld [vmem:[%s5 + $0x90] sm:$0xff]
  %v2430 = vld [vmem:[%s5 + $0x98] sm:$0xff]
  %v2431 = vld [vmem:[%s5 + $0xa0] sm:$0xff]
  %v2432 = vld [vmem:[%s5 + $0xa8] sm:$0xff]
  %v2433 = vld [vmem:[%s5 + $0xb0] sm:$0xff]
  %v2434 = vld [vmem:[%s5 + $0xb8] sm:$0xff]
  %v2435 = vld [vmem:[%s5 + $0xc0] sm:$0xff]
  %v2436 = vld [vmem:[%s5 + $0xc8] sm:$0xff]
  %v2437 = vld [vmem:[%s5 + $0xd0] sm:$0xff]
  %v2438 = vld [vmem:[%s5 + $0xd8] sm:$0xff]
  %v2439 = vld [vmem:[%s5 + $0xe0] sm:$0xff]
  %v2440 = vld [vmem:[%s5 + $0xe8] sm:$0xff]
  %v2441 = vld [vmem:[%s5 + $0xf0] sm:$0xff]
  %v2442 = vld [vmem:[%s5 + $0xf8] sm:$0xff]
  %v2443 = vld [vmem:[%s5 + $0x100] sm:$0xff]
  %v2444 = vld [vmem:[%s5 + $0x108] sm:$0xff]
  %v2445 = vld [vmem:[%s5 + $0x110] sm:$0xff]
  %v2446 = vld [vmem:[%s5 + $0x118] sm:$0xff]
  %v2447 = vld [vmem:[%s5 + $0x120] sm:$0xff]
  %v2448 = vld [vmem:[%s5 + $0x128] sm:$0xff]
  %v2449 = vld [vmem:[%s5 + $0x130] sm:$0xff]
  %v2450 = vld [vmem:[%s5 + $0x138] sm:$0xff]
  %v2451 = vld [vmem:[%s5 + $0x140] sm:$0xff]
  %v2452 = vld [vmem:[%s5 + $0x148] sm:$0xff]
  %v2453 = vld [vmem:[%s5 + $0x150] sm:$0xff]
  %v2454 = vld [vmem:[%s5 + $0x158] sm:$0xff]
  %v2455 = vld [vmem:[%s5 + $0x160] sm:$0xff]
  %v2456 = vld [vmem:[%s5 + $0x168] sm:$0xff]
  %v2457 = vld [vmem:[%s5 + $0x170] sm:$0xff]
  %v2458 = vld [vmem:[%s5 + $0x178] sm:$0xff]
  %v2459 = vld [vmem:[%s6] sm:$0x1]
  %v2460 = vrot.slane %v2408, 7
  %v2461 = vsel %vm951, 0.0, %v2460
  %v2462 = vrot.slane %v2408, 1
  %v2463 = vsel %vm954, 0.0, %v2462
  %v2465 = vlaneseq
  %v2466 = vshrl.u32 %v2465, 7
  %v2467 = vsub.s32 0, %v2466
  %v2468 = vrot.slane %v2459, %v2467
  %2470 = vmatprep.subr.mxu0 0.0
  %2471 = vmatpush1.msra.mxu0 %v2411
  %2472 = vmatprep.subr.mxu0 0.0
  %2473 = vmatpush1.msra.mxu0 %v2412
  %2474 = vmatprep.subr.mxu0 0.0
  %2475 = vmatpush1.msra.mxu0 %v2413
  %2476 = vmatprep.subr.mxu0 0.0
  %2477 = vmatpush1.msra.mxu0 %v2414
  %2478 = vmatprep.subr.mxu0 0.0
  %2479 = vmatpush1.msra.mxu0 %v2415
  %2480 = vmatprep.subr.mxu0 0.0
  %2481 = vmatpush1.msra.mxu0 %v2416
  %2482 = vmatprep.subr.mxu0 0.0
  %2483 = vmatpush1.msra.mxu0 %v2417
  %2484 = vmatprep.subr.mxu0 0.0
  %2485 = vmatpush1.msra.mxu0 %v2418
  %2486 = vmatprep.subr.mxu0 0.0
  %2487 = vmatpush1.msra.mxu0 %v2419
  %2488 = vmatprep.subr.mxu0 0.0
  %2489 = vmatpush1.msra.mxu0 %v2420
  %2490 = vmatprep.subr.mxu0 0.0
  %2491 = vmatpush1.msra.mxu0 %v2421
  %2492 = vmatprep.subr.mxu0 0.0
  %2493 = vmatpush1.msra.mxu0 %v2422
  %2494 = vmatprep.subr.mxu0 0.0
  %2495 = vmatpush1.msra.mxu0 %v2423
  %2496 = vmatprep.subr.mxu0 0.0
  %2497 = vmatpush1.msra.mxu0 %v2424
  %2498 = vmatprep.subr.mxu0 0.0
  %2499 = vmatpush1.msra.mxu0 %v2425
  %2500 = vmatprep.subr.mxu0 0.0
  %2501 = vmatpush1.msra.mxu0 %v2426
  %2502 = vmatprep.subr.mxu0 0.0
  %2503 = vmatpush1.msra.mxu0 %v2427
  %2504 = vmatprep.subr.mxu0 0.0
  %2505 = vmatpush1.msra.mxu0 %v2428
  %2506 = vmatprep.subr.mxu0 0.0
  %2507 = vmatpush1.msra.mxu0 %v2429
  %2508 = vmatprep.subr.mxu0 0.0
  %2509 = vmatpush1.msra.mxu0 %v2430
  %2510 = vmatprep.subr.mxu0 0.0
  %2511 = vmatpush1.msra.mxu0 %v2431
  %2512 = vmatprep.subr.mxu0 0.0
  %2513 = vmatpush1.msra.mxu0 %v2432
  %2514 = vmatprep.subr.mxu0 0.0
  %2515 = vmatpush1.msra.mxu0 %v2433
  %2516 = vmatprep.subr.mxu0 0.0
  %2517 = vmatpush1.msra.mxu0 %v2434
  %2518 = vmatprep.subr.mxu0 0.0
  %2519 = vmatpush1.msra.mxu0 %v2435
  %2520 = vmatprep.subr.mxu0 0.0
  %2521 = vmatpush1.msra.mxu0 %v2436
  %2522 = vmatprep.subr.mxu0 0.0
  %2523 = vmatpush1.msra.mxu0 %v2437
  %2524 = vmatprep.subr.mxu0 0.0
  %2525 = vmatpush1.msra.mxu0 %v2438
  %2526 = vmatprep.subr.mxu0 0.0
  %2527 = vmatpush1.msra.mxu0 %v2439
  %2528 = vmatprep.subr.mxu0 0.0
  %2529 = vmatpush1.msra.mxu0 %v2440
  %2530 = vmatprep.subr.mxu0 0.0
  %2531 = vmatpush1.msra.mxu0 %v2441
  %2532 = vmatprep.subr.mxu0 0.0
  %2533 = vmatpush1.msra.mxu0 %v2442
  %2534 = vmatprep.mubr.f32.mxu0 %v2408
  %2535 = vmatmul.mubr.f32.gmra.mrb[0].mxu0 %v2461
  %v2536 = vpop.f32.mrb[0].mxu0
  %v2537 = vadd.f32 %v2468, %v2536
  %v2538 = vpop.f32.mrb[0].mxu0
  %2539 = vdwg.mxu0
  %2540 = vmatprep.subr.mxu0 0.0
  %2541 = vmatpush1.msra.mxu0 %v2443
  %2542 = vmatprep.subr.mxu0 0.0
  %2543 = vmatpush1.msra.mxu0 %v2444
  %2544 = vmatprep.subr.mxu0 0.0
  %2545 = vmatpush1.msra.mxu0 %v2445
  %2546 = vmatprep.subr.mxu0 0.0
  %2547 = vmatpush1.msra.mxu0 %v2446
  %2548 = vmatprep.subr.mxu0 0.0
  %2549 = vmatpush1.msra.mxu0 %v2447
  %2550 = vmatprep.subr.mxu0 0.0
  %2551 = vmatpush1.msra.mxu0 %v2448
  %2552 = vmatprep.subr.mxu0 0.0
  %2553 = vmatpush1.msra.mxu0 %v2449
  %2554 = vmatprep.subr.mxu0 0.0
  %2555 = vmatpush1.msra.mxu0 %v2450
  %2556 = vmatprep.subr.mxu0 0.0
  %2557 = vmatpush1.msra.mxu0 %v2451
  %2558 = vmatprep.subr.mxu0 0.0
  %2559 = vmatpush1.msra.mxu0 %v2452
  %2560 = vmatprep.subr.mxu0 0.0
  %2561 = vmatpush1.msra.mxu0 %v2453
  %2562 = vmatprep.subr.mxu0 0.0
  %2563 = vmatpush1.msra.mxu0 %v2454
  %2564 = vmatprep.subr.mxu0 0.0
  %2565 = vmatpush1.msra.mxu0 %v2455
  %2566 = vmatprep.subr.mxu0 0.0
  %2567 = vmatpush1.msra.mxu0 %v2456
  %2568 = vmatprep.subr.mxu0 0.0
  %2569 = vmatpush1.msra.mxu0 %v2457
  %2570 = vmatprep.subr.mxu0 0.0
  %2571 = vmatpush1.msra.mxu0 %v2458
  %2572 = vmatprep.subr.mxu0 0.0
  %2573 = vmatpush1.msra.mxu0 0.0
  %2574 = vmatprep.subr.mxu0 0.0
  %2575 = vmatpush1.msra.mxu0 0.0
  %2576 = vmatprep.subr.mxu0 0.0
  %2577 = vmatpush1.msra.mxu0 0.0
  %2578 = vmatprep.subr.mxu0 0.0
  %2579 = vmatpush1.msra.mxu0 0.0
  %2580 = vmatprep.subr.mxu0 0.0
  %2581 = vmatpush1.msra.mxu0 0.0
  %2582 = vmatprep.subr.mxu0 0.0
  %2583 = vmatpush1.msra.mxu0 0.0
  %2584 = vmatprep.subr.mxu0 0.0
  %2585 = vmatpush1.msra.mxu0 0.0
  %2586 = vmatprep.subr.mxu0 0.0
  %2587 = vmatpush1.msra.mxu0 0.0
  %2588 = vmatprep.subr.mxu0 0.0
  %2589 = vmatpush1.msra.mxu0 0.0
  %2590 = vmatprep.subr.mxu0 0.0
  %2591 = vmatpush1.msra.mxu0 0.0
  %2592 = vmatprep.subr.mxu0 0.0
  %2593 = vmatpush1.msra.mxu0 0.0
  %2594 = vmatprep.subr.mxu0 0.0
  %2595 = vmatpush1.msra.mxu0 0.0
  %2596 = vmatprep.subr.mxu0 0.0
  %2597 = vmatpush1.msra.mxu0 0.0
  %2598 = vmatprep.subr.mxu0 0.0
  %2599 = vmatpush1.msra.mxu0 0.0
  %2600 = vmatprep.subr.mxu0 0.0
  %2601 = vmatpush1.msra.mxu0 0.0
  %2602 = vmatprep.subr.mxu0 0.0
  %2603 = vmatpush1.msra.mxu0 0.0
  %2604 = vmatprep.mubr.f32.mxu0 0.0
  %2605 = vmatmul.mubr.f32.gmra.mrb[0].mxu0 %v2463
  %v2606 = vpop.f32.mrb[0].mxu0
  %v2607 = vadd.f32 %v2537, %v2606
  %v2608 = vpop.f32.mrb[0].mxu0
  %2609 = vdwg.mxu0
  %s2610 = scalar_lea.vmem %s7, 32
  %v2611 = vld [vmem:[%s2610] sm:$0xff]
  %v2612 = vld [vmem:[%s2610 + $0x8] sm:$0xff]
  %s2613 = scalar_lea.vmem %s8, 128
  %v2614 = vld [vmem:[%s2613] sm:$0xff]
  %v2615 = vld [vmem:[%s2613 + $0x8] sm:$0xff]
  %v2616 = vld [vmem:[%s2613 + $0x10] sm:$0xff]
  %v2617 = vld [vmem:[%s2613 + $0x18] sm:$0xff]
  %v2618 = vld [vmem:[%s2613 + $0x20] sm:$0xff]
  %v2619 = vld [vmem:[%s2613 + $0x28] sm:$0xff]
  %v2620 = vld [vmem:[%s2613 + $0x30] sm:$0xff]
  %v2621 = vld [vmem:[%s2613 + $0x38] sm:$0xff]
  %v2622 = vld [vmem:[%s2613 + $0x40] sm:$0xff]
  %v2623 = vld [vmem:[%s2613 + $0x48] sm:$0xff]
  %v2624 = vld [vmem:[%s2613 + $0x50] sm:$0xff]
  %v2625 = vld [vmem:[%s2613 + $0x58] sm:$0xff]
  %v2626 = vld [vmem:[%s2613 + $0x60] sm:$0xff]
  %v2627 = vld [vmem:[%s2613 + $0x68] sm:$0xff]
  %v2628 = vld [vmem:[%s2613 + $0x70] sm:$0xff]
  %v2629 = vld [vmem:[%s2613 + $0x78] sm:$0xff]
  %vm2630 = vcmp.eq.f32.partialorder %v911, 0.0
  %v2631 = vsel %vm2630, %v2607, 0.0
  %vm2632 = vcmp.eq.f32.partialorder %v911, 1.0
  %v2633 = vsel %vm2632, %v2607, 0.0
  %2635 = vrot.lane.b32.xlu0 %v2633, 64
  %v2636 = vpop.permute.xlu0 %2635
  %v2638 = vsel %vm188, %v2631, %v2636
  %vm2639 = vcmp.eq.f32.partialorder %v911, 2.0
  %v2640 = vsel %vm2639, %v2607, 0.0
  %vm2641 = vcmp.eq.f32.partialorder %v911, 3.0
  %v2642 = vsel %vm2641, %v2607, 0.0
  %2644 = vrot.lane.b32.xlu0 %v2642, 64
  %v2645 = vpop.permute.xlu0 %2644
  %v2647 = vsel %vm188, %v2640, %v2645
  %2648 = vmatprep.subr.mxu0 0.0
  %2649 = vmatpush1.msra.mxu0 %v2614
  %2650 = vmatprep.subr.mxu0 0.0
  %2651 = vmatpush1.msra.mxu0 %v2615
  %2652 = vmatprep.subr.mxu0 0.0
  %2653 = vmatpush1.msra.mxu0 %v2616
  %2654 = vmatprep.subr.mxu0 0.0
  %2655 = vmatpush1.msra.mxu0 %v2617
  %2656 = vmatprep.subr.mxu0 0.0
  %2657 = vmatpush1.msra.mxu0 %v2618
  %2658 = vmatprep.subr.mxu0 0.0
  %2659 = vmatpush1.msra.mxu0 %v2619
  %2660 = vmatprep.subr.mxu0 0.0
  %2661 = vmatpush1.msra.mxu0 %v2620
  %2662 = vmatprep.subr.mxu0 0.0
  %2663 = vmatpush1.msra.mxu0 %v2621
  %2664 = vmatprep.subr.mxu0 0.0
  %2665 = vmatpush1.msra.mxu0 %v2622
  %2666 = vmatprep.subr.mxu0 0.0
  %2667 = vmatpush1.msra.mxu0 %v2623
  %2668 = vmatprep.subr.mxu0 0.0
  %2669 = vmatpush1.msra.mxu0 %v2624
  %2670 = vmatprep.subr.mxu0 0.0
  %2671 = vmatpush1.msra.mxu0 %v2625
  %2672 = vmatprep.subr.mxu0 0.0
  %2673 = vmatpush1.msra.mxu0 %v2626
  %2674 = vmatprep.subr.mxu0 0.0
  %2675 = vmatpush1.msra.mxu0 %v2627
  %2676 = vmatprep.subr.mxu0 0.0
  %2677 = vmatpush1.msra.mxu0 %v2628
  %2678 = vmatprep.subr.mxu0 0.0
  %2679 = vmatpush1.msra.mxu0 %v2629
  %2680 = vmatprep.subr.mxu0 0.0
  %2681 = vmatpush1.msra.mxu0 0.0
  %2682 = vmatprep.subr.mxu0 0.0
  %2683 = vmatpush1.msra.mxu0 0.0
  %2684 = vmatprep.subr.mxu0 0.0
  %2685 = vmatpush1.msra.mxu0 0.0
  %2686 = vmatprep.subr.mxu0 0.0
  %2687 = vmatpush1.msra.mxu0 0.0
  %2688 = vmatprep.subr.mxu0 0.0
  %2689 = vmatpush1.msra.mxu0 0.0
  %2690 = vmatprep.subr.mxu0 0.0
  %2691 = vmatpush1.msra.mxu0 0.0
  %2692 = vmatprep.subr.mxu0 0.0
  %2693 = vmatpush1.msra.mxu0 0.0
  %2694 = vmatprep.subr.mxu0 0.0
  %2695 = vmatpush1.msra.mxu0 0.0
  %2696 = vmatprep.subr.mxu0 0.0
  %2697 = vmatpush1.msra.mxu0 0.0
  %2698 = vmatprep.subr.mxu0 0.0
  %2699 = vmatpush1.msra.mxu0 0.0
  %2700 = vmatprep.subr.mxu0 0.0
  %2701 = vmatpush1.msra.mxu0 0.0
  %2702 = vmatprep.subr.mxu0 0.0
  %2703 = vmatpush1.msra.mxu0 0.0
  %2704 = vmatprep.subr.mxu0 0.0
  %2705 = vmatpush1.msra.mxu0 0.0
  %2706 = vmatprep.subr.mxu0 0.0
  %2707 = vmatpush1.msra.mxu0 0.0
  %2708 = vmatprep.subr.mxu0 0.0
  %2709 = vmatpush1.msra.mxu0 0.0
  %2710 = vmatprep.subr.mxu0 0.0
  %2711 = vmatpush1.msra.mxu0 0.0
  %2712 = vmatprep.mubr.f32.mxu0 0.0
  %2713 = vmatmul.mubr.f32.gmra.mrb[0].mxu0 %v2638
  %v2714 = vpop.f32.mrb[0].mxu0
  %v2715 = vadd.f32 0.0, %v2714
  %v2716 = vpop.f32.mrb[0].mxu0
  %2717 = vdwg.mxu0
  %2718 = vmatprep.subr.mxu0 0.0
  %2719 = vmatpush1.msra.mxu0 %v2614
  %2720 = vmatprep.subr.mxu0 0.0
  %2721 = vmatpush1.msra.mxu0 %v2615
  %2722 = vmatprep.subr.mxu0 0.0
  %2723 = vmatpush1.msra.mxu0 %v2616
  %2724 = vmatprep.subr.mxu0 0.0
  %2725 = vmatpush1.msra.mxu0 %v2617
  %2726 = vmatprep.subr.mxu0 0.0
  %2727 = vmatpush1.msra.mxu0 %v2618
  %2728 = vmatprep.subr.mxu0 0.0
  %2729 = vmatpush1.msra.mxu0 %v2619
  %2730 = vmatprep.subr.mxu0 0.0
  %2731 = vmatpush1.msra.mxu0 %v2620
  %2732 = vmatprep.subr.mxu0 0.0
  %2733 = vmatpush1.msra.mxu0 %v2621
  %2734 = vmatprep.subr.mxu0 0.0
  %2735 = vmatpush1.msra.mxu0 %v2622
  %2736 = vmatprep.subr.mxu0 0.0
  %2737 = vmatpush1.msra.mxu0 %v2623
  %2738 = vmatprep.subr.mxu0 0.0
  %2739 = vmatpush1.msra.mxu0 %v2624
  %2740 = vmatprep.subr.mxu0 0.0
  %2741 = vmatpush1.msra.mxu0 %v2625
  %2742 = vmatprep.subr.mxu0 0.0
  %2743 = vmatpush1.msra.mxu0 %v2626
  %2744 = vmatprep.subr.mxu0 0.0
  %2745 = vmatpush1.msra.mxu0 %v2627
  %2746 = vmatprep.subr.mxu0 0.0
  %2747 = vmatpush1.msra.mxu0 %v2628
  %2748 = vmatprep.subr.mxu0 0.0
  %2749 = vmatpush1.msra.mxu0 %v2629
  %2750 = vmatprep.subr.mxu0 0.0
  %2751 = vmatpush1.msra.mxu0 0.0
  %2752 = vmatprep.subr.mxu0 0.0
  %2753 = vmatpush1.msra.mxu0 0.0
  %2754 = vmatprep.subr.mxu0 0.0
  %2755 = vmatpush1.msra.mxu0 0.0
  %2756 = vmatprep.subr.mxu0 0.0
  %2757 = vmatpush1.msra.mxu0 0.0
  %2758 = vmatprep.subr.mxu0 0.0
  %2759 = vmatpush1.msra.mxu0 0.0
  %2760 = vmatprep.subr.mxu0 0.0
  %2761 = vmatpush1.msra.mxu0 0.0
  %2762 = vmatprep.subr.mxu0 0.0
  %2763 = vmatpush1.msra.mxu0 0.0
  %2764 = vmatprep.subr.mxu0 0.0
  %2765 = vmatpush1.msra.mxu0 0.0
  %2766 = vmatprep.subr.mxu0 0.0
  %2767 = vmatpush1.msra.mxu0 0.0
  %2768 = vmatprep.subr.mxu0 0.0
  %2769 = vmatpush1.msra.mxu0 0.0
  %2770 = vmatprep.subr.mxu0 0.0
  %2771 = vmatpush1.msra.mxu0 0.0
  %2772 = vmatprep.subr.mxu0 0.0
  %2773 = vmatpush1.msra.mxu0 0.0
  %2774 = vmatprep.subr.mxu0 0.0
  %2775 = vmatpush1.msra.mxu0 0.0
  %2776 = vmatprep.subr.mxu0 0.0
  %2777 = vmatpush1.msra.mxu0 0.0
  %2778 = vmatprep.subr.mxu0 0.0
  %2779 = vmatpush1.msra.mxu0 0.0
  %2780 = vmatprep.subr.mxu0 0.0
  %2781 = vmatpush1.msra.mxu0 0.0
  %2782 = vmatprep.mubr.f32.mxu0 0.0
  %2783 = vmatmul.mubr.f32.gmra.mrb[0].mxu0 %v2647
  %v2784 = vpop.f32.mrb[0].mxu0
  %v2785 = vadd.f32 0.0, %v2784
  %v2786 = vpop.f32.mrb[0].mxu0
  %2787 = vdwg.mxu0
  %v2789 = vsel %vm737, %v2611, 0
  %v2792 = vsel %vm737, %v2612, 0
  %2794 = vmatprep.subr.mxu0 0.0
  %2795 = vmatpush1.msra.mxu0 %v2715
  %2796 = vmatprep.subr.mxu0 0.0
  %2797 = vmatpush1.msra.mxu0 %v2785
  %2798 = vmatprep.subr.mxu0 0.0
  %2799 = vmatpush1.msra.mxu0 0.0
  %2800 = vmatprep.subr.mxu0 0.0
  %2801 = vmatpush1.msra.mxu0 0.0
  %2802 = vmatprep.subr.mxu0 0.0
  %2803 = vmatpush1.msra.mxu0 0.0
  %2804 = vmatprep.subr.mxu0 0.0
  %2805 = vmatpush1.msra.mxu0 0.0
  %2806 = vmatprep.subr.mxu0 0.0
  %2807 = vmatpush1.msra.mxu0 0.0
  %2808 = vmatprep.subr.mxu0 0.0
  %2809 = vmatpush1.msra.mxu0 0.0
  %2810 = vmatprep.subr.mxu0 0.0
  %2811 = vmatpush1.msra.mxu0 0.0
  %2812 = vmatprep.subr.mxu0 0.0
  %2813 = vmatpush1.msra.mxu0 0.0
  %2814 = vmatprep.subr.mxu0 0.0
  %2815 = vmatpush1.msra.mxu0 0.0
  %2816 = vmatprep.subr.mxu0 0.0
  %2817 = vmatpush1.msra.mxu0 0.0
  %2818 = vmatprep.subr.mxu0 0.0
  %2819 = vmatpush1.msra.mxu0 0.0
  %2820 = vmatprep.subr.mxu0 0.0
  %2821 = vmatpush1.msra.mxu0 0.0
  %2822 = vmatprep.subr.mxu0 0.0
  %2823 = vmatpush1.msra.mxu0 0.0
  %2824 = vmatprep.subr.mxu0 0.0
  %2825 = vmatpush1.msra.mxu0 0.0
  %2826 = vmatprep.subr.mxu0 0.0
  %2827 = vmatpush1.msra.mxu0 0.0
  %2828 = vmatprep.subr.mxu0 0.0
  %2829 = vmatpush1.msra.mxu0 0.0
  %2830 = vmatprep.subr.mxu0 0.0
  %2831 = vmatpush1.msra.mxu0 0.0
  %2832 = vmatprep.subr.mxu0 0.0
  %2833 = vmatpush1.msra.mxu0 0.0
  %2834 = vmatprep.subr.mxu0 0.0
  %2835 = vmatpush1.msra.mxu0 0.0
  %2836 = vmatprep.subr.mxu0 0.0
  %2837 = vmatpush1.msra.mxu0 0.0
  %2838 = vmatprep.subr.mxu0 0.0
  %2839 = vmatpush1.msra.mxu0 0.0
  %2840 = vmatprep.subr.mxu0 0.0
  %2841 = vmatpush1.msra.mxu0 0.0
  %2842 = vmatprep.subr.mxu0 0.0
  %2843 = vmatpush1.msra.mxu0 0.0
  %2844 = vmatprep.subr.mxu0 0.0
  %2845 = vmatpush1.msra.mxu0 0.0
  %2846 = vmatprep.subr.mxu0 0.0
  %2847 = vmatpush1.msra.mxu0 0.0
  %2848 = vmatprep.subr.mxu0 0.0
  %2849 = vmatpush1.msra.mxu0 0.0
  %2850 = vmatprep.subr.mxu0 0.0
  %2851 = vmatpush1.msra.mxu0 0.0
  %2852 = vmatprep.subr.mxu0 0.0
  %2853 = vmatpush1.msra.mxu0 0.0
  %2854 = vmatprep.subr.mxu0 0.0
  %2855 = vmatpush1.msra.mxu0 0.0
  %2856 = vmatprep.subr.mxu0 0.0
  %2857 = vmatpush1.msra.mxu0 0.0
  %2858 = vmatprep.mubr.f32.mxu0 0.0
  %2859 = vmatmul.mubr.f32.gmra.mrb[0].mxu0 %v2789
  %v2860 = vpop.f32.mrb[0].mxu0
  %v2861 = vadd.f32 0.0, %v2860
  %v2862 = vpop.f32.mrb[0].mxu0
  %2863 = vmatprep.mubr.f32.mxu0 0.0
  %2864 = vmatmul.mubr.f32.gmra.mrb[0].mxu0 %v2792
  %v2865 = vpop.f32.mrb[0].mxu0
  %v2866 = vadd.f32 0.0, %v2865
  %v2867 = vpop.f32.mrb[0].mxu0
  %2868 = vdwg.mxu0
  %s2869 = scalar_lea.vmem %s5, 384
  %v2870 = vld [vmem:[%s2869] sm:$0xff]
  %v2871 = vld [vmem:[%s2869 + $0x8] sm:$0xff]
  %v2872 = vld [vmem:[%s2869 + $0x10] sm:$0xff]
  %v2873 = vld [vmem:[%s2869 + $0x18] sm:$0xff]
  %v2874 = vld [vmem:[%s2869 + $0x20] sm:$0xff]
  %v2875 = vld [vmem:[%s2869 + $0x28] sm:$0xff]
  %v2876 = vld [vmem:[%s2869 + $0x30] sm:$0xff]
  %v2877 = vld [vmem:[%s2869 + $0x38] sm:$0xff]
  %v2878 = vld [vmem:[%s2869 + $0x40] sm:$0xff]
  %v2879 = vld [vmem:[%s2869 + $0x48] sm:$0xff]
  %v2880 = vld [vmem:[%s2869 + $0x50] sm:$0xff]
  %v2881 = vld [vmem:[%s2869 + $0x58] sm:$0xff]
  %v2882 = vld [vmem:[%s2869 + $0x60] sm:$0xff]
  %v2883 = vld [vmem:[%s2869 + $0x68] sm:$0xff]
  %v2884 = vld [vmem:[%s2869 + $0x70] sm:$0xff]
  %v2885 = vld [vmem:[%s2869 + $0x78] sm:$0xff]
  %v2886 = vld [vmem:[%s2869 + $0x80] sm:$0xff]
  %v2887 = vld [vmem:[%s2869 + $0x88] sm:$0xff]
  %v2888 = vld [vmem:[%s2869 + $0x90] sm:$0xff]
  %v2889 = vld [vmem:[%s2869 + $0x98] sm:$0xff]
  %v2890 = vld [vmem:[%s2869 + $0xa0] sm:$0xff]
  %v2891 = vld [vmem:[%s2869 + $0xa8] sm:$0xff]
  %v2892 = vld [vmem:[%s2869 + $0xb0] sm:$0xff]
  %v2893 = vld [vmem:[%s2869 + $0xb8] sm:$0xff]
  %v2894 = vld [vmem:[%s2869 + $0xc0] sm:$0xff]
  %v2895 = vld [vmem:[%s2869 + $0xc8] sm:$0xff]
  %v2896 = vld [vmem:[%s2869 + $0xd0] sm:$0xff]
  %v2897 = vld [vmem:[%s2869 + $0xd8] sm:$0xff]
  %v2898 = vld [vmem:[%s2869 + $0xe0] sm:$0xff]
  %v2899 = vld [vmem:[%s2869 + $0xe8] sm:$0xff]
  %v2900 = vld [vmem:[%s2869 + $0xf0] sm:$0xff]
  %v2901 = vld [vmem:[%s2869 + $0xf8] sm:$0xff]
  %v2902 = vld [vmem:[%s2869 + $0x100] sm:$0xff]
  %v2903 = vld [vmem:[%s2869 + $0x108] sm:$0xff]
  %v2904 = vld [vmem:[%s2869 + $0x110] sm:$0xff]
  %v2905 = vld [vmem:[%s2869 + $0x118] sm:$0xff]
  %v2906 = vld [vmem:[%s2869 + $0x120] sm:$0xff]
  %v2907 = vld [vmem:[%s2869 + $0x128] sm:$0xff]
  %v2908 = vld [vmem:[%s2869 + $0x130] sm:$0xff]
  %v2909 = vld [vmem:[%s2869 + $0x138] sm:$0xff]
  %v2910 = vld [vmem:[%s2869 + $0x140] sm:$0xff]
  %v2911 = vld [vmem:[%s2869 + $0x148] sm:$0xff]
  %v2912 = vld [vmem:[%s2869 + $0x150] sm:$0xff]
  %v2913 = vld [vmem:[%s2869 + $0x158] sm:$0xff]
  %v2914 = vld [vmem:[%s2869 + $0x160] sm:$0xff]
  %v2915 = vld [vmem:[%s2869 + $0x168] sm:$0xff]
  %v2916 = vld [vmem:[%s2869 + $0x170] sm:$0xff]
  %v2917 = vld [vmem:[%s2869 + $0x178] sm:$0xff]
  %s2918 = scalar_lea.vmem %s6, 1
  %v2919 = vld [vmem:[%s2918] sm:$0x1]
  %v2920 = vrot.slane %v2861, 7
  %v2921 = vrot.slane %v2866, 7
  %v2922 = vsel %vm146, %v2920, %v2921
  %v2923 = vsel %vm146, %v2921, %v2920
  %v2924 = vsel %vm598, 0.0, %v2923
  %v2925 = vsel %vm599, 0.0, %v2922
  %v2926 = vrot.slane %v2861, 1
  %v2927 = vrot.slane %v2866, 1
  %v2928 = vsel %vm163, %v2926, %v2927
  %v2929 = vsel %vm163, %v2927, %v2926
  %v2930 = vsel %vm606, 0.0, %v2928
  %v2931 = vsel %vm607, 0.0, %v2929
  %v2933 = vlaneseq
  %v2934 = vshrl.u32 %v2933, 7
  %v2935 = vsub.s32 0, %v2934
  %v2936 = vrot.slane %v2919, %v2935
  %2938 = vmatprep.subr.mxu0 0.0
  %2939 = vmatpush1.msra.mxu0 %v2870
  %2940 = vmatprep.subr.mxu0 0.0
  %2941 = vmatpush1.msra.mxu0 %v2871
  %2942 = vmatprep.subr.mxu0 0.0
  %2943 = vmatpush1.msra.mxu0 %v2872
  %2944 = vmatprep.subr.mxu0 0.0
  %2945 = vmatpush1.msra.mxu0 %v2873
  %2946 = vmatprep.subr.mxu0 0.0
  %2947 = vmatpush1.msra.mxu0 %v2874
  %2948 = vmatprep.subr.mxu0 0.0
  %2949 = vmatpush1.msra.mxu0 %v2875
  %2950 = vmatprep.subr.mxu0 0.0
  %2951 = vmatpush1.msra.mxu0 %v2876
  %2952 = vmatprep.subr.mxu0 0.0
  %2953 = vmatpush1.msra.mxu0 %v2877
  %2954 = vmatprep.subr.mxu0 0.0
  %2955 = vmatpush1.msra.mxu0 %v2878
  %2956 = vmatprep.subr.mxu0 0.0
  %2957 = vmatpush1.msra.mxu0 %v2879
  %2958 = vmatprep.subr.mxu0 0.0
  %2959 = vmatpush1.msra.mxu0 %v2880
  %2960 = vmatprep.subr.mxu0 0.0
  %2961 = vmatpush1.msra.mxu0 %v2881
  %2962 = vmatprep.subr.mxu0 0.0
  %2963 = vmatpush1.msra.mxu0 %v2882
  %2964 = vmatprep.subr.mxu0 0.0
  %2965 = vmatpush1.msra.mxu0 %v2883
  %2966 = vmatprep.subr.mxu0 0.0
  %2967 = vmatpush1.msra.mxu0 %v2884
  %2968 = vmatprep.subr.mxu0 0.0
  %2969 = vmatpush1.msra.mxu0 %v2885
  %2970 = vmatprep.subr.mxu0 0.0
  %2971 = vmatpush1.msra.mxu0 %v2886
  %2972 = vmatprep.subr.mxu0 0.0
  %2973 = vmatpush1.msra.mxu0 %v2887
  %2974 = vmatprep.subr.mxu0 0.0
  %2975 = vmatpush1.msra.mxu0 %v2888
  %2976 = vmatprep.subr.mxu0 0.0
  %2977 = vmatpush1.msra.mxu0 %v2889
  %2978 = vmatprep.subr.mxu0 0.0
  %2979 = vmatpush1.msra.mxu0 %v2890
  %2980 = vmatprep.subr.mxu0 0.0
  %2981 = vmatpush1.msra.mxu0 %v2891
  %2982 = vmatprep.subr.mxu0 0.0
  %2983 = vmatpush1.msra.mxu0 %v2892
  %2984 = vmatprep.subr.mxu0 0.0
  %2985 = vmatpush1.msra.mxu0 %v2893
  %2986 = vmatprep.subr.mxu0 0.0
  %2987 = vmatpush1.msra.mxu0 %v2894
  %2988 = vmatprep.subr.mxu0 0.0
  %2989 = vmatpush1.msra.mxu0 %v2895
  %2990 = vmatprep.subr.mxu0 0.0
  %2991 = vmatpush1.msra.mxu0 %v2896
  %2992 = vmatprep.subr.mxu0 0.0
  %2993 = vmatpush1.msra.mxu0 %v2897
  %2994 = vmatprep.subr.mxu0 0.0
  %2995 = vmatpush1.msra.mxu0 %v2898
  %2996 = vmatprep.subr.mxu0 0.0
  %2997 = vmatpush1.msra.mxu0 %v2899
  %2998 = vmatprep.subr.mxu0 0.0
  %2999 = vmatpush1.msra.mxu0 %v2900
  %3000 = vmatprep.subr.mxu0 0.0
  %3001 = vmatpush1.msra.mxu0 %v2901
  %3002 = vmatprep.mubr.f32.mxu0 %v2861
  %3003 = vmatmul.mubr.f32.gmra.mrb[0].mxu0 %v2924
  %v3004 = vpop.f32.mrb[0].mxu0
  %v3005 = vadd.f32 %v2936, %v3004
  %v3006 = vpop.f32.mrb[0].mxu0
  %3007 = vmatprep.mubr.f32.mxu0 %v2866
  %3008 = vmatmul.mubr.f32.gmra.mrb[0].mxu0 %v2925
  %v3009 = vpop.f32.mrb[0].mxu0
  %v3010 = vadd.f32 %v2936, %v3009
  %v3011 = vpop.f32.mrb[0].mxu0
  %3012 = vdwg.mxu0
  %3013 = vmatprep.subr.mxu0 0.0
  %3014 = vmatpush1.msra.mxu0 %v2902
  %3015 = vmatprep.subr.mxu0 0.0
  %3016 = vmatpush1.msra.mxu0 %v2903
  %3017 = vmatprep.subr.mxu0 0.0
  %3018 = vmatpush1.msra.mxu0 %v2904
  %3019 = vmatprep.subr.mxu0 0.0
  %3020 = vmatpush1.msra.mxu0 %v2905
  %3021 = vmatprep.subr.mxu0 0.0
  %3022 = vmatpush1.msra.mxu0 %v2906
  %3023 = vmatprep.subr.mxu0 0.0
  %3024 = vmatpush1.msra.mxu0 %v2907
  %3025 = vmatprep.subr.mxu0 0.0
  %3026 = vmatpush1.msra.mxu0 %v2908
  %3027 = vmatprep.subr.mxu0 0.0
  %3028 = vmatpush1.msra.mxu0 %v2909
  %3029 = vmatprep.subr.mxu0 0.0
  %3030 = vmatpush1.msra.mxu0 %v2910
  %3031 = vmatprep.subr.mxu0 0.0
  %3032 = vmatpush1.msra.mxu0 %v2911
  %3033 = vmatprep.subr.mxu0 0.0
  %3034 = vmatpush1.msra.mxu0 %v2912
  %3035 = vmatprep.subr.mxu0 0.0
  %3036 = vmatpush1.msra.mxu0 %v2913
  %3037 = vmatprep.subr.mxu0 0.0
  %3038 = vmatpush1.msra.mxu0 %v2914
  %3039 = vmatprep.subr.mxu0 0.0
  %3040 = vmatpush1.msra.mxu0 %v2915
  %3041 = vmatprep.subr.mxu0 0.0
  %3042 = vmatpush1.msra.mxu0 %v2916
  %3043 = vmatprep.subr.mxu0 0.0
  %3044 = vmatpush1.msra.mxu0 %v2917
  %3045 = vmatprep.subr.mxu0 0.0
  %3046 = vmatpush1.msra.mxu0 0.0
  %3047 = vmatprep.subr.mxu0 0.0
  %3048 = vmatpush1.msra.mxu0 0.0
  %3049 = vmatprep.subr.mxu0 0.0
  %3050 = vmatpush1.msra.mxu0 0.0
  %3051 = vmatprep.subr.mxu0 0.0
  %3052 = vmatpush1.msra.mxu0 0.0
  %3053 = vmatprep.subr.mxu0 0.0
  %3054 = vmatpush1.msra.mxu0 0.0
  %3055 = vmatprep.subr.mxu0 0.0
  %3056 = vmatpush1.msra.mxu0 0.0
  %3057 = vmatprep.subr.mxu0 0.0
  %3058 = vmatpush1.msra.mxu0 0.0
  %3059 = vmatprep.subr.mxu0 0.0
  %3060 = vmatpush1.msra.mxu0 0.0
  %3061 = vmatprep.subr.mxu0 0.0
  %3062 = vmatpush1.msra.mxu0 0.0
  %3063 = vmatprep.subr.mxu0 0.0
  %3064 = vmatpush1.msra.mxu0 0.0
  %3065 = vmatprep.subr.mxu0 0.0
  %3066 = vmatpush1.msra.mxu0 0.0
  %3067 = vmatprep.subr.mxu0 0.0
  %3068 = vmatpush1.msra.mxu0 0.0
  %3069 = vmatprep.subr.mxu0 0.0
  %3070 = vmatpush1.msra.mxu0 0.0
  %3071 = vmatprep.subr.mxu0 0.0
  %3072 = vmatpush1.msra.mxu0 0.0
  %3073 = vmatprep.subr.mxu0 0.0
  %3074 = vmatpush1.msra.mxu0 0.0
  %3075 = vmatprep.subr.mxu0 0.0
  %3076 = vmatpush1.msra.mxu0 0.0
  %3077 = vmatprep.mubr.f32.mxu0 0.0
  %3078 = vmatmul.mubr.f32.gmra.mrb[0].mxu0 %v2930
  %v3079 = vpop.f32.mrb[0].mxu0
  %v3080 = vadd.f32 %v3005, %v3079
  %v3081 = vpop.f32.mrb[0].mxu0
  %3082 = vmatprep.mubr.f32.mxu0 0.0
  %3083 = vmatmul.mubr.f32.gmra.mrb[0].mxu0 %v2931
  %v3084 = vpop.f32.mrb[0].mxu0
  %v3085 = vadd.f32 %v3010, %v3084
  %v3086 = vpop.f32.mrb[0].mxu0
  %3087 = vdwg.mxu0
  %s3088 = scalar_lea.vmem %s7, 64
  %v3089 = vld [vmem:[%s3088] sm:$0xff]
  %v3090 = vld [vmem:[%s3088 + $0x8] sm:$0xff]
  %v3091 = vld [vmem:[%s3088 + $0x10] sm:$0xff]
  %v3092 = vld [vmem:[%s3088 + $0x18] sm:$0xff]
  %s3093 = scalar_lea.vmem %s8, 256
  %v3094 = vld [vmem:[%s3093] sm:$0xff]
  %v3095 = vld [vmem:[%s3093 + $0x8] sm:$0xff]
  %v3096 = vld [vmem:[%s3093 + $0x10] sm:$0xff]
  %v3097 = vld [vmem:[%s3093 + $0x18] sm:$0xff]
  %v3098 = vld [vmem:[%s3093 + $0x20] sm:$0xff]
  %v3099 = vld [vmem:[%s3093 + $0x28] sm:$0xff]
  %v3100 = vld [vmem:[%s3093 + $0x30] sm:$0xff]
  %v3101 = vld [vmem:[%s3093 + $0x38] sm:$0xff]
  %v3102 = vld [vmem:[%s3093 + $0x40] sm:$0xff]
  %v3103 = vld [vmem:[%s3093 + $0x48] sm:$0xff]
  %v3104 = vld [vmem:[%s3093 + $0x50] sm:$0xff]
  %v3105 = vld [vmem:[%s3093 + $0x58] sm:$0xff]
  %v3106 = vld [vmem:[%s3093 + $0x60] sm:$0xff]
  %v3107 = vld [vmem:[%s3093 + $0x68] sm:$0xff]
  %v3108 = vld [vmem:[%s3093 + $0x70] sm:$0xff]
  %v3109 = vld [vmem:[%s3093 + $0x78] sm:$0xff]
  %vm3110 = vcmp.eq.f32.partialorder %v545, 0.0
  %vm3111 = vcmp.eq.f32.partialorder %v546, 0.0
  %v3112 = vsel %vm3110, %v3080, 0.0
  %v3113 = vsel %vm3111, %v3085, 0.0
  %vm3114 = vcmp.eq.f32.partialorder %v545, 1.0
  %vm3115 = vcmp.eq.f32.partialorder %v546, 1.0
  %v3116 = vsel %vm3114, %v3080, 0.0
  %v3117 = vsel %vm3115, %v3085, 0.0
  %3120 = vrot.lane.b32.xlu0 %v3116, 64
  %v3121 = vpop.permute.xlu0 %3120
  %3122 = vrot.lane.b32.xlu0 %v3117, 64
  %v3123 = vpop.permute.xlu0 %3122
  %v3126 = vsel %vm188, %v3112, %v3121
  %v3127 = vsel %vm188, %v3113, %v3123
  %vm3128 = vcmp.eq.f32.partialorder %v545, 2.0
  %vm3129 = vcmp.eq.f32.partialorder %v546, 2.0
  %v3130 = vsel %vm3128, %v3080, 0.0
  %v3131 = vsel %vm3129, %v3085, 0.0
  %vm3132 = vcmp.eq.f32.partialorder %v545, 3.0
  %vm3133 = vcmp.eq.f32.partialorder %v546, 3.0
  %v3134 = vsel %vm3132, %v3080, 0.0
  %v3135 = vsel %vm3133, %v3085, 0.0
  %3138 = vrot.lane.b32.xlu0 %v3134, 64
  %v3139 = vpop.permute.xlu0 %3138
  %3140 = vrot.lane.b32.xlu0 %v3135, 64
  %v3141 = vpop.permute.xlu0 %3140
  %v3144 = vsel %vm188, %v3130, %v3139
  %v3145 = vsel %vm188, %v3131, %v3141
  %3146 = vmatprep.subr.mxu0 0.0
  %3147 = vmatpush1.msra.mxu0 %v3094
  %3148 = vmatprep.subr.mxu0 0.0
  %3149 = vmatpush1.msra.mxu0 %v3095
  %3150 = vmatprep.subr.mxu0 0.0
  %3151 = vmatpush1.msra.mxu0 %v3096
  %3152 = vmatprep.subr.mxu0 0.0
  %3153 = vmatpush1.msra.mxu0 %v3097
  %3154 = vmatprep.subr.mxu0 0.0
  %3155 = vmatpush1.msra.mxu0 %v3098
  %3156 = vmatprep.subr.mxu0 0.0
  %3157 = vmatpush1.msra.mxu0 %v3099
  %3158 = vmatprep.subr.mxu0 0.0
  %3159 = vmatpush1.msra.mxu0 %v3100
  %3160 = vmatprep.subr.mxu0 0.0
  %3161 = vmatpush1.msra.mxu0 %v3101
  %3162 = vmatprep.subr.mxu0 0.0
  %3163 = vmatpush1.msra.mxu0 %v3102
  %3164 = vmatprep.subr.mxu0 0.0
  %3165 = vmatpush1.msra.mxu0 %v3103
  %3166 = vmatprep.subr.mxu0 0.0
  %3167 = vmatpush1.msra.mxu0 %v3104
  %3168 = vmatprep.subr.mxu0 0.0
  %3169 = vmatpush1.msra.mxu0 %v3105
  %3170 = vmatprep.subr.mxu0 0.0
  %3171 = vmatpush1.msra.mxu0 %v3106
  %3172 = vmatprep.subr.mxu0 0.0
  %3173 = vmatpush1.msra.mxu0 %v3107
  %3174 = vmatprep.subr.mxu0 0.0
  %3175 = vmatpush1.msra.mxu0 %v3108
  %3176 = vmatprep.subr.mxu0 0.0
  %3177 = vmatpush1.msra.mxu0 %v3109
  %3178 = vmatprep.subr.mxu0 0.0
  %3179 = vmatpush1.msra.mxu0 0.0
  %3180 = vmatprep.subr.mxu0 0.0
  %3181 = vmatpush1.msra.mxu0 0.0
  %3182 = vmatprep.subr.mxu0 0.0
  %3183 = vmatpush1.msra.mxu0 0.0
  %3184 = vmatprep.subr.mxu0 0.0
  %3185 = vmatpush1.msra.mxu0 0.0
  %3186 = vmatprep.subr.mxu0 0.0
  %3187 = vmatpush1.msra.mxu0 0.0
  %3188 = vmatprep.subr.mxu0 0.0
  %3189 = vmatpush1.msra.mxu0 0.0
  %3190 = vmatprep.subr.mxu0 0.0
  %3191 = vmatpush1.msra.mxu0 0.0
  %3192 = vmatprep.subr.mxu0 0.0
  %3193 = vmatpush1.msra.mxu0 0.0
  %3194 = vmatprep.subr.mxu0 0.0
  %3195 = vmatpush1.msra.mxu0 0.0
  %3196 = vmatprep.subr.mxu0 0.0
  %3197 = vmatpush1.msra.mxu0 0.0
  %3198 = vmatprep.subr.mxu0 0.0
  %3199 = vmatpush1.msra.mxu0 0.0
  %3200 = vmatprep.subr.mxu0 0.0
  %3201 = vmatpush1.msra.mxu0 0.0
  %3202 = vmatprep.subr.mxu0 0.0
  %3203 = vmatpush1.msra.mxu0 0.0
  %3204 = vmatprep.subr.mxu0 0.0
  %3205 = vmatpush1.msra.mxu0 0.0
  %3206 = vmatprep.subr.mxu0 0.0
  %3207 = vmatpush1.msra.mxu0 0.0
  %3208 = vmatprep.subr.mxu0 0.0
  %3209 = vmatpush1.msra.mxu0 0.0
  %3210 = vmatprep.mubr.f32.mxu0 0.0
  %3211 = vmatmul.mubr.f32.gmra.mrb[0].mxu0 %v3126
  %v3212 = vpop.f32.mrb[0].mxu0
  %v3213 = vadd.f32 0.0, %v3212
  %v3214 = vpop.f32.mrb[0].mxu0
  %3215 = vmatprep.mubr.f32.mxu0 0.0
  %3216 = vmatmul.mubr.f32.gmra.mrb[0].mxu0 %v3127
  %v3217 = vpop.f32.mrb[0].mxu0
  %v3218 = vadd.f32 0.0, %v3217
  %v3219 = vpop.f32.mrb[0].mxu0
  %3220 = vdwg.mxu0
  %3221 = vmatprep.subr.mxu0 0.0
  %3222 = vmatpush1.msra.mxu0 %v3094
  %3223 = vmatprep.subr.mxu0 0.0
  %3224 = vmatpush1.msra.mxu0 %v3095
  %3225 = vmatprep.subr.mxu0 0.0
  %3226 = vmatpush1.msra.mxu0 %v3096
  %3227 = vmatprep.subr.mxu0 0.0
  %3228 = vmatpush1.msra.mxu0 %v3097
  %3229 = vmatprep.subr.mxu0 0.0
  %3230 = vmatpush1.msra.mxu0 %v3098
  %3231 = vmatprep.subr.mxu0 0.0
  %3232 = vmatpush1.msra.mxu0 %v3099
  %3233 = vmatprep.subr.mxu0 0.0
  %3234 = vmatpush1.msra.mxu0 %v3100
  %3235 = vmatprep.subr.mxu0 0.0
  %3236 = vmatpush1.msra.mxu0 %v3101
  %3237 = vmatprep.subr.mxu0 0.0
  %3238 = vmatpush1.msra.mxu0 %v3102
  %3239 = vmatprep.subr.mxu0 0.0
  %3240 = vmatpush1.msra.mxu0 %v3103
  %3241 = vmatprep.subr.mxu0 0.0
  %3242 = vmatpush1.msra.mxu0 %v3104
  %3243 = vmatprep.subr.mxu0 0.0
  %3244 = vmatpush1.msra.mxu0 %v3105
  %3245 = vmatprep.subr.mxu0 0.0
  %3246 = vmatpush1.msra.mxu0 %v3106
  %3247 = vmatprep.subr.mxu0 0.0
  %3248 = vmatpush1.msra.mxu0 %v3107
  %3249 = vmatprep.subr.mxu0 0.0
  %3250 = vmatpush1.msra.mxu0 %v3108
  %3251 = vmatprep.subr.mxu0 0.0
  %3252 = vmatpush1.msra.mxu0 %v3109
  %3253 = vmatprep.subr.mxu0 0.0
  %3254 = vmatpush1.msra.mxu0 0.0
  %3255 = vmatprep.subr.mxu0 0.0
  %3256 = vmatpush1.msra.mxu0 0.0
  %3257 = vmatprep.subr.mxu0 0.0
  %3258 = vmatpush1.msra.mxu0 0.0
  %3259 = vmatprep.subr.mxu0 0.0
  %3260 = vmatpush1.msra.mxu0 0.0
  %3261 = vmatprep.subr.mxu0 0.0
  %3262 = vmatpush1.msra.mxu0 0.0
  %3263 = vmatprep.subr.mxu0 0.0
  %3264 = vmatpush1.msra.mxu0 0.0
  %3265 = vmatprep.subr.mxu0 0.0
  %3266 = vmatpush1.msra.mxu0 0.0
  %3267 = vmatprep.subr.mxu0 0.0
  %3268 = vmatpush1.msra.mxu0 0.0
  %3269 = vmatprep.subr.mxu0 0.0
  %3270 = vmatpush1.msra.mxu0 0.0
  %3271 = vmatprep.subr.mxu0 0.0
  %3272 = vmatpush1.msra.mxu0 0.0
  %3273 = vmatprep.subr.mxu0 0.0
  %3274 = vmatpush1.msra.mxu0 0.0
  %3275 = vmatprep.subr.mxu0 0.0
  %3276 = vmatpush1.msra.mxu0 0.0
  %3277 = vmatprep.subr.mxu0 0.0
  %3278 = vmatpush1.msra.mxu0 0.0
  %3279 = vmatprep.subr.mxu0 0.0
  %3280 = vmatpush1.msra.mxu0 0.0
  %3281 = vmatprep.subr.mxu0 0.0
  %3282 = vmatpush1.msra.mxu0 0.0
  %3283 = vmatprep.subr.mxu0 0.0
  %3284 = vmatpush1.msra.mxu0 0.0
  %3285 = vmatprep.mubr.f32.mxu0 0.0
  %3286 = vmatmul.mubr.f32.gmra.mrb[0].mxu0 %v3144
  %v3287 = vpop.f32.mrb[0].mxu0
  %v3288 = vadd.f32 0.0, %v3287
  %v3289 = vpop.f32.mrb[0].mxu0
  %3290 = vmatprep.mubr.f32.mxu0 0.0
  %3291 = vmatmul.mubr.f32.gmra.mrb[0].mxu0 %v3145
  %v3292 = vpop.f32.mrb[0].mxu0
  %v3293 = vadd.f32 0.0, %v3292
  %v3294 = vpop.f32.mrb[0].mxu0
  %3295 = vdwg.mxu0
  %v3297 = vsel %vm328, %v3089, 0
  %v3300 = vsel %vm328, %v3090, 0
  %v3303 = vsel %vm328, %v3091, 0
  %v3306 = vsel %vm328, %v3092, 0
  %3308 = vmatprep.subr.mxu0 0.0
  %3309 = vmatpush1.msra.mxu0 %v3213
  %3310 = vmatprep.subr.mxu0 0.0
  %3311 = vmatpush1.msra.mxu0 %v3218
  %3312 = vmatprep.subr.mxu0 0.0
  %3313 = vmatpush1.msra.mxu0 %v3288
  %3314 = vmatprep.subr.mxu0 0.0
  %3315 = vmatpush1.msra.mxu0 %v3293
  %3316 = vmatprep.subr.mxu0 0.0
  %3317 = vmatpush1.msra.mxu0 0.0
  %3318 = vmatprep.subr.mxu0 0.0
  %3319 = vmatpush1.msra.mxu0 0.0
  %3320 = vmatprep.subr.mxu0 0.0
  %3321 = vmatpush1.msra.mxu0 0.0
  %3322 = vmatprep.subr.mxu0 0.0
  %3323 = vmatpush1.msra.mxu0 0.0
  %3324 = vmatprep.subr.mxu0 0.0
  %3325 = vmatpush1.msra.mxu0 0.0
  %3326 = vmatprep.subr.mxu0 0.0
  %3327 = vmatpush1.msra.mxu0 0.0
  %3328 = vmatprep.subr.mxu0 0.0
  %3329 = vmatpush1.msra.mxu0 0.0
  %3330 = vmatprep.subr.mxu0 0.0
  %3331 = vmatpush1.msra.mxu0 0.0
  %3332 = vmatprep.subr.mxu0 0.0
  %3333 = vmatpush1.msra.mxu0 0.0
  %3334 = vmatprep.subr.mxu0 0.0
  %3335 = vmatpush1.msra.mxu0 0.0
  %3336 = vmatprep.subr.mxu0 0.0
  %3337 = vmatpush1.msra.mxu0 0.0
  %3338 = vmatprep.subr.mxu0 0.0
  %3339 = vmatpush1.msra.mxu0 0.0
  %3340 = vmatprep.subr.mxu0 0.0
  %3341 = vmatpush1.msra.mxu0 0.0
  %3342 = vmatprep.subr.mxu0 0.0
  %3343 = vmatpush1.msra.mxu0 0.0
  %3344 = vmatprep.subr.mxu0 0.0
  %3345 = vmatpush1.msra.mxu0 0.0
  %3346 = vmatprep.subr.mxu0 0.0
  %3347 = vmatpush1.msra.mxu0 0.0
  %3348 = vmatprep.subr.mxu0 0.0
  %3349 = vmatpush1.msra.mxu0 0.0
  %3350 = vmatprep.subr.mxu0 0.0
  %3351 = vmatpush1.msra.mxu0 0.0
  %3352 = vmatprep.subr.mxu0 0.0
  %3353 = vmatpush1.msra.mxu0 0.0
  %3354 = vmatprep.subr.mxu0 0.0
  %3355 = vmatpush1.msra.mxu0 0.0
  %3356 = vmatprep.subr.mxu0 0.0
  %3357 = vmatpush1.msra.mxu0 0.0
  %3358 = vmatprep.subr.mxu0 0.0
  %3359 = vmatpush1.msra.mxu0 0.0
  %3360 = vmatprep.subr.mxu0 0.0
  %3361 = vmatpush1.msra.mxu0 0.0
  %3362 = vmatprep.subr.mxu0 0.0
  %3363 = vmatpush1.msra.mxu0 0.0
  %3364 = vmatprep.subr.mxu0 0.0
  %3365 = vmatpush1.msra.mxu0 0.0
  %3366 = vmatprep.subr.mxu0 0.0
  %3367 = vmatpush1.msra.mxu0 0.0
  %3368 = vmatprep.subr.mxu0 0.0
  %3369 = vmatpush1.msra.mxu0 0.0
  %3370 = vmatprep.subr.mxu0 0.0
  %3371 = vmatpush1.msra.mxu0 0.0
  %3372 = vmatprep.mubr.f32.mxu0 0.0
  %3373 = vmatmul.mubr.f32.gmra.mrb[0].mxu0 %v3297
  %v3374 = vpop.f32.mrb[0].mxu0
  %v3375 = vadd.f32 0.0, %v3374
  %v3376 = vpop.f32.mrb[0].mxu0
  %3377 = vmatprep.mubr.f32.mxu0 0.0
  %3378 = vmatmul.mubr.f32.gmra.mrb[0].mxu0 %v3300
  %v3379 = vpop.f32.mrb[0].mxu0
  %v3380 = vadd.f32 0.0, %v3379
  %v3381 = vpop.f32.mrb[0].mxu0
  %3382 = vmatprep.mubr.f32.mxu0 0.0
  %3383 = vmatmul.mubr.f32.gmra.mrb[0].mxu0 %v3303
  %v3384 = vpop.f32.mrb[0].mxu0
  %v3385 = vadd.f32 0.0, %v3384
  %v3386 = vpop.f32.mrb[0].mxu0
  %3387 = vmatprep.mubr.f32.mxu0 0.0
  %3388 = vmatmul.mubr.f32.gmra.mrb[0].mxu0 %v3306
  %v3389 = vpop.f32.mrb[0].mxu0
  %v3390 = vadd.f32 0.0, %v3389
  %v3391 = vpop.f32.mrb[0].mxu0
  %3392 = vdwg.mxu0
  %s3393 = scalar_lea.vmem %s5, 768
  %v3394 = vld [vmem:[%s3393] sm:$0xff]
  %v3395 = vld [vmem:[%s3393 + $0x8] sm:$0xff]
  %v3396 = vld [vmem:[%s3393 + $0x10] sm:$0xff]
  %v3397 = vld [vmem:[%s3393 + $0x18] sm:$0xff]
  %v3398 = vld [vmem:[%s3393 + $0x20] sm:$0xff]
  %v3399 = vld [vmem:[%s3393 + $0x28] sm:$0xff]
  %v3400 = vld [vmem:[%s3393 + $0x30] sm:$0xff]
  %v3401 = vld [vmem:[%s3393 + $0x38] sm:$0xff]
  %v3402 = vld [vmem:[%s3393 + $0x40] sm:$0xff]
  %v3403 = vld [vmem:[%s3393 + $0x48] sm:$0xff]
  %v3404 = vld [vmem:[%s3393 + $0x50] sm:$0xff]
  %v3405 = vld [vmem:[%s3393 + $0x58] sm:$0xff]
  %v3406 = vld [vmem:[%s3393 + $0x60] sm:$0xff]
  %v3407 = vld [vmem:[%s3393 + $0x68] sm:$0xff]
  %v3408 = vld [vmem:[%s3393 + $0x70] sm:$0xff]
  %v3409 = vld [vmem:[%s3393 + $0x78] sm:$0xff]
  %v3410 = vld [vmem:[%s3393 + $0x80] sm:$0xff]
  %v3411 = vld [vmem:[%s3393 + $0x88] sm:$0xff]
  %v3412 = vld [vmem:[%s3393 + $0x90] sm:$0xff]
  %v3413 = vld [vmem:[%s3393 + $0x98] sm:$0xff]
  %v3414 = vld [vmem:[%s3393 + $0xa0] sm:$0xff]
  %v3415 = vld [vmem:[%s3393 + $0xa8] sm:$0xff]
  %v3416 = vld [vmem:[%s3393 + $0xb0] sm:$0xff]
  %v3417 = vld [vmem:[%s3393 + $0xb8] sm:$0xff]
  %v3418 = vld [vmem:[%s3393 + $0xc0] sm:$0xff]
  %v3419 = vld [vmem:[%s3393 + $0xc8] sm:$0xff]
  %v3420 = vld [vmem:[%s3393 + $0xd0] sm:$0xff]
  %v3421 = vld [vmem:[%s3393 + $0xd8] sm:$0xff]
  %v3422 = vld [vmem:[%s3393 + $0xe0] sm:$0xff]
  %v3423 = vld [vmem:[%s3393 + $0xe8] sm:$0xff]
  %v3424 = vld [vmem:[%s3393 + $0xf0] sm:$0xff]
  %v3425 = vld [vmem:[%s3393 + $0xf8] sm:$0xff]
  %v3426 = vld [vmem:[%s3393 + $0x100] sm:$0xff]
  %v3427 = vld [vmem:[%s3393 + $0x108] sm:$0xff]
  %v3428 = vld [vmem:[%s3393 + $0x110] sm:$0xff]
  %v3429 = vld [vmem:[%s3393 + $0x118] sm:$0xff]
  %v3430 = vld [vmem:[%s3393 + $0x120] sm:$0xff]
  %v3431 = vld [vmem:[%s3393 + $0x128] sm:$0xff]
  %v3432 = vld [vmem:[%s3393 + $0x130] sm:$0xff]
  %v3433 = vld [vmem:[%s3393 + $0x138] sm:$0xff]
  %v3434 = vld [vmem:[%s3393 + $0x140] sm:$0xff]
  %v3435 = vld [vmem:[%s3393 + $0x148] sm:$0xff]
  %v3436 = vld [vmem:[%s3393 + $0x150] sm:$0xff]
  %v3437 = vld [vmem:[%s3393 + $0x158] sm:$0xff]
  %v3438 = vld [vmem:[%s3393 + $0x160] sm:$0xff]
  %v3439 = vld [vmem:[%s3393 + $0x168] sm:$0xff]
  %v3440 = vld [vmem:[%s3393 + $0x170] sm:$0xff]
  %v3441 = vld [vmem:[%s3393 + $0x178] sm:$0xff]
  %s3442 = scalar_lea.vmem %s6, 2
  %v3443 = vld [vmem:[%s3442] sm:$0x1]
  %v3444 = vrot.slane %v3375, 7
  %v3445 = vrot.slane %v3380, 7
  %v3446 = vrot.slane %v3385, 7
  %v3447 = vrot.slane %v3390, 7
  %v3448 = vsel %vm146, %v3446, %v3447
  %v3449 = vsel %vm146, %v3445, %v3446
  %v3450 = vsel %vm146, %v3444, %v3445
  %v3451 = vsel %vm146, %v3447, %v3444
  %v3452 = vsel %vm138, 0.0, %v3451
  %v3453 = vsel %vm139, 0.0, %v3450
  %v3454 = vsel %vm140, 0.0, %v3449
  %v3455 = vsel %vm141, 0.0, %v3448
  %v3456 = vrot.slane %v3375, 1
  %v3457 = vrot.slane %v3380, 1
  %v3458 = vrot.slane %v3385, 1
  %v3459 = vrot.slane %v3390, 1
  %v3460 = vsel %vm163, %v3458, %v3459
  %v3461 = vsel %vm163, %v3457, %v3458
  %v3462 = vsel %vm163, %v3456, %v3457
  %v3463 = vsel %vm163, %v3459, %v3456
  %v3464 = vsel %vm155, 0.0, %v3462
  %v3465 = vsel %vm156, 0.0, %v3461
  %v3466 = vsel %vm157, 0.0, %v3460
  %v3467 = vsel %vm158, 0.0, %v3463
  %v3469 = vlaneseq
  %v3470 = vshrl.u32 %v3469, 7
  %v3471 = vsub.s32 0, %v3470
  %v3472 = vrot.slane %v3443, %v3471
  %3474 = vmatprep.subr.mxu0 0.0
  %3475 = vmatpush1.msra.mxu0 %v3394
  %3476 = vmatprep.subr.mxu0 0.0
  %3477 = vmatpush1.msra.mxu0 %v3395
  %3478 = vmatprep.subr.mxu0 0.0
  %3479 = vmatpush1.msra.mxu0 %v3396
  %3480 = vmatprep.subr.mxu0 0.0
  %3481 = vmatpush1.msra.mxu0 %v3397
  %3482 = vmatprep.subr.mxu0 0.0
  %3483 = vmatpush1.msra.mxu0 %v3398
  %3484 = vmatprep.subr.mxu0 0.0
  %3485 = vmatpush1.msra.mxu0 %v3399
  %3486 = vmatprep.subr.mxu0 0.0
  %3487 = vmatpush1.msra.mxu0 %v3400
  %3488 = vmatprep.subr.mxu0 0.0
  %3489 = vmatpush1.msra.mxu0 %v3401
  %3490 = vmatprep.subr.mxu0 0.0
  %3491 = vmatpush1.msra.mxu0 %v3402
  %3492 = vmatprep.subr.mxu0 0.0
  %3493 = vmatpush1.msra.mxu0 %v3403
  %3494 = vmatprep.subr.mxu0 0.0
  %3495 = vmatpush1.msra.mxu0 %v3404
  %3496 = vmatprep.subr.mxu0 0.0
  %3497 = vmatpush1.msra.mxu0 %v3405
  %3498 = vmatprep.subr.mxu0 0.0
  %3499 = vmatpush1.msra.mxu0 %v3406
  %3500 = vmatprep.subr.mxu0 0.0
  %3501 = vmatpush1.msra.mxu0 %v3407
  %3502 = vmatprep.subr.mxu0 0.0
  %3503 = vmatpush1.msra.mxu0 %v3408
  %3504 = vmatprep.subr.mxu0 0.0
  %3505 = vmatpush1.msra.mxu0 %v3409
  %3506 = vmatprep.subr.mxu0 0.0
  %3507 = vmatpush1.msra.mxu0 %v3410
  %3508 = vmatprep.subr.mxu0 0.0
  %3509 = vmatpush1.msra.mxu0 %v3411
  %3510 = vmatprep.subr.mxu0 0.0
  %3511 = vmatpush1.msra.mxu0 %v3412
  %3512 = vmatprep.subr.mxu0 0.0
  %3513 = vmatpush1.msra.mxu0 %v3413
  %3514 = vmatprep.subr.mxu0 0.0
  %3515 = vmatpush1.msra.mxu0 %v3414
  %3516 = vmatprep.subr.mxu0 0.0
  %3517 = vmatpush1.msra.mxu0 %v3415
  %3518 = vmatprep.subr.mxu0 0.0
  %3519 = vmatpush1.msra.mxu0 %v3416
  %3520 = vmatprep.subr.mxu0 0.0
  %3521 = vmatpush1.msra.mxu0 %v3417
  %3522 = vmatprep.subr.mxu0 0.0
  %3523 = vmatpush1.msra.mxu0 %v3418
  %3524 = vmatprep.subr.mxu0 0.0
  %3525 = vmatpush1.msra.mxu0 %v3419
  %3526 = vmatprep.subr.mxu0 0.0
  %3527 = vmatpush1.msra.mxu0 %v3420
  %3528 = vmatprep.subr.mxu0 0.0
  %3529 = vmatpush1.msra.mxu0 %v3421
  %3530 = vmatprep.subr.mxu0 0.0
  %3531 = vmatpush1.msra.mxu0 %v3422
  %3532 = vmatprep.subr.mxu0 0.0
  %3533 = vmatpush1.msra.mxu0 %v3423
  %3534 = vmatprep.subr.mxu0 0.0
  %3535 = vmatpush1.msra.mxu0 %v3424
  %3536 = vmatprep.subr.mxu0 0.0
  %3537 = vmatpush1.msra.mxu0 %v3425
  %3538 = vmatprep.mubr.f32.mxu0 %v3375
  %3539 = vmatmul.mubr.f32.gmra.mrb[0].mxu0 %v3452
  %v3540 = vpop.f32.mrb[0].mxu0
  %v3541 = vadd.f32 %v3472, %v3540
  %v3542 = vpop.f32.mrb[0].mxu0
  %3543 = vmatprep.mubr.f32.mxu0 %v3380
  %3544 = vmatmul.mubr.f32.gmra.mrb[0].mxu0 %v3453
  %v3545 = vpop.f32.mrb[0].mxu0
  %v3546 = vadd.f32 %v3472, %v3545
  %v3547 = vpop.f32.mrb[0].mxu0
  %3548 = vmatprep.mubr.f32.mxu0 %v3385
  %3549 = vmatmul.mubr.f32.gmra.mrb[0].mxu0 %v3454
  %v3550 = vpop.f32.mrb[0].mxu0
  %v3551 = vadd.f32 %v3472, %v3550
  %v3552 = vpop.f32.mrb[0].mxu0
  %3553 = vmatprep.mubr.f32.mxu0 %v3390
  %3554 = vmatmul.mubr.f32.gmra.mrb[0].mxu0 %v3455
  %v3555 = vpop.f32.mrb[0].mxu0
  %v3556 = vadd.f32 %v3472, %v3555
  %v3557 = vpop.f32.mrb[0].mxu0
  %3558 = vdwg.mxu0
  %3559 = vmatprep.subr.mxu0 0.0
  %3560 = vmatpush1.msra.mxu0 %v3426
  %3561 = vmatprep.subr.mxu0 0.0
  %3562 = vmatpush1.msra.mxu0 %v3427
  %3563 = vmatprep.subr.mxu0 0.0
  %3564 = vmatpush1.msra.mxu0 %v3428
  %3565 = vmatprep.subr.mxu0 0.0
  %3566 = vmatpush1.msra.mxu0 %v3429
  %3567 = vmatprep.subr.mxu0 0.0
  %3568 = vmatpush1.msra.mxu0 %v3430
  %3569 = vmatprep.subr.mxu0 0.0
  %3570 = vmatpush1.msra.mxu0 %v3431
  %3571 = vmatprep.subr.mxu0 0.0
  %3572 = vmatpush1.msra.mxu0 %v3432
  %3573 = vmatprep.subr.mxu0 0.0
  %3574 = vmatpush1.msra.mxu0 %v3433
  %3575 = vmatprep.subr.mxu0 0.0
  %3576 = vmatpush1.msra.mxu0 %v3434
  %3577 = vmatprep.subr.mxu0 0.0
  %3578 = vmatpush1.msra.mxu0 %v3435
  %3579 = vmatprep.subr.mxu0 0.0
  %3580 = vmatpush1.msra.mxu0 %v3436
  %3581 = vmatprep.subr.mxu0 0.0
  %3582 = vmatpush1.msra.mxu0 %v3437
  %3583 = vmatprep.subr.mxu0 0.0
  %3584 = vmatpush1.msra.mxu0 %v3438
  %3585 = vmatprep.subr.mxu0 0.0
  %3586 = vmatpush1.msra.mxu0 %v3439
  %3587 = vmatprep.subr.mxu0 0.0
  %3588 = vmatpush1.msra.mxu0 %v3440
  %3589 = vmatprep.subr.mxu0 0.0
  %3590 = vmatpush1.msra.mxu0 %v3441
  %3591 = vmatprep.subr.mxu0 0.0
  %3592 = vmatpush1.msra.mxu0 0.0
  %3593 = vmatprep.subr.mxu0 0.0
  %3594 = vmatpush1.msra.mxu0 0.0
  %3595 = vmatprep.subr.mxu0 0.0
  %3596 = vmatpush1.msra.mxu0 0.0
  %3597 = vmatprep.subr.mxu0 0.0
  %3598 = vmatpush1.msra.mxu0 0.0
  %3599 = vmatprep.subr.mxu0 0.0
  %3600 = vmatpush1.msra.mxu0 0.0
  %3601 = vmatprep.subr.mxu0 0.0
  %3602 = vmatpush1.msra.mxu0 0.0
  %3603 = vmatprep.subr.mxu0 0.0
  %3604 = vmatpush1.msra.mxu0 0.0
  %3605 = vmatprep.subr.mxu0 0.0
  %3606 = vmatpush1.msra.mxu0 0.0
  %3607 = vmatprep.subr.mxu0 0.0
  %3608 = vmatpush1.msra.mxu0 0.0
  %3609 = vmatprep.subr.mxu0 0.0
  %3610 = vmatpush1.msra.mxu0 0.0
  %3611 = vmatprep.subr.mxu0 0.0
  %3612 = vmatpush1.msra.mxu0 0.0
  %3613 = vmatprep.subr.mxu0 0.0
  %3614 = vmatpush1.msra.mxu0 0.0
  %3615 = vmatprep.subr.mxu0 0.0
  %3616 = vmatpush1.msra.mxu0 0.0
  %3617 = vmatprep.subr.mxu0 0.0
  %3618 = vmatpush1.msra.mxu0 0.0
  %3619 = vmatprep.subr.mxu0 0.0
  %3620 = vmatpush1.msra.mxu0 0.0
  %3621 = vmatprep.subr.mxu0 0.0
  %3622 = vmatpush1.msra.mxu0 0.0
  %3623 = vmatprep.mubr.f32.mxu0 0.0
  %3624 = vmatmul.mubr.f32.gmra.mrb[0].mxu0 %v3464
  %v3625 = vpop.f32.mrb[0].mxu0
  %v3626 = vadd.f32 %v3541, %v3625
  %v3627 = vpop.f32.mrb[0].mxu0
  %3628 = vmatprep.mubr.f32.mxu0 0.0
  %3629 = vmatmul.mubr.f32.gmra.mrb[0].mxu0 %v3465
  %v3630 = vpop.f32.mrb[0].mxu0
  %v3631 = vadd.f32 %v3546, %v3630
  %v3632 = vpop.f32.mrb[0].mxu0
  %3633 = vmatprep.mubr.f32.mxu0 0.0
  %3634 = vmatmul.mubr.f32.gmra.mrb[0].mxu0 %v3466
  %v3635 = vpop.f32.mrb[0].mxu0
  %v3636 = vadd.f32 %v3551, %v3635
  %v3637 = vpop.f32.mrb[0].mxu0
  %3638 = vmatprep.mubr.f32.mxu0 0.0
  %3639 = vmatmul.mubr.f32.gmra.mrb[0].mxu0 %v3467
  %v3640 = vpop.f32.mrb[0].mxu0
  %v3641 = vadd.f32 %v3556, %v3640
  %v3642 = vpop.f32.mrb[0].mxu0
  %3643 = vdwg.mxu0
  %3644 = vst.msk [vmem:[%s17] sm:$0xff] %vm188, %v3626
  %3645 = vst.msk [vmem:[%s17 + $0x8] sm:$0xff] %vm188, %v3631
  %3646 = vst.msk [vmem:[%s17 + $0x10] sm:$0xff] %vm188, %v3636
  %3647 = vst.msk [vmem:[%s17 + $0x18] sm:$0xff] %vm188, %v3641
  // Predicated region
  $region70: #{deep_ae_forward.1} parent=0 // pred_check
    _
  $region71: #{deep_ae_forward.1} parent=0 // pred_check_branch
    %3649 = sbr.rel (0) target = $region73
  $region72: #{deep_ae_forward.1} parent=0 // pred_region
    _
  $region73: #{deep_ae_forward.1} parent=0 // pred_fallthru
    _
  // Predicated region
  $region74: #{deep_ae_forward.1} parent=0 // pred_check
    _
  $region75: #{deep_ae_forward.1} parent=0 // pred_check_branch
    %3651 = sbr.rel (0) target = $region77
  $region76: #{deep_ae_forward.1} parent=0 // pred_region
    _
  $region77: #{deep_ae_forward.1} parent=0 // pred_fallthru
    _

</llo_original>
